<compile_context>
chip_gen: v5e
topology: v5e:2x2
jax: 0.10.0
libtpu: 0.0.40
codegen_flags: <defaults>
</compile_context>

<pallas_src>
from functools import partial

import jax
import jax.numpy as jnp
from jax import lax
from jax.experimental import pallas as pl
from jax.experimental.pallas import tpu as pltpu


# ----------------------------------------------------------------------------
# Pallas kernel: `batch_tile` batch elements per grid step (axis = "parallel").
# ----------------------------------------------------------------------------
def gcb_kernel(x_ref, wn_ref, bn_ref, w1a_ref, w1b_ref, b1_ref, w2_ref, b2_ref,
               o_ref, a_t_ref, nodes_ref, acc_ref,
               *, n_nodes, c_half, row_tile, batch_tile):
    n_tiles = n_nodes // row_tile
    b2h = b2_ref[0]                                    # 0.5 * b2 (folded on host)
    w2h = [w2_ref[m] for m in range(c_half)]           # 0.5 * w2 scalars (SMEM)
    # Hoisted constants (JAX does not CSE broadcast_in_dim inside loops).
    ones_blk = jnp.ones((8, n_nodes), jnp.float32)     # row-sum MXU operand
    nt_dims = (((1,), (1,)), ((), ()))                 # contract last dims: A @ B^T

    for bi in range(batch_tile):                       # static, small unroll
        x = x_ref[bi]                                                  # (C, N)

        # --- node_transform: 1x1 conv (+ folded eval-mode BN) + ReLU ---------
        nodes = jnp.dot(wn_ref[...], x, preferred_element_type=jnp.float32)
        nodes = jnp.maximum(nodes + bn_ref[...], 0.0)                  # (C, N)
        nodes_ref[...] = nodes

        # --- edge-attention hidden projections, lane-dense (ch, N) -----------
        a_proj = jnp.dot(w1a_ref[...], nodes,
                         preferred_element_type=jnp.float32) + b1_ref[...]
        b_proj = jnp.dot(w1b_ref[...], nodes,
                         preferred_element_type=jnp.float32)
        a_t_ref[...] = a_proj.T            # (N, ch): cheap sublane row reads below

        acc_ref[...] = jnp.zeros_like(acc_ref)         # (C, N) output accumulator

        # --- fused per-row-tile: logits -> exp(0.5*tanh) -> normalize -> GEMM -
        def tile_body(r0):
            a_tile = a_t_ref[pl.ds(r0, row_tile), :]                   # (TI, ch)

            # 0.5*logit[i,j] = 0.5*b2 + sum_m (0.5*w2[m]) * ReLU(a[i,m] + b[m,j])
            h = jnp.maximum(a_tile[:, 0:1] + b_proj[0:1, :], 0.0)
            logit_h = w2h[0] * h + b2h                                 # (TI, N)
            for m in range(1, c_half):   # TODO(synk): lax.fori_loop if c//2 > ~8
                h = jnp.maximum(a_tile[:, m:m + 1] + b_proj[m:m + 1, :], 0.0)
                logit_h = logit_h + w2h[m] * h

            # exp(sigmoid(z)) = e^0.5 * exp(0.5*tanh(z/2)); the e^0.5 constant
            # cancels in the row softmax, so it is dropped exactly (2 EUP ops).
            e = jnp.exp(0.5 * jnp.tanh(logit_h))          # (TI, N), unnormalized

            # Softmax row-sums as a lane-dense row via one small A @ B^T MXU
            # matmul, then fold 1/denom into the matmul LHS so normalization
            # costs C*TI multiplies instead of TI*N.
            denom = lax.dot_general(ones_blk, e, nt_dims,
                                    preferred_element_type=jnp.float32)[0:1, :]
            lhs = nodes_ref[:, pl.ds(r0, row_tile)] * (1.0 / denom)   # (C, TI)

            acc_ref[...] += jnp.dot(lhs, e, preferred_element_type=jnp.float32)

        if n_tiles <= 64:
            for t in range(n_tiles):       # static slices, fully LLO-visible
                tile_body(t * row_tile)
        else:
            # TODO(synk): large-N fallback uses dynamic lane-offset reads of
            #             nodes_ref; not exercised by the small shapes below.
            @pl.loop(0, n_tiles)
            def _(t):
                tile_body(pl.multiple_of(t * row_tile, row_tile))

        o_ref[bi] = acc_ref[...].astype(o_ref.dtype)


# ----------------------------------------------------------------------------
# Tiling heuristics.
# ----------------------------------------------------------------------------
def _pick_row_tile(n):
    # Keep row_tile * N bounded (~32K elems) so logit/h/e tiles stay vreg-resident.
    if n % 8 != 0:
        return n                      # degenerate fallback: single tile
    budget = max(8, min(32, 32768 // n))
    for t in (32, 16, 8):
        if t <= budget and n % t == 0:
            return t
    for t in (32, 16, 8):
        if n % t == 0:
            return t
    return n


def _pick_batch_tile(b):
    # Amortize the ~0.35us/step pipeline overhead and tiny per-step DMAs while
    # keeping grid length >= 2 so both v7x TensorCores stay busy.
    for bt in (8, 4, 2):
        if b % bt == 0 and b // bt >= 2:
            return bt
    return 1


# ----------------------------------------------------------------------------
# Wrapper: NCHW -> (B, C, N) view (no transposes) + pallas_call.
# ----------------------------------------------------------------------------
def graph_conv_block(x_nchw, params):
    b, c, h, w = x_nchw.shape
    n = h * w
    ch = c // 2

    x_bcn = x_nchw.reshape(b, c, n)   # NCHW is already (B, C, N) contiguously

    wn_eff, bn_eff, w1a, w1b, b1_eff, w2, b2 = params
    bn2 = bn_eff.reshape(c, 1)
    b1_2 = b1_eff.reshape(ch, 1)
    # exp(sigmoid(z)) = e^0.5 * exp(0.5*tanh(0.5*z)): fold the inner 0.5 into
    # w2/b2 on the host (exact), saving one N^2 VPU multiply in the kernel.
    w2_h = (0.5 * w2).reshape(ch)
    b2_h = (0.5 * b2).reshape(1)

    row_tile = _pick_row_tile(n)
    bt = _pick_batch_tile(b)
    kernel = partial(gcb_kernel, n_nodes=n, c_half=ch,
                     row_tile=row_tile, batch_tile=bt)

    out_bcn = pl.pallas_call(
        kernel,
        out_shape=jax.ShapeDtypeStruct((b, c, n), jnp.float32),
        grid=(b // bt,),
        in_specs=[
            pl.BlockSpec((bt, c, n), lambda i: (i, 0, 0)),           # x
            pl.BlockSpec((c, c), lambda i: (0, 0)),                  # Wn_eff
            pl.BlockSpec((c, 1), lambda i: (0, 0)),                  # bn_eff
            pl.BlockSpec((ch, c), lambda i: (0, 0)),                 # W1a
            pl.BlockSpec((ch, c), lambda i: (0, 0)),                 # W1b
            pl.BlockSpec((ch, 1), lambda i: (0, 0)),                 # b1_eff
            pl.BlockSpec(memory_space=pltpu.MemorySpace.SMEM),       # 0.5*w2
            pl.BlockSpec(memory_space=pltpu.MemorySpace.SMEM),       # 0.5*b2
        ],
        out_specs=pl.BlockSpec((bt, c, n), lambda i: (i, 0, 0)),
        scratch_shapes=[
            pltpu.VMEM((n, ch), jnp.float32),    # a_proj^T (row-wise tile reads)
            pltpu.VMEM((c, n), jnp.float32),     # nodes (per-tile K slices)
            pltpu.VMEM((c, n), jnp.float32),     # fused output accumulator
        ],
        compiler_params=pltpu.CompilerParams(
            dimension_semantics=("parallel",)),
    )(x_bcn, wn_eff, bn2, w1a, w1b, b1_2, w2_h, b2_h)

    return out_bcn.reshape(b, c, h, w)


# ----------------------------------------------------------------------------
# Pure-JAX reference (mirrors the PyTorch forward exactly, eval-mode BN).
# ----------------------------------------------------------------------------
def reference_forward(x, params):
    wn_eff, bn_eff, w1a, w1b, b1_eff, w2, b2 = params
    b, c, h, w = x.shape
    n = h * w
    xf = x.reshape(b, c, n)
    nodes = jnp.maximum(
        jnp.einsum('oc,bcn->bon', wn_eff, xf) + bn_eff[None, :, None], 0.0)
    nodes_1 = jnp.transpose(nodes, (0, 2, 1))                       # (B, N, C)
    a = jnp.einsum('bnc,mc->bnm', nodes_1, w1a) + b1_eff            # (B, N, ch)
    bb = jnp.einsum('bnc,mc->bnm', nodes_1, w1b)                    # (B, N, ch)
    hidden = jnp.maximum(a[:, :, None, :] + bb[:, None, :, :], 0.0)  # (B,N,N,ch)
    logit = jnp.einsum('bijm,m->bij', hidden, w2) + b2
    adj = jax.nn.sigmoid(logit)
    adj = jax.nn.softmax(adj, axis=-1)
    out = jnp.einsum('bcn,bnp->bcp', nodes, adj)
    return out.reshape(b, c, h, w)


# ----------------------------------------------------------------------------
# Deterministic parameter construction (BN eval-mode folded into the 1x1 convs)
# ----------------------------------------------------------------------------
def make_params(key, c):
    ch = c // 2
    eps = 1e-5
    ks = jax.random.split(key, 16)
    u = lambda k, shape, s=0.2: jax.random.normal(k, shape, jnp.float32) * s

    # node_transform: Conv2d(c, c, 1) + BN(c)
    wn = u(ks[0], (c, c))
    bnb = u(ks[1], (c,))
    g_n, be_n = 1.0 + u(ks[2], (c,), 0.1), u(ks[3], (c,), 0.1)
    mu_n = u(ks[4], (c,), 0.1)
    var_n = 0.5 + jax.random.uniform(ks[5], (c,), jnp.float32)
    s_n = g_n / jnp.sqrt(var_n + eps)
    wn_eff = wn * s_n[:, None]
    bn_eff = (bnb - mu_n) * s_n + be_n

    # edge_att conv1: Conv2d(2c, c//2, 1) + BN(c//2)
    w1 = u(ks[6], (ch, 2 * c))
    b1 = u(ks[7], (ch,))
    g1, be1 = 1.0 + u(ks[8], (ch,), 0.1), u(ks[9], (ch,), 0.1)
    mu1 = u(ks[10], (ch,), 0.1)
    var1 = 0.5 + jax.random.uniform(ks[11], (ch,), jnp.float32)
    s1 = g1 / jnp.sqrt(var1 + eps)
    w1_eff = w1 * s1[:, None]
    b1_eff = (b1 - mu1) * s1 + be1
    w1a, w1b = w1_eff[:, :c], w1_eff[:, c:]

    # edge_att conv2: Conv2d(c//2, 1, 1)
    w2 = u(ks[12], (ch,))
    b2 = u(ks[13], (1,))

    return (wn_eff, bn_eff, w1a, w1b, b1_eff, w2, b2)


if __name__ == "__main__":
    key = jax.random.PRNGKey(0)
    k_x, k_p = jax.random.split(key)

    B, C, H, W = 2, 8, 16, 16          # N = 256 nodes, c//2 = 4
    x = jax.random.normal(k_x, (B, C, H, W), jnp.float32)
    params = make_params(k_p, C)

    out = jax.block_until_ready(graph_conv_block(x, params))
    ref = jax.block_until_ready(reference_forward(x, params))

    assert out.shape == (B, C, H, W)
    assert jnp.allclose(out, ref, atol=1e-4, rtol=1e-4), \
        f"max err {jnp.max(jnp.abs(out - ref))}"

    print("KERNEL_OK")
</pallas_src>

<mosaic_0001>
module attributes {stable_mosaic.version = 11 : i64} {
  func.func @gcb_kernel(%arg0: i32, %arg1: memref<1x8x256xf32, #tpu.memory_space<vmem>>, %arg2: memref<8x8xf32, #tpu.memory_space<vmem>>, %arg3: memref<8x1xf32, #tpu.memory_space<vmem>>, %arg4: memref<4x8xf32, #tpu.memory_space<vmem>>, %arg5: memref<4x8xf32, #tpu.memory_space<vmem>>, %arg6: memref<4x1xf32, #tpu.memory_space<vmem>>, %arg7: memref<4xf32, #tpu.memory_space<smem>>, %arg8: memref<1xf32, #tpu.memory_space<smem>>, %arg9: memref<1x8x256xf32, #tpu.memory_space<vmem>>, %arg10: memref<256x4xf32, #tpu.memory_space<vmem>>, %arg11: memref<8x256xf32, #tpu.memory_space<vmem>>, %arg12: memref<8x256xf32, #tpu.memory_space<vmem>>) attributes {dimension_semantics = [#tpu.dimension_semantics<parallel>], iteration_bounds = array<i64: 2>, scalar_prefetch = 0 : i64, scratch_operands = 3 : i64, tpu.core_type = #tpu.core_type<tc>, window_params = [{transform_indices = @transform_0, window_bounds = array<i64: 1, 8, 256>}, {pipeline_mode = #tpu.pipeline_mode<synchronous>, transform_indices = @transform_1, window_bounds = array<i64: 8, 8>}, {pipeline_mode = #tpu.pipeline_mode<synchronous>, transform_indices = @transform_2, window_bounds = array<i64: 8, 1>}, {pipeline_mode = #tpu.pipeline_mode<synchronous>, transform_indices = @transform_3, window_bounds = array<i64: 4, 8>}, {pipeline_mode = #tpu.pipeline_mode<synchronous>, transform_indices = @transform_4, window_bounds = array<i64: 4, 8>}, {pipeline_mode = #tpu.pipeline_mode<synchronous>, transform_indices = @transform_5, window_bounds = array<i64: 4, 1>}, {transform_indices = @transform_6, window_bounds = array<i64: 4>}, {transform_indices = @transform_7, window_bounds = array<i64: 1>}, {transform_indices = @transform_8, window_bounds = array<i64: 1, 8, 256>}]} {
    %c0 = arith.constant 0 : index
    %0 = memref.load %arg8[%c0] : memref<1xf32, #tpu.memory_space<smem>>
    %c0_0 = arith.constant 0 : index
    %1 = memref.load %arg7[%c0_0] : memref<4xf32, #tpu.memory_space<smem>>
    %c1 = arith.constant 1 : index
    %2 = memref.load %arg7[%c1] : memref<4xf32, #tpu.memory_space<smem>>
    %c2 = arith.constant 2 : index
    %3 = memref.load %arg7[%c2] : memref<4xf32, #tpu.memory_space<smem>>
    %c3 = arith.constant 3 : index
    %4 = memref.load %arg7[%c3] : memref<4xf32, #tpu.memory_space<smem>>
    %cst = arith.constant 1.000000e+00 : f32
    %5 = vector.broadcast %cst : f32 to vector<8x256xf32>
    %c0_1 = arith.constant 0 : index
    %c0_2 = arith.constant 0 : index
    %c0_3 = arith.constant 0 : index
    %6 = vector.load %arg1[%c0_1, %c0_2, %c0_3] : memref<1x8x256xf32, #tpu.memory_space<vmem>>, vector<1x8x256xf32>
    %7 = vector.shape_cast %6 : vector<1x8x256xf32> to vector<8x256xf32>
    %c0_4 = arith.constant 0 : index
    %c0_5 = arith.constant 0 : index
    %8 = vector.load %arg2[%c0_4, %c0_5] : memref<8x8xf32, #tpu.memory_space<vmem>>, vector<8x8xf32>
    %cst_6 = arith.constant dense<0.000000e+00> : vector<8x256xf32>
    %9 = tpu.matmul %8, %7, %cst_6 {dimension_numbers = #tpu.dot_dimension_numbers<[1], [0], [0], [1], [0, 0, 1, 1], [], []>} : vector<8x8xf32>, vector<8x256xf32>, vector<8x256xf32> -> vector<8x256xf32>
    %c0_7 = arith.constant 0 : index
    %c0_8 = arith.constant 0 : index
    %10 = vector.load %arg3[%c0_7, %c0_8] : memref<8x1xf32, #tpu.memory_space<vmem>>, vector<8x1xf32>
    %11 = vector.broadcast %10 : vector<8x1xf32> to vector<8x256xf32>
    %12 = arith.addf %9, %11 : vector<8x256xf32>
    %cst_9 = arith.constant 0.000000e+00 : f32
    %13 = vector.broadcast %cst_9 : f32 to vector<8x256xf32>
    %14 = arith.maximumf %12, %13 : vector<8x256xf32>
    %c0_10 = arith.constant 0 : index
    %c0_11 = arith.constant 0 : index
    %15 = vector.load %arg11[%c0_10, %c0_11] : memref<8x256xf32, #tpu.memory_space<vmem>>, vector<8x256xf32>
    tpu.vector_store %arg11[%c0_10, %c0_11], %14 {strides = array<i32>} : memref<8x256xf32, #tpu.memory_space<vmem>>, vector<8x256xf32>,
    %c0_12 = arith.constant 0 : index
    %c0_13 = arith.constant 0 : index
    %16 = vector.load %arg4[%c0_12, %c0_13] : memref<4x8xf32, #tpu.memory_space<vmem>>, vector<4x8xf32>
    %cst_14 = arith.constant dense<0.000000e+00> : vector<4x256xf32>
    %17 = tpu.matmul %16, %14, %cst_14 {dimension_numbers = #tpu.dot_dimension_numbers<[1], [0], [0], [1], [0, 0, 1, 1], [], []>} : vector<4x8xf32>, vector<8x256xf32>, vector<4x256xf32> -> vector<4x256xf32>
    %c0_15 = arith.constant 0 : index
    %c0_16 = arith.constant 0 : index
    %18 = vector.load %arg6[%c0_15, %c0_16] : memref<4x1xf32, #tpu.memory_space<vmem>>, vector<4x1xf32>
    %19 = vector.broadcast %18 : vector<4x1xf32> to vector<4x256xf32>
    %20 = arith.addf %17, %19 : vector<4x256xf32>
    %c0_17 = arith.constant 0 : index
    %c0_18 = arith.constant 0 : index
    %21 = vector.load %arg5[%c0_17, %c0_18] : memref<4x8xf32, #tpu.memory_space<vmem>>, vector<4x8xf32>
    %cst_19 = arith.constant dense<0.000000e+00> : vector<4x256xf32>
    %22 = tpu.matmul %21, %14, %cst_19 {dimension_numbers = #tpu.dot_dimension_numbers<[1], [0], [0], [1], [0, 0, 1, 1], [], []>} : vector<4x8xf32>, vector<8x256xf32>, vector<4x256xf32> -> vector<4x256xf32>
    %23 = tpu.transpose %20, [1, 0] : vector<4x256xf32> -> vector<256x4xf32>
    %c0_20 = arith.constant 0 : index
    %c0_21 = arith.constant 0 : index
    %24 = vector.load %arg10[%c0_20, %c0_21] : memref<256x4xf32, #tpu.memory_space<vmem>>, vector<256x4xf32>
    tpu.vector_store %arg10[%c0_20, %c0_21], %23 {strides = array<i32>} : memref<256x4xf32, #tpu.memory_space<vmem>>, vector<256x4xf32>,
    %cst_22 = arith.constant 0.000000e+00 : f32
    %25 = vector.broadcast %cst_22 : f32 to vector<8x256xf32>
    %c0_23 = arith.constant 0 : index
    %c0_24 = arith.constant 0 : index
    %26 = vector.load %arg12[%c0_23, %c0_24] : memref<8x256xf32, #tpu.memory_space<vmem>>, vector<8x256xf32>
    tpu.vector_store %arg12[%c0_23, %c0_24], %25 {strides = array<i32>} : memref<8x256xf32, #tpu.memory_space<vmem>>, vector<8x256xf32>,
    %c0_25 = arith.constant 0 : index
    %c0_26 = arith.constant 0 : index
    %27 = vector.load %arg10[%c0_25, %c0_26] : memref<256x4xf32, #tpu.memory_space<vmem>>, vector<32x4xf32>
    %28 = vector.extract_strided_slice %27 {offsets = [0, 0], sizes = [32, 1], strides = [1, 1]} : vector<32x4xf32> to vector<32x1xf32>
    %29 = vector.extract_strided_slice %22 {offsets = [0, 0], sizes = [1, 256], strides = [1, 1]} : vector<4x256xf32> to vector<1x256xf32>
    %30 = vector.broadcast %28 : vector<32x1xf32> to vector<32x256xf32>
    %31 = vector.broadcast %29 : vector<1x256xf32> to vector<32x256xf32>
    %32 = arith.addf %30, %31 : vector<32x256xf32>
    %cst_27 = arith.constant 0.000000e+00 : f32
    %33 = vector.broadcast %cst_27 : f32 to vector<32x256xf32>
    %34 = arith.maximumf %32, %33 : vector<32x256xf32>
    %35 = vector.broadcast %1 : f32 to vector<32x256xf32>
    %36 = arith.mulf %35, %34 : vector<32x256xf32>
    %37 = vector.broadcast %0 : f32 to vector<32x256xf32>
    %38 = arith.addf %36, %37 : vector<32x256xf32>
    %39 = vector.extract_strided_slice %27 {offsets = [0, 1], sizes = [32, 1], strides = [1, 1]} : vector<32x4xf32> to vector<32x1xf32>
    %40 = vector.extract_strided_slice %22 {offsets = [1, 0], sizes = [1, 256], strides = [1, 1]} : vector<4x256xf32> to vector<1x256xf32>
    %41 = vector.broadcast %39 : vector<32x1xf32> to vector<32x256xf32>
    %42 = vector.broadcast %40 : vector<1x256xf32> to vector<32x256xf32>
    %43 = arith.addf %41, %42 : vector<32x256xf32>
    %cst_28 = arith.constant 0.000000e+00 : f32
    %44 = vector.broadcast %cst_28 : f32 to vector<32x256xf32>
    %45 = arith.maximumf %43, %44 : vector<32x256xf32>
    %46 = vector.broadcast %2 : f32 to vector<32x256xf32>
    %47 = arith.mulf %46, %45 : vector<32x256xf32>
    %48 = arith.addf %38, %47 : vector<32x256xf32>
    %49 = vector.extract_strided_slice %27 {offsets = [0, 2], sizes = [32, 1], strides = [1, 1]} : vector<32x4xf32> to vector<32x1xf32>
    %50 = vector.extract_strided_slice %22 {offsets = [2, 0], sizes = [1, 256], strides = [1, 1]} : vector<4x256xf32> to vector<1x256xf32>
    %51 = vector.broadcast %49 : vector<32x1xf32> to vector<32x256xf32>
    %52 = vector.broadcast %50 : vector<1x256xf32> to vector<32x256xf32>
    %53 = arith.addf %51, %52 : vector<32x256xf32>
    %cst_29 = arith.constant 0.000000e+00 : f32
    %54 = vector.broadcast %cst_29 : f32 to vector<32x256xf32>
    %55 = arith.maximumf %53, %54 : vector<32x256xf32>
    %56 = vector.broadcast %3 : f32 to vector<32x256xf32>
    %57 = arith.mulf %56, %55 : vector<32x256xf32>
    %58 = arith.addf %48, %57 : vector<32x256xf32>
    %59 = vector.extract_strided_slice %27 {offsets = [0, 3], sizes = [32, 1], strides = [1, 1]} : vector<32x4xf32> to vector<32x1xf32>
    %60 = vector.extract_strided_slice %22 {offsets = [3, 0], sizes = [1, 256], strides = [1, 1]} : vector<4x256xf32> to vector<1x256xf32>
    %61 = vector.broadcast %59 : vector<32x1xf32> to vector<32x256xf32>
    %62 = vector.broadcast %60 : vector<1x256xf32> to vector<32x256xf32>
    %63 = arith.addf %61, %62 : vector<32x256xf32>
    %cst_30 = arith.constant 0.000000e+00 : f32
    %64 = vector.broadcast %cst_30 : f32 to vector<32x256xf32>
    %65 = arith.maximumf %63, %64 : vector<32x256xf32>
    %66 = vector.broadcast %4 : f32 to vector<32x256xf32>
    %67 = arith.mulf %66, %65 : vector<32x256xf32>
    %68 = arith.addf %58, %67 : vector<32x256xf32>
    %69 = math.tanh %68 : vector<32x256xf32>
    %cst_31 = arith.constant 5.000000e-01 : f32
    %70 = vector.broadcast %cst_31 : f32 to vector<32x256xf32>
    %71 = arith.mulf %70, %69 : vector<32x256xf32>
    %72 = math.exp %71 : vector<32x256xf32>
    %cst_32 = arith.constant dense<0.000000e+00> : vector<8x32xf32>
    %73 = tpu.matmul %5, %72, %cst_32 {dimension_numbers = #tpu.dot_dimension_numbers<[1], [1], [0], [0], [0, 0, 1, 0], [], []>} : vector<8x256xf32>, vector<32x256xf32>, vector<8x32xf32> -> vector<8x32xf32>
    %74 = vector.extract_strided_slice %73 {offsets = [0, 0], sizes = [1, 32], strides = [1, 1]} : vector<8x32xf32> to vector<1x32xf32>
    %c0_33 = arith.constant 0 : index
    %c0_34 = arith.constant 0 : index
    %75 = vector.load %arg11[%c0_33, %c0_34] : memref<8x256xf32, #tpu.memory_space<vmem>>, vector<8x32xf32>
    %cst_35 = arith.constant 1.000000e+00 : f32
    %76 = vector.broadcast %cst_35 : f32 to vector<1x32xf32>
    %77 = arith.divf %76, %74 : vector<1x32xf32>
    %78 = vector.broadcast %77 : vector<1x32xf32> to vector<8x32xf32>
    %79 = arith.mulf %75, %78 : vector<8x32xf32>
    %c0_36 = arith.constant 0 : index
    %c0_37 = arith.constant 0 : index
    %80 = vector.load %arg12[%c0_36, %c0_37] : memref<8x256xf32, #tpu.memory_space<vmem>>, vector<8x256xf32>
    %cst_38 = arith.constant dense<0.000000e+00> : vector<8x256xf32>
    %81 = tpu.matmul %79, %72, %cst_38 {dimension_numbers = #tpu.dot_dimension_numbers<[1], [0], [0], [1], [0, 0, 1, 1], [], []>} : vector<8x32xf32>, vector<32x256xf32>, vector<8x256xf32> -> vector<8x256xf32>
    %82 = arith.addf %80, %81 : vector<8x256xf32>
    %c0_39 = arith.constant 0 : index
    %c0_40 = arith.constant 0 : index
    %83 = vector.load %arg12[%c0_39, %c0_40] : memref<8x256xf32, #tpu.memory_space<vmem>>, vector<8x256xf32>
    tpu.vector_store %arg12[%c0_39, %c0_40], %82 {strides = array<i32>} : memref<8x256xf32, #tpu.memory_space<vmem>>, vector<8x256xf32>,
    %c32 = arith.constant 32 : index
    %c0_41 = arith.constant 0 : index
    %84 = vector.load %arg10[%c32, %c0_41] : memref<256x4xf32, #tpu.memory_space<vmem>>, vector<32x4xf32>
    %85 = vector.extract_strided_slice %84 {offsets = [0, 0], sizes = [32, 1], strides = [1, 1]} : vector<32x4xf32> to vector<32x1xf32>
    %86 = vector.extract_strided_slice %22 {offsets = [0, 0], sizes = [1, 256], strides = [1, 1]} : vector<4x256xf32> to vector<1x256xf32>
    %87 = vector.broadcast %85 : vector<32x1xf32> to vector<32x256xf32>
    %88 = vector.broadcast %86 : vector<1x256xf32> to vector<32x256xf32>
    %89 = arith.addf %87, %88 : vector<32x256xf32>
    %cst_42 = arith.constant 0.000000e+00 : f32
    %90 = vector.broadcast %cst_42 : f32 to vector<32x256xf32>
    %91 = arith.maximumf %89, %90 : vector<32x256xf32>
    %92 = vector.broadcast %1 : f32 to vector<32x256xf32>
    %93 = arith.mulf %92, %91 : vector<32x256xf32>
    %94 = vector.broadcast %0 : f32 to vector<32x256xf32>
    %95 = arith.addf %93, %94 : vector<32x256xf32>
    %96 = vector.extract_strided_slice %84 {offsets = [0, 1], sizes = [32, 1], strides = [1, 1]} : vector<32x4xf32> to vector<32x1xf32>
    %97 = vector.extract_strided_slice %22 {offsets = [1, 0], sizes = [1, 256], strides = [1, 1]} : vector<4x256xf32> to vector<1x256xf32>
    %98 = vector.broadcast %96 : vector<32x1xf32> to vector<32x256xf32>
    %99 = vector.broadcast %97 : vector<1x256xf32> to vector<32x256xf32>
    %100 = arith.addf %98, %99 : vector<32x256xf32>
    %cst_43 = arith.constant 0.000000e+00 : f32
    %101 = vector.broadcast %cst_43 : f32 to vector<32x256xf32>
    %102 = arith.maximumf %100, %101 : vector<32x256xf32>
    %103 = vector.broadcast %2 : f32 to vector<32x256xf32>
    %104 = arith.mulf %103, %102 : vector<32x256xf32>
    %105 = arith.addf %95, %104 : vector<32x256xf32>
    %106 = vector.extract_strided_slice %84 {offsets = [0, 2], sizes = [32, 1], strides = [1, 1]} : vector<32x4xf32> to vector<32x1xf32>
    %107 = vector.extract_strided_slice %22 {offsets = [2, 0], sizes = [1, 256], strides = [1, 1]} : vector<4x256xf32> to vector<1x256xf32>
    %108 = vector.broadcast %106 : vector<32x1xf32> to vector<32x256xf32>
    %109 = vector.broadcast %107 : vector<1x256xf32> to vector<32x256xf32>
    %110 = arith.addf %108, %109 : vector<32x256xf32>
    %cst_44 = arith.constant 0.000000e+00 : f32
    %111 = vector.broadcast %cst_44 : f32 to vector<32x256xf32>
    %112 = arith.maximumf %110, %111 : vector<32x256xf32>
    %113 = vector.broadcast %3 : f32 to vector<32x256xf32>
    %114 = arith.mulf %113, %112 : vector<32x256xf32>
    %115 = arith.addf %105, %114 : vector<32x256xf32>
    %116 = vector.extract_strided_slice %84 {offsets = [0, 3], sizes = [32, 1], strides = [1, 1]} : vector<32x4xf32> to vector<32x1xf32>
    %117 = vector.extract_strided_slice %22 {offsets = [3, 0], sizes = [1, 256], strides = [1, 1]} : vector<4x256xf32> to vector<1x256xf32>
    %118 = vector.broadcast %116 : vector<32x1xf32> to vector<32x256xf32>
    %119 = vector.broadcast %117 : vector<1x256xf32> to vector<32x256xf32>
    %120 = arith.addf %118, %119 : vector<32x256xf32>
    %cst_45 = arith.constant 0.000000e+00 : f32
    %121 = vector.broadcast %cst_45 : f32 to vector<32x256xf32>
    %122 = arith.maximumf %120, %121 : vector<32x256xf32>
    %123 = vector.broadcast %4 : f32 to vector<32x256xf32>
    %124 = arith.mulf %123, %122 : vector<32x256xf32>
    %125 = arith.addf %115, %124 : vector<32x256xf32>
    %126 = math.tanh %125 : vector<32x256xf32>
    %cst_46 = arith.constant 5.000000e-01 : f32
    %127 = vector.broadcast %cst_46 : f32 to vector<32x256xf32>
    %128 = arith.mulf %127, %126 : vector<32x256xf32>
    %129 = math.exp %128 : vector<32x256xf32>
    %cst_47 = arith.constant dense<0.000000e+00> : vector<8x32xf32>
    %130 = tpu.matmul %5, %129, %cst_47 {dimension_numbers = #tpu.dot_dimension_numbers<[1], [1], [0], [0], [0, 0, 1, 0], [], []>} : vector<8x256xf32>, vector<32x256xf32>, vector<8x32xf32> -> vector<8x32xf32>
    %131 = vector.extract_strided_slice %130 {offsets = [0, 0], sizes = [1, 32], strides = [1, 1]} : vector<8x32xf32> to vector<1x32xf32>
    %c0_48 = arith.constant 0 : index
    %c32_49 = arith.constant 32 : index
    %132 = vector.load %arg11[%c0_48, %c32_49] : memref<8x256xf32, #tpu.memory_space<vmem>>, vector<8x32xf32>
    %cst_50 = arith.constant 1.000000e+00 : f32
    %133 = vector.broadcast %cst_50 : f32 to vector<1x32xf32>
    %134 = arith.divf %133, %131 : vector<1x32xf32>
    %135 = vector.broadcast %134 : vector<1x32xf32> to vector<8x32xf32>
    %136 = arith.mulf %132, %135 : vector<8x32xf32>
    %c0_51 = arith.constant 0 : index
    %c0_52 = arith.constant 0 : index
    %137 = vector.load %arg12[%c0_51, %c0_52] : memref<8x256xf32, #tpu.memory_space<vmem>>, vector<8x256xf32>
    %cst_53 = arith.constant dense<0.000000e+00> : vector<8x256xf32>
    %138 = tpu.matmul %136, %129, %cst_53 {dimension_numbers = #tpu.dot_dimension_numbers<[1], [0], [0], [1], [0, 0, 1, 1], [], []>} : vector<8x32xf32>, vector<32x256xf32>, vector<8x256xf32> -> vector<8x256xf32>
    %139 = arith.addf %137, %138 : vector<8x256xf32>
    %c0_54 = arith.constant 0 : index
    %c0_55 = arith.constant 0 : index
    %140 = vector.load %arg12[%c0_54, %c0_55] : memref<8x256xf32, #tpu.memory_space<vmem>>, vector<8x256xf32>
    tpu.vector_store %arg12[%c0_54, %c0_55], %139 {strides = array<i32>} : memref<8x256xf32, #tpu.memory_space<vmem>>, vector<8x256xf32>,
    %c64 = arith.constant 64 : index
    %c0_56 = arith.constant 0 : index
    %141 = vector.load %arg10[%c64, %c0_56] : memref<256x4xf32, #tpu.memory_space<vmem>>, vector<32x4xf32>
    %142 = vector.extract_strided_slice %141 {offsets = [0, 0], sizes = [32, 1], strides = [1, 1]} : vector<32x4xf32> to vector<32x1xf32>
    %143 = vector.extract_strided_slice %22 {offsets = [0, 0], sizes = [1, 256], strides = [1, 1]} : vector<4x256xf32> to vector<1x256xf32>
    %144 = vector.broadcast %142 : vector<32x1xf32> to vector<32x256xf32>
    %145 = vector.broadcast %143 : vector<1x256xf32> to vector<32x256xf32>
    %146 = arith.addf %144, %145 : vector<32x256xf32>
    %cst_57 = arith.constant 0.000000e+00 : f32
    %147 = vector.broadcast %cst_57 : f32 to vector<32x256xf32>
    %148 = arith.maximumf %146, %147 : vector<32x256xf32>
    %149 = vector.broadcast %1 : f32 to vector<32x256xf32>
    %150 = arith.mulf %149, %148 : vector<32x256xf32>
    %151 = vector.broadcast %0 : f32 to vector<32x256xf32>
    %152 = arith.addf %150, %151 : vector<32x256xf32>
    %153 = vector.extract_strided_slice %141 {offsets = [0, 1], sizes = [32, 1], strides = [1, 1]} : vector<32x4xf32> to vector<32x1xf32>
    %154 = vector.extract_strided_slice %22 {offsets = [1, 0], sizes = [1, 256], strides = [1, 1]} : vector<4x256xf32> to vector<1x256xf32>
    %155 = vector.broadcast %153 : vector<32x1xf32> to vector<32x256xf32>
    %156 = vector.broadcast %154 : vector<1x256xf32> to vector<32x256xf32>
    %157 = arith.addf %155, %156 : vector<32x256xf32>
    %cst_58 = arith.constant 0.000000e+00 : f32
    %158 = vector.broadcast %cst_58 : f32 to vector<32x256xf32>
    %159 = arith.maximumf %157, %158 : vector<32x256xf32>
    %160 = vector.broadcast %2 : f32 to vector<32x256xf32>
    %161 = arith.mulf %160, %159 : vector<32x256xf32>
    %162 = arith.addf %152, %161 : vector<32x256xf32>
    %163 = vector.extract_strided_slice %141 {offsets = [0, 2], sizes = [32, 1], strides = [1, 1]} : vector<32x4xf32> to vector<32x1xf32>
    %164 = vector.extract_strided_slice %22 {offsets = [2, 0], sizes = [1, 256], strides = [1, 1]} : vector<4x256xf32> to vector<1x256xf32>
    %165 = vector.broadcast %163 : vector<32x1xf32> to vector<32x256xf32>
    %166 = vector.broadcast %164 : vector<1x256xf32> to vector<32x256xf32>
    %167 = arith.addf %165, %166 : vector<32x256xf32>
    %cst_59 = arith.constant 0.000000e+00 : f32
    %168 = vector.broadcast %cst_59 : f32 to vector<32x256xf32>
    %169 = arith.maximumf %167, %168 : vector<32x256xf32>
    %170 = vector.broadcast %3 : f32 to vector<32x256xf32>
    %171 = arith.mulf %170, %169 : vector<32x256xf32>
    %172 = arith.addf %162, %171 : vector<32x256xf32>
    %173 = vector.extract_strided_slice %141 {offsets = [0, 3], sizes = [32, 1], strides = [1, 1]} : vector<32x4xf32> to vector<32x1xf32>
    %174 = vector.extract_strided_slice %22 {offsets = [3, 0], sizes = [1, 256], strides = [1, 1]} : vector<4x256xf32> to vector<1x256xf32>
    %175 = vector.broadcast %173 : vector<32x1xf32> to vector<32x256xf32>
    %176 = vector.broadcast %174 : vector<1x256xf32> to vector<32x256xf32>
    %177 = arith.addf %175, %176 : vector<32x256xf32>
    %cst_60 = arith.constant 0.000000e+00 : f32
    %178 = vector.broadcast %cst_60 : f32 to vector<32x256xf32>
    %179 = arith.maximumf %177, %178 : vector<32x256xf32>
    %180 = vector.broadcast %4 : f32 to vector<32x256xf32>
    %181 = arith.mulf %180, %179 : vector<32x256xf32>
    %182 = arith.addf %172, %181 : vector<32x256xf32>
    %183 = math.tanh %182 : vector<32x256xf32>
    %cst_61 = arith.constant 5.000000e-01 : f32
    %184 = vector.broadcast %cst_61 : f32 to vector<32x256xf32>
    %185 = arith.mulf %184, %183 : vector<32x256xf32>
    %186 = math.exp %185 : vector<32x256xf32>
    %cst_62 = arith.constant dense<0.000000e+00> : vector<8x32xf32>
    %187 = tpu.matmul %5, %186, %cst_62 {dimension_numbers = #tpu.dot_dimension_numbers<[1], [1], [0], [0], [0, 0, 1, 0], [], []>} : vector<8x256xf32>, vector<32x256xf32>, vector<8x32xf32> -> vector<8x32xf32>
    %188 = vector.extract_strided_slice %187 {offsets = [0, 0], sizes = [1, 32], strides = [1, 1]} : vector<8x32xf32> to vector<1x32xf32>
    %c0_63 = arith.constant 0 : index
    %c64_64 = arith.constant 64 : index
    %189 = vector.load %arg11[%c0_63, %c64_64] : memref<8x256xf32, #tpu.memory_space<vmem>>, vector<8x32xf32>
    %cst_65 = arith.constant 1.000000e+00 : f32
    %190 = vector.broadcast %cst_65 : f32 to vector<1x32xf32>
    %191 = arith.divf %190, %188 : vector<1x32xf32>
    %192 = vector.broadcast %191 : vector<1x32xf32> to vector<8x32xf32>
    %193 = arith.mulf %189, %192 : vector<8x32xf32>
    %c0_66 = arith.constant 0 : index
    %c0_67 = arith.constant 0 : index
    %194 = vector.load %arg12[%c0_66, %c0_67] : memref<8x256xf32, #tpu.memory_space<vmem>>, vector<8x256xf32>
    %cst_68 = arith.constant dense<0.000000e+00> : vector<8x256xf32>
    %195 = tpu.matmul %193, %186, %cst_68 {dimension_numbers = #tpu.dot_dimension_numbers<[1], [0], [0], [1], [0, 0, 1, 1], [], []>} : vector<8x32xf32>, vector<32x256xf32>, vector<8x256xf32> -> vector<8x256xf32>
    %196 = arith.addf %194, %195 : vector<8x256xf32>
    %c0_69 = arith.constant 0 : index
    %c0_70 = arith.constant 0 : index
    %197 = vector.load %arg12[%c0_69, %c0_70] : memref<8x256xf32, #tpu.memory_space<vmem>>, vector<8x256xf32>
    tpu.vector_store %arg12[%c0_69, %c0_70], %196 {strides = array<i32>} : memref<8x256xf32, #tpu.memory_space<vmem>>, vector<8x256xf32>,
    %c96 = arith.constant 96 : index
    %c0_71 = arith.constant 0 : index
    %198 = vector.load %arg10[%c96, %c0_71] : memref<256x4xf32, #tpu.memory_space<vmem>>, vector<32x4xf32>
    %199 = vector.extract_strided_slice %198 {offsets = [0, 0], sizes = [32, 1], strides = [1, 1]} : vector<32x4xf32> to vector<32x1xf32>
    %200 = vector.extract_strided_slice %22 {offsets = [0, 0], sizes = [1, 256], strides = [1, 1]} : vector<4x256xf32> to vector<1x256xf32>
    %201 = vector.broadcast %199 : vector<32x1xf32> to vector<32x256xf32>
    %202 = vector.broadcast %200 : vector<1x256xf32> to vector<32x256xf32>
    %203 = arith.addf %201, %202 : vector<32x256xf32>
    %cst_72 = arith.constant 0.000000e+00 : f32
    %204 = vector.broadcast %cst_72 : f32 to vector<32x256xf32>
    %205 = arith.maximumf %203, %204 : vector<32x256xf32>
    %206 = vector.broadcast %1 : f32 to vector<32x256xf32>
    %207 = arith.mulf %206, %205 : vector<32x256xf32>
    %208 = vector.broadcast %0 : f32 to vector<32x256xf32>
    %209 = arith.addf %207, %208 : vector<32x256xf32>
    %210 = vector.extract_strided_slice %198 {offsets = [0, 1], sizes = [32, 1], strides = [1, 1]} : vector<32x4xf32> to vector<32x1xf32>
    %211 = vector.extract_strided_slice %22 {offsets = [1, 0], sizes = [1, 256], strides = [1, 1]} : vector<4x256xf32> to vector<1x256xf32>
    %212 = vector.broadcast %210 : vector<32x1xf32> to vector<32x256xf32>
    %213 = vector.broadcast %211 : vector<1x256xf32> to vector<32x256xf32>
    %214 = arith.addf %212, %213 : vector<32x256xf32>
    %cst_73 = arith.constant 0.000000e+00 : f32
    %215 = vector.broadcast %cst_73 : f32 to vector<32x256xf32>
    %216 = arith.maximumf %214, %215 : vector<32x256xf32>
    %217 = vector.broadcast %2 : f32 to vector<32x256xf32>
    %218 = arith.mulf %217, %216 : vector<32x256xf32>
    %219 = arith.addf %209, %218 : vector<32x256xf32>
    %220 = vector.extract_strided_slice %198 {offsets = [0, 2], sizes = [32, 1], strides = [1, 1]} : vector<32x4xf32> to vector<32x1xf32>
    %221 = vector.extract_strided_slice %22 {offsets = [2, 0], sizes = [1, 256], strides = [1, 1]} : vector<4x256xf32> to vector<1x256xf32>
    %222 = vector.broadcast %220 : vector<32x1xf32> to vector<32x256xf32>
    %223 = vector.broadcast %221 : vector<1x256xf32> to vector<32x256xf32>
    %224 = arith.addf %222, %223 : vector<32x256xf32>
    %cst_74 = arith.constant 0.000000e+00 : f32
    %225 = vector.broadcast %cst_74 : f32 to vector<32x256xf32>
    %226 = arith.maximumf %224, %225 : vector<32x256xf32>
    %227 = vector.broadcast %3 : f32 to vector<32x256xf32>
    %228 = arith.mulf %227, %226 : vector<32x256xf32>
    %229 = arith.addf %219, %228 : vector<32x256xf32>
    %230 = vector.extract_strided_slice %198 {offsets = [0, 3], sizes = [32, 1], strides = [1, 1]} : vector<32x4xf32> to vector<32x1xf32>
    %231 = vector.extract_strided_slice %22 {offsets = [3, 0], sizes = [1, 256], strides = [1, 1]} : vector<4x256xf32> to vector<1x256xf32>
    %232 = vector.broadcast %230 : vector<32x1xf32> to vector<32x256xf32>
    %233 = vector.broadcast %231 : vector<1x256xf32> to vector<32x256xf32>
    %234 = arith.addf %232, %233 : vector<32x256xf32>
    %cst_75 = arith.constant 0.000000e+00 : f32
    %235 = vector.broadcast %cst_75 : f32 to vector<32x256xf32>
    %236 = arith.maximumf %234, %235 : vector<32x256xf32>
    %237 = vector.broadcast %4 : f32 to vector<32x256xf32>
    %238 = arith.mulf %237, %236 : vector<32x256xf32>
    %239 = arith.addf %229, %238 : vector<32x256xf32>
    %240 = math.tanh %239 : vector<32x256xf32>
    %cst_76 = arith.constant 5.000000e-01 : f32
    %241 = vector.broadcast %cst_76 : f32 to vector<32x256xf32>
    %242 = arith.mulf %241, %240 : vector<32x256xf32>
    %243 = math.exp %242 : vector<32x256xf32>
    %cst_77 = arith.constant dense<0.000000e+00> : vector<8x32xf32>
    %244 = tpu.matmul %5, %243, %cst_77 {dimension_numbers = #tpu.dot_dimension_numbers<[1], [1], [0], [0], [0, 0, 1, 0], [], []>} : vector<8x256xf32>, vector<32x256xf32>, vector<8x32xf32> -> vector<8x32xf32>
    %245 = vector.extract_strided_slice %244 {offsets = [0, 0], sizes = [1, 32], strides = [1, 1]} : vector<8x32xf32> to vector<1x32xf32>
    %c0_78 = arith.constant 0 : index
    %c96_79 = arith.constant 96 : index
    %246 = vector.load %arg11[%c0_78, %c96_79] : memref<8x256xf32, #tpu.memory_space<vmem>>, vector<8x32xf32>
    %cst_80 = arith.constant 1.000000e+00 : f32
    %247 = vector.broadcast %cst_80 : f32 to vector<1x32xf32>
    %248 = arith.divf %247, %245 : vector<1x32xf32>
    %249 = vector.broadcast %248 : vector<1x32xf32> to vector<8x32xf32>
    %250 = arith.mulf %246, %249 : vector<8x32xf32>
    %c0_81 = arith.constant 0 : index
    %c0_82 = arith.constant 0 : index
    %251 = vector.load %arg12[%c0_81, %c0_82] : memref<8x256xf32, #tpu.memory_space<vmem>>, vector<8x256xf32>
    %cst_83 = arith.constant dense<0.000000e+00> : vector<8x256xf32>
    %252 = tpu.matmul %250, %243, %cst_83 {dimension_numbers = #tpu.dot_dimension_numbers<[1], [0], [0], [1], [0, 0, 1, 1], [], []>} : vector<8x32xf32>, vector<32x256xf32>, vector<8x256xf32> -> vector<8x256xf32>
    %253 = arith.addf %251, %252 : vector<8x256xf32>
    %c0_84 = arith.constant 0 : index
    %c0_85 = arith.constant 0 : index
    %254 = vector.load %arg12[%c0_84, %c0_85] : memref<8x256xf32, #tpu.memory_space<vmem>>, vector<8x256xf32>
    tpu.vector_store %arg12[%c0_84, %c0_85], %253 {strides = array<i32>} : memref<8x256xf32, #tpu.memory_space<vmem>>, vector<8x256xf32>,
    %c128 = arith.constant 128 : index
    %c0_86 = arith.constant 0 : index
    %255 = vector.load %arg10[%c128, %c0_86] : memref<256x4xf32, #tpu.memory_space<vmem>>, vector<32x4xf32>
    %256 = vector.extract_strided_slice %255 {offsets = [0, 0], sizes = [32, 1], strides = [1, 1]} : vector<32x4xf32> to vector<32x1xf32>
    %257 = vector.extract_strided_slice %22 {offsets = [0, 0], sizes = [1, 256], strides = [1, 1]} : vector<4x256xf32> to vector<1x256xf32>
    %258 = vector.broadcast %256 : vector<32x1xf32> to vector<32x256xf32>
    %259 = vector.broadcast %257 : vector<1x256xf32> to vector<32x256xf32>
    %260 = arith.addf %258, %259 : vector<32x256xf32>
    %cst_87 = arith.constant 0.000000e+00 : f32
    %261 = vector.broadcast %cst_87 : f32 to vector<32x256xf32>
    %262 = arith.maximumf %260, %261 : vector<32x256xf32>
    %263 = vector.broadcast %1 : f32 to vector<32x256xf32>
    %264 = arith.mulf %263, %262 : vector<32x256xf32>
    %265 = vector.broadcast %0 : f32 to vector<32x256xf32>
    %266 = arith.addf %264, %265 : vector<32x256xf32>
    %267 = vector.extract_strided_slice %255 {offsets = [0, 1], sizes = [32, 1], strides = [1, 1]} : vector<32x4xf32> to vector<32x1xf32>
    %268 = vector.extract_strided_slice %22 {offsets = [1, 0], sizes = [1, 256], strides = [1, 1]} : vector<4x256xf32> to vector<1x256xf32>
    %269 = vector.broadcast %267 : vector<32x1xf32> to vector<32x256xf32>
    %270 = vector.broadcast %268 : vector<1x256xf32> to vector<32x256xf32>
    %271 = arith.addf %269, %270 : vector<32x256xf32>
    %cst_88 = arith.constant 0.000000e+00 : f32
    %272 = vector.broadcast %cst_88 : f32 to vector<32x256xf32>
    %273 = arith.maximumf %271, %272 : vector<32x256xf32>
    %274 = vector.broadcast %2 : f32 to vector<32x256xf32>
    %275 = arith.mulf %274, %273 : vector<32x256xf32>
    %276 = arith.addf %266, %275 : vector<32x256xf32>
    %277 = vector.extract_strided_slice %255 {offsets = [0, 2], sizes = [32, 1], strides = [1, 1]} : vector<32x4xf32> to vector<32x1xf32>
    %278 = vector.extract_strided_slice %22 {offsets = [2, 0], sizes = [1, 256], strides = [1, 1]} : vector<4x256xf32> to vector<1x256xf32>
    %279 = vector.broadcast %277 : vector<32x1xf32> to vector<32x256xf32>
    %280 = vector.broadcast %278 : vector<1x256xf32> to vector<32x256xf32>
    %281 = arith.addf %279, %280 : vector<32x256xf32>
    %cst_89 = arith.constant 0.000000e+00 : f32
    %282 = vector.broadcast %cst_89 : f32 to vector<32x256xf32>
    %283 = arith.maximumf %281, %282 : vector<32x256xf32>
    %284 = vector.broadcast %3 : f32 to vector<32x256xf32>
    %285 = arith.mulf %284, %283 : vector<32x256xf32>
    %286 = arith.addf %276, %285 : vector<32x256xf32>
    %287 = vector.extract_strided_slice %255 {offsets = [0, 3], sizes = [32, 1], strides = [1, 1]} : vector<32x4xf32> to vector<32x1xf32>
    %288 = vector.extract_strided_slice %22 {offsets = [3, 0], sizes = [1, 256], strides = [1, 1]} : vector<4x256xf32> to vector<1x256xf32>
    %289 = vector.broadcast %287 : vector<32x1xf32> to vector<32x256xf32>
    %290 = vector.broadcast %288 : vector<1x256xf32> to vector<32x256xf32>
    %291 = arith.addf %289, %290 : vector<32x256xf32>
    %cst_90 = arith.constant 0.000000e+00 : f32
    %292 = vector.broadcast %cst_90 : f32 to vector<32x256xf32>
    %293 = arith.maximumf %291, %292 : vector<32x256xf32>
    %294 = vector.broadcast %4 : f32 to vector<32x256xf32>
    %295 = arith.mulf %294, %293 : vector<32x256xf32>
    %296 = arith.addf %286, %295 : vector<32x256xf32>
    %297 = math.tanh %296 : vector<32x256xf32>
    %cst_91 = arith.constant 5.000000e-01 : f32
    %298 = vector.broadcast %cst_91 : f32 to vector<32x256xf32>
    %299 = arith.mulf %298, %297 : vector<32x256xf32>
    %300 = math.exp %299 : vector<32x256xf32>
    %cst_92 = arith.constant dense<0.000000e+00> : vector<8x32xf32>
    %301 = tpu.matmul %5, %300, %cst_92 {dimension_numbers = #tpu.dot_dimension_numbers<[1], [1], [0], [0], [0, 0, 1, 0], [], []>} : vector<8x256xf32>, vector<32x256xf32>, vector<8x32xf32> -> vector<8x32xf32>
    %302 = vector.extract_strided_slice %301 {offsets = [0, 0], sizes = [1, 32], strides = [1, 1]} : vector<8x32xf32> to vector<1x32xf32>
    %c0_93 = arith.constant 0 : index
    %c128_94 = arith.constant 128 : index
    %303 = vector.load %arg11[%c0_93, %c128_94] : memref<8x256xf32, #tpu.memory_space<vmem>>, vector<8x32xf32>
    %cst_95 = arith.constant 1.000000e+00 : f32
    %304 = vector.broadcast %cst_95 : f32 to vector<1x32xf32>
    %305 = arith.divf %304, %302 : vector<1x32xf32>
    %306 = vector.broadcast %305 : vector<1x32xf32> to vector<8x32xf32>
    %307 = arith.mulf %303, %306 : vector<8x32xf32>
    %c0_96 = arith.constant 0 : index
    %c0_97 = arith.constant 0 : index
    %308 = vector.load %arg12[%c0_96, %c0_97] : memref<8x256xf32, #tpu.memory_space<vmem>>, vector<8x256xf32>
    %cst_98 = arith.constant dense<0.000000e+00> : vector<8x256xf32>
    %309 = tpu.matmul %307, %300, %cst_98 {dimension_numbers = #tpu.dot_dimension_numbers<[1], [0], [0], [1], [0, 0, 1, 1], [], []>} : vector<8x32xf32>, vector<32x256xf32>, vector<8x256xf32> -> vector<8x256xf32>
    %310 = arith.addf %308, %309 : vector<8x256xf32>
    %c0_99 = arith.constant 0 : index
    %c0_100 = arith.constant 0 : index
    %311 = vector.load %arg12[%c0_99, %c0_100] : memref<8x256xf32, #tpu.memory_space<vmem>>, vector<8x256xf32>
    tpu.vector_store %arg12[%c0_99, %c0_100], %310 {strides = array<i32>} : memref<8x256xf32, #tpu.memory_space<vmem>>, vector<8x256xf32>,
    %c160 = arith.constant 160 : index
    %c0_101 = arith.constant 0 : index
    %312 = vector.load %arg10[%c160, %c0_101] : memref<256x4xf32, #tpu.memory_space<vmem>>, vector<32x4xf32>
    %313 = vector.extract_strided_slice %312 {offsets = [0, 0], sizes = [32, 1], strides = [1, 1]} : vector<32x4xf32> to vector<32x1xf32>
    %314 = vector.extract_strided_slice %22 {offsets = [0, 0], sizes = [1, 256], strides = [1, 1]} : vector<4x256xf32> to vector<1x256xf32>
    %315 = vector.broadcast %313 : vector<32x1xf32> to vector<32x256xf32>
    %316 = vector.broadcast %314 : vector<1x256xf32> to vector<32x256xf32>
    %317 = arith.addf %315, %316 : vector<32x256xf32>
    %cst_102 = arith.constant 0.000000e+00 : f32
    %318 = vector.broadcast %cst_102 : f32 to vector<32x256xf32>
    %319 = arith.maximumf %317, %318 : vector<32x256xf32>
    %320 = vector.broadcast %1 : f32 to vector<32x256xf32>
    %321 = arith.mulf %320, %319 : vector<32x256xf32>
    %322 = vector.broadcast %0 : f32 to vector<32x256xf32>
    %323 = arith.addf %321, %322 : vector<32x256xf32>
    %324 = vector.extract_strided_slice %312 {offsets = [0, 1], sizes = [32, 1], strides = [1, 1]} : vector<32x4xf32> to vector<32x1xf32>
    %325 = vector.extract_strided_slice %22 {offsets = [1, 0], sizes = [1, 256], strides = [1, 1]} : vector<4x256xf32> to vector<1x256xf32>
    %326 = vector.broadcast %324 : vector<32x1xf32> to vector<32x256xf32>
    %327 = vector.broadcast %325 : vector<1x256xf32> to vector<32x256xf32>
    %328 = arith.addf %326, %327 : vector<32x256xf32>
    %cst_103 = arith.constant 0.000000e+00 : f32
    %329 = vector.broadcast %cst_103 : f32 to vector<32x256xf32>
    %330 = arith.maximumf %328, %329 : vector<32x256xf32>
    %331 = vector.broadcast %2 : f32 to vector<32x256xf32>
    %332 = arith.mulf %331, %330 : vector<32x256xf32>
    %333 = arith.addf %323, %332 : vector<32x256xf32>
    %334 = vector.extract_strided_slice %312 {offsets = [0, 2], sizes = [32, 1], strides = [1, 1]} : vector<32x4xf32> to vector<32x1xf32>
    %335 = vector.extract_strided_slice %22 {offsets = [2, 0], sizes = [1, 256], strides = [1, 1]} : vector<4x256xf32> to vector<1x256xf32>
    %336 = vector.broadcast %334 : vector<32x1xf32> to vector<32x256xf32>
    %337 = vector.broadcast %335 : vector<1x256xf32> to vector<32x256xf32>
    %338 = arith.addf %336, %337 : vector<32x256xf32>
    %cst_104 = arith.constant 0.000000e+00 : f32
    %339 = vector.broadcast %cst_104 : f32 to vector<32x256xf32>
    %340 = arith.maximumf %338, %339 : vector<32x256xf32>
    %341 = vector.broadcast %3 : f32 to vector<32x256xf32>
    %342 = arith.mulf %341, %340 : vector<32x256xf32>
    %343 = arith.addf %333, %342 : vector<32x256xf32>
    %344 = vector.extract_strided_slice %312 {offsets = [0, 3], sizes = [32, 1], strides = [1, 1]} : vector<32x4xf32> to vector<32x1xf32>
    %345 = vector.extract_strided_slice %22 {offsets = [3, 0], sizes = [1, 256], strides = [1, 1]} : vector<4x256xf32> to vector<1x256xf32>
    %346 = vector.broadcast %344 : vector<32x1xf32> to vector<32x256xf32>
    %347 = vector.broadcast %345 : vector<1x256xf32> to vector<32x256xf32>
    %348 = arith.addf %346, %347 : vector<32x256xf32>
    %cst_105 = arith.constant 0.000000e+00 : f32
    %349 = vector.broadcast %cst_105 : f32 to vector<32x256xf32>
    %350 = arith.maximumf %348, %349 : vector<32x256xf32>
    %351 = vector.broadcast %4 : f32 to vector<32x256xf32>
    %352 = arith.mulf %351, %350 : vector<32x256xf32>
    %353 = arith.addf %343, %352 : vector<32x256xf32>
    %354 = math.tanh %353 : vector<32x256xf32>
    %cst_106 = arith.constant 5.000000e-01 : f32
    %355 = vector.broadcast %cst_106 : f32 to vector<32x256xf32>
    %356 = arith.mulf %355, %354 : vector<32x256xf32>
    %357 = math.exp %356 : vector<32x256xf32>
    %cst_107 = arith.constant dense<0.000000e+00> : vector<8x32xf32>
    %358 = tpu.matmul %5, %357, %cst_107 {dimension_numbers = #tpu.dot_dimension_numbers<[1], [1], [0], [0], [0, 0, 1, 0], [], []>} : vector<8x256xf32>, vector<32x256xf32>, vector<8x32xf32> -> vector<8x32xf32>
    %359 = vector.extract_strided_slice %358 {offsets = [0, 0], sizes = [1, 32], strides = [1, 1]} : vector<8x32xf32> to vector<1x32xf32>
    %c0_108 = arith.constant 0 : index
    %c160_109 = arith.constant 160 : index
    %360 = vector.load %arg11[%c0_108, %c160_109] : memref<8x256xf32, #tpu.memory_space<vmem>>, vector<8x32xf32>
    %cst_110 = arith.constant 1.000000e+00 : f32
    %361 = vector.broadcast %cst_110 : f32 to vector<1x32xf32>
    %362 = arith.divf %361, %359 : vector<1x32xf32>
    %363 = vector.broadcast %362 : vector<1x32xf32> to vector<8x32xf32>
    %364 = arith.mulf %360, %363 : vector<8x32xf32>
    %c0_111 = arith.constant 0 : index
    %c0_112 = arith.constant 0 : index
    %365 = vector.load %arg12[%c0_111, %c0_112] : memref<8x256xf32, #tpu.memory_space<vmem>>, vector<8x256xf32>
    %cst_113 = arith.constant dense<0.000000e+00> : vector<8x256xf32>
    %366 = tpu.matmul %364, %357, %cst_113 {dimension_numbers = #tpu.dot_dimension_numbers<[1], [0], [0], [1], [0, 0, 1, 1], [], []>} : vector<8x32xf32>, vector<32x256xf32>, vector<8x256xf32> -> vector<8x256xf32>
    %367 = arith.addf %365, %366 : vector<8x256xf32>
    %c0_114 = arith.constant 0 : index
    %c0_115 = arith.constant 0 : index
    %368 = vector.load %arg12[%c0_114, %c0_115] : memref<8x256xf32, #tpu.memory_space<vmem>>, vector<8x256xf32>
    tpu.vector_store %arg12[%c0_114, %c0_115], %367 {strides = array<i32>} : memref<8x256xf32, #tpu.memory_space<vmem>>, vector<8x256xf32>,
    %c192 = arith.constant 192 : index
    %c0_116 = arith.constant 0 : index
    %369 = vector.load %arg10[%c192, %c0_116] : memref<256x4xf32, #tpu.memory_space<vmem>>, vector<32x4xf32>
    %370 = vector.extract_strided_slice %369 {offsets = [0, 0], sizes = [32, 1], strides = [1, 1]} : vector<32x4xf32> to vector<32x1xf32>
    %371 = vector.extract_strided_slice %22 {offsets = [0, 0], sizes = [1, 256], strides = [1, 1]} : vector<4x256xf32> to vector<1x256xf32>
    %372 = vector.broadcast %370 : vector<32x1xf32> to vector<32x256xf32>
    %373 = vector.broadcast %371 : vector<1x256xf32> to vector<32x256xf32>
    %374 = arith.addf %372, %373 : vector<32x256xf32>
    %cst_117 = arith.constant 0.000000e+00 : f32
    %375 = vector.broadcast %cst_117 : f32 to vector<32x256xf32>
    %376 = arith.maximumf %374, %375 : vector<32x256xf32>
    %377 = vector.broadcast %1 : f32 to vector<32x256xf32>
    %378 = arith.mulf %377, %376 : vector<32x256xf32>
    %379 = vector.broadcast %0 : f32 to vector<32x256xf32>
    %380 = arith.addf %378, %379 : vector<32x256xf32>
    %381 = vector.extract_strided_slice %369 {offsets = [0, 1], sizes = [32, 1], strides = [1, 1]} : vector<32x4xf32> to vector<32x1xf32>
    %382 = vector.extract_strided_slice %22 {offsets = [1, 0], sizes = [1, 256], strides = [1, 1]} : vector<4x256xf32> to vector<1x256xf32>
    %383 = vector.broadcast %381 : vector<32x1xf32> to vector<32x256xf32>
    %384 = vector.broadcast %382 : vector<1x256xf32> to vector<32x256xf32>
    %385 = arith.addf %383, %384 : vector<32x256xf32>
    %cst_118 = arith.constant 0.000000e+00 : f32
    %386 = vector.broadcast %cst_118 : f32 to vector<32x256xf32>
    %387 = arith.maximumf %385, %386 : vector<32x256xf32>
    %388 = vector.broadcast %2 : f32 to vector<32x256xf32>
    %389 = arith.mulf %388, %387 : vector<32x256xf32>
    %390 = arith.addf %380, %389 : vector<32x256xf32>
    %391 = vector.extract_strided_slice %369 {offsets = [0, 2], sizes = [32, 1], strides = [1, 1]} : vector<32x4xf32> to vector<32x1xf32>
    %392 = vector.extract_strided_slice %22 {offsets = [2, 0], sizes = [1, 256], strides = [1, 1]} : vector<4x256xf32> to vector<1x256xf32>
    %393 = vector.broadcast %391 : vector<32x1xf32> to vector<32x256xf32>
    %394 = vector.broadcast %392 : vector<1x256xf32> to vector<32x256xf32>
    %395 = arith.addf %393, %394 : vector<32x256xf32>
    %cst_119 = arith.constant 0.000000e+00 : f32
    %396 = vector.broadcast %cst_119 : f32 to vector<32x256xf32>
    %397 = arith.maximumf %395, %396 : vector<32x256xf32>
    %398 = vector.broadcast %3 : f32 to vector<32x256xf32>
    %399 = arith.mulf %398, %397 : vector<32x256xf32>
    %400 = arith.addf %390, %399 : vector<32x256xf32>
    %401 = vector.extract_strided_slice %369 {offsets = [0, 3], sizes = [32, 1], strides = [1, 1]} : vector<32x4xf32> to vector<32x1xf32>
    %402 = vector.extract_strided_slice %22 {offsets = [3, 0], sizes = [1, 256], strides = [1, 1]} : vector<4x256xf32> to vector<1x256xf32>
    %403 = vector.broadcast %401 : vector<32x1xf32> to vector<32x256xf32>
    %404 = vector.broadcast %402 : vector<1x256xf32> to vector<32x256xf32>
    %405 = arith.addf %403, %404 : vector<32x256xf32>
    %cst_120 = arith.constant 0.000000e+00 : f32
    %406 = vector.broadcast %cst_120 : f32 to vector<32x256xf32>
    %407 = arith.maximumf %405, %406 : vector<32x256xf32>
    %408 = vector.broadcast %4 : f32 to vector<32x256xf32>
    %409 = arith.mulf %408, %407 : vector<32x256xf32>
    %410 = arith.addf %400, %409 : vector<32x256xf32>
    %411 = math.tanh %410 : vector<32x256xf32>
    %cst_121 = arith.constant 5.000000e-01 : f32
    %412 = vector.broadcast %cst_121 : f32 to vector<32x256xf32>
    %413 = arith.mulf %412, %411 : vector<32x256xf32>
    %414 = math.exp %413 : vector<32x256xf32>
    %cst_122 = arith.constant dense<0.000000e+00> : vector<8x32xf32>
    %415 = tpu.matmul %5, %414, %cst_122 {dimension_numbers = #tpu.dot_dimension_numbers<[1], [1], [0], [0], [0, 0, 1, 0], [], []>} : vector<8x256xf32>, vector<32x256xf32>, vector<8x32xf32> -> vector<8x32xf32>
    %416 = vector.extract_strided_slice %415 {offsets = [0, 0], sizes = [1, 32], strides = [1, 1]} : vector<8x32xf32> to vector<1x32xf32>
    %c0_123 = arith.constant 0 : index
    %c192_124 = arith.constant 192 : index
    %417 = vector.load %arg11[%c0_123, %c192_124] : memref<8x256xf32, #tpu.memory_space<vmem>>, vector<8x32xf32>
    %cst_125 = arith.constant 1.000000e+00 : f32
    %418 = vector.broadcast %cst_125 : f32 to vector<1x32xf32>
    %419 = arith.divf %418, %416 : vector<1x32xf32>
    %420 = vector.broadcast %419 : vector<1x32xf32> to vector<8x32xf32>
    %421 = arith.mulf %417, %420 : vector<8x32xf32>
    %c0_126 = arith.constant 0 : index
    %c0_127 = arith.constant 0 : index
    %422 = vector.load %arg12[%c0_126, %c0_127] : memref<8x256xf32, #tpu.memory_space<vmem>>, vector<8x256xf32>
    %cst_128 = arith.constant dense<0.000000e+00> : vector<8x256xf32>
    %423 = tpu.matmul %421, %414, %cst_128 {dimension_numbers = #tpu.dot_dimension_numbers<[1], [0], [0], [1], [0, 0, 1, 1], [], []>} : vector<8x32xf32>, vector<32x256xf32>, vector<8x256xf32> -> vector<8x256xf32>
    %424 = arith.addf %422, %423 : vector<8x256xf32>
    %c0_129 = arith.constant 0 : index
    %c0_130 = arith.constant 0 : index
    %425 = vector.load %arg12[%c0_129, %c0_130] : memref<8x256xf32, #tpu.memory_space<vmem>>, vector<8x256xf32>
    tpu.vector_store %arg12[%c0_129, %c0_130], %424 {strides = array<i32>} : memref<8x256xf32, #tpu.memory_space<vmem>>, vector<8x256xf32>,
    %c224 = arith.constant 224 : index
    %c0_131 = arith.constant 0 : index
    %426 = vector.load %arg10[%c224, %c0_131] : memref<256x4xf32, #tpu.memory_space<vmem>>, vector<32x4xf32>
    %427 = vector.extract_strided_slice %426 {offsets = [0, 0], sizes = [32, 1], strides = [1, 1]} : vector<32x4xf32> to vector<32x1xf32>
    %428 = vector.extract_strided_slice %22 {offsets = [0, 0], sizes = [1, 256], strides = [1, 1]} : vector<4x256xf32> to vector<1x256xf32>
    %429 = vector.broadcast %427 : vector<32x1xf32> to vector<32x256xf32>
    %430 = vector.broadcast %428 : vector<1x256xf32> to vector<32x256xf32>
    %431 = arith.addf %429, %430 : vector<32x256xf32>
    %cst_132 = arith.constant 0.000000e+00 : f32
    %432 = vector.broadcast %cst_132 : f32 to vector<32x256xf32>
    %433 = arith.maximumf %431, %432 : vector<32x256xf32>
    %434 = vector.broadcast %1 : f32 to vector<32x256xf32>
    %435 = arith.mulf %434, %433 : vector<32x256xf32>
    %436 = vector.broadcast %0 : f32 to vector<32x256xf32>
    %437 = arith.addf %435, %436 : vector<32x256xf32>
    %438 = vector.extract_strided_slice %426 {offsets = [0, 1], sizes = [32, 1], strides = [1, 1]} : vector<32x4xf32> to vector<32x1xf32>
    %439 = vector.extract_strided_slice %22 {offsets = [1, 0], sizes = [1, 256], strides = [1, 1]} : vector<4x256xf32> to vector<1x256xf32>
    %440 = vector.broadcast %438 : vector<32x1xf32> to vector<32x256xf32>
    %441 = vector.broadcast %439 : vector<1x256xf32> to vector<32x256xf32>
    %442 = arith.addf %440, %441 : vector<32x256xf32>
    %cst_133 = arith.constant 0.000000e+00 : f32
    %443 = vector.broadcast %cst_133 : f32 to vector<32x256xf32>
    %444 = arith.maximumf %442, %443 : vector<32x256xf32>
    %445 = vector.broadcast %2 : f32 to vector<32x256xf32>
    %446 = arith.mulf %445, %444 : vector<32x256xf32>
    %447 = arith.addf %437, %446 : vector<32x256xf32>
    %448 = vector.extract_strided_slice %426 {offsets = [0, 2], sizes = [32, 1], strides = [1, 1]} : vector<32x4xf32> to vector<32x1xf32>
    %449 = vector.extract_strided_slice %22 {offsets = [2, 0], sizes = [1, 256], strides = [1, 1]} : vector<4x256xf32> to vector<1x256xf32>
    %450 = vector.broadcast %448 : vector<32x1xf32> to vector<32x256xf32>
    %451 = vector.broadcast %449 : vector<1x256xf32> to vector<32x256xf32>
    %452 = arith.addf %450, %451 : vector<32x256xf32>
    %cst_134 = arith.constant 0.000000e+00 : f32
    %453 = vector.broadcast %cst_134 : f32 to vector<32x256xf32>
    %454 = arith.maximumf %452, %453 : vector<32x256xf32>
    %455 = vector.broadcast %3 : f32 to vector<32x256xf32>
    %456 = arith.mulf %455, %454 : vector<32x256xf32>
    %457 = arith.addf %447, %456 : vector<32x256xf32>
    %458 = vector.extract_strided_slice %426 {offsets = [0, 3], sizes = [32, 1], strides = [1, 1]} : vector<32x4xf32> to vector<32x1xf32>
    %459 = vector.extract_strided_slice %22 {offsets = [3, 0], sizes = [1, 256], strides = [1, 1]} : vector<4x256xf32> to vector<1x256xf32>
    %460 = vector.broadcast %458 : vector<32x1xf32> to vector<32x256xf32>
    %461 = vector.broadcast %459 : vector<1x256xf32> to vector<32x256xf32>
    %462 = arith.addf %460, %461 : vector<32x256xf32>
    %cst_135 = arith.constant 0.000000e+00 : f32
    %463 = vector.broadcast %cst_135 : f32 to vector<32x256xf32>
    %464 = arith.maximumf %462, %463 : vector<32x256xf32>
    %465 = vector.broadcast %4 : f32 to vector<32x256xf32>
    %466 = arith.mulf %465, %464 : vector<32x256xf32>
    %467 = arith.addf %457, %466 : vector<32x256xf32>
    %468 = math.tanh %467 : vector<32x256xf32>
    %cst_136 = arith.constant 5.000000e-01 : f32
    %469 = vector.broadcast %cst_136 : f32 to vector<32x256xf32>
    %470 = arith.mulf %469, %468 : vector<32x256xf32>
    %471 = math.exp %470 : vector<32x256xf32>
    %cst_137 = arith.constant dense<0.000000e+00> : vector<8x32xf32>
    %472 = tpu.matmul %5, %471, %cst_137 {dimension_numbers = #tpu.dot_dimension_numbers<[1], [1], [0], [0], [0, 0, 1, 0], [], []>} : vector<8x256xf32>, vector<32x256xf32>, vector<8x32xf32> -> vector<8x32xf32>
    %473 = vector.extract_strided_slice %472 {offsets = [0, 0], sizes = [1, 32], strides = [1, 1]} : vector<8x32xf32> to vector<1x32xf32>
    %c0_138 = arith.constant 0 : index
    %c224_139 = arith.constant 224 : index
    %474 = vector.load %arg11[%c0_138, %c224_139] : memref<8x256xf32, #tpu.memory_space<vmem>>, vector<8x32xf32>
    %cst_140 = arith.constant 1.000000e+00 : f32
    %475 = vector.broadcast %cst_140 : f32 to vector<1x32xf32>
    %476 = arith.divf %475, %473 : vector<1x32xf32>
    %477 = vector.broadcast %476 : vector<1x32xf32> to vector<8x32xf32>
    %478 = arith.mulf %474, %477 : vector<8x32xf32>
    %c0_141 = arith.constant 0 : index
    %c0_142 = arith.constant 0 : index
    %479 = vector.load %arg12[%c0_141, %c0_142] : memref<8x256xf32, #tpu.memory_space<vmem>>, vector<8x256xf32>
    %cst_143 = arith.constant dense<0.000000e+00> : vector<8x256xf32>
    %480 = tpu.matmul %478, %471, %cst_143 {dimension_numbers = #tpu.dot_dimension_numbers<[1], [0], [0], [1], [0, 0, 1, 1], [], []>} : vector<8x32xf32>, vector<32x256xf32>, vector<8x256xf32> -> vector<8x256xf32>
    %481 = arith.addf %479, %480 : vector<8x256xf32>
    %c0_144 = arith.constant 0 : index
    %c0_145 = arith.constant 0 : index
    %482 = vector.load %arg12[%c0_144, %c0_145] : memref<8x256xf32, #tpu.memory_space<vmem>>, vector<8x256xf32>
    tpu.vector_store %arg12[%c0_144, %c0_145], %481 {strides = array<i32>} : memref<8x256xf32, #tpu.memory_space<vmem>>, vector<8x256xf32>,
    %c0_146 = arith.constant 0 : index
    %c0_147 = arith.constant 0 : index
    %483 = vector.load %arg12[%c0_146, %c0_147] : memref<8x256xf32, #tpu.memory_space<vmem>>, vector<8x256xf32>
    %c0_148 = arith.constant 0 : index
    %c0_149 = arith.constant 0 : index
    %c0_150 = arith.constant 0 : index
    %484 = vector.load %arg9[%c0_148, %c0_149, %c0_150] : memref<1x8x256xf32, #tpu.memory_space<vmem>>, vector<1x8x256xf32>
    %485 = vector.shape_cast %484 : vector<1x8x256xf32> to vector<8x256xf32>
    %486 = vector.shape_cast %483 : vector<8x256xf32> to vector<1x8x256xf32>
    tpu.vector_store %arg9[%c0_148, %c0_149, %c0_150], %486 {strides = array<i32>} : memref<1x8x256xf32, #tpu.memory_space<vmem>>, vector<1x8x256xf32>,
    return
  }
  func.func @transform_0(%arg0: i32) -> (i32, i32, i32) {
    %c0_i32 = arith.constant 0 : i32
    %c0_i32_0 = arith.constant 0 : i32
    %c0_i32_1 = arith.constant 0 : i32
    return %arg0, %c0_i32, %c0_i32_0 : i32, i32, i32
  }
  func.func @transform_1(%arg0: i32) -> (i32, i32) {
    %c0_i32 = arith.constant 0 : i32
    %c0_i32_0 = arith.constant 0 : i32
    %c0_i32_1 = arith.constant 0 : i32
    return %c0_i32, %c0_i32_0 : i32, i32
  }
  func.func @transform_2(%arg0: i32) -> (i32, i32) {
    %c0_i32 = arith.constant 0 : i32
    %c0_i32_0 = arith.constant 0 : i32
    %c0_i32_1 = arith.constant 0 : i32
    return %c0_i32, %c0_i32_0 : i32, i32
  }
  func.func @transform_3(%arg0: i32) -> (i32, i32) {
    %c0_i32 = arith.constant 0 : i32
    %c0_i32_0 = arith.constant 0 : i32
    %c0_i32_1 = arith.constant 0 : i32
    return %c0_i32, %c0_i32_0 : i32, i32
  }
  func.func @transform_4(%arg0: i32) -> (i32, i32) {
    %c0_i32 = arith.constant 0 : i32
    %c0_i32_0 = arith.constant 0 : i32
    %c0_i32_1 = arith.constant 0 : i32
    return %c0_i32, %c0_i32_0 : i32, i32
  }
  func.func @transform_5(%arg0: i32) -> (i32, i32) {
    %c0_i32 = arith.constant 0 : i32
    %c0_i32_0 = arith.constant 0 : i32
    %c0_i32_1 = arith.constant 0 : i32
    return %c0_i32, %c0_i32_0 : i32, i32
  }
  func.func @transform_6(%arg0: i32) -> i32 {
    %c0_i32 = arith.constant 0 : i32
    %c0_i32_0 = arith.constant 0 : i32
    return %c0_i32 : i32
  }
  func.func @transform_7(%arg0: i32) -> i32 {
    %c0_i32 = arith.constant 0 : i32
    %c0_i32_0 = arith.constant 0 : i32
    return %c0_i32 : i32
  }
  func.func @transform_8(%arg0: i32) -> (i32, i32, i32) {
    %c0_i32 = arith.constant 0 : i32
    %c0_i32_0 = arith.constant 0 : i32
    %c0_i32_1 = arith.constant 0 : i32
    return %arg0, %c0_i32, %c0_i32_0 : i32, i32, i32
  }
}

</mosaic_0001>

<llo_original>
// kernel: tpu_custom_call.1
$region0: #{tpu_custom_call.1}
  #allocation0 [shape = 'u32[]', space=smem, size = 0x4, offset = 0x4, fixed_abs, tag = 'smem constant byte address 0x4 - core index']
  #allocation1 [shape = 'u32[72,128]{1,0:T(1,128)}', space=vmem, size = 0x9000, scoped, tag = 'internal scratch']
  #allocation2 [shape = 'f32[256,4]{1,0:T(8,128)}', space=vmem, size = 0x20000, scoped, tag = 'scratch operand']
  #allocation3 [shape = 'f32[8,256]{1,0:T(8,128)}', space=vmem, size = 0x2000, scoped, tag = 'scratch operand']
  #allocation4 [shape = 'f32[8,256]{1,0:T(8,128)}', space=vmem, size = 0x2000, scoped, tag = 'scratch operand']
  #allocation5 [shape = 'f32[1]{0:T(128)S(6)}', space=smem, size = 0x200, scoped, tag = 'scoped memory for tpu_custom_call.1']
  %s0 = inlined_call_operand.hbm [shape: f32[2,8,256], index: 0, kind: input, shape index: {}]
  %s1 = inlined_call_operand.vmem [shape: f32[8,8], index: 1, kind: input, shape index: {}]
  %s2 = inlined_call_operand.vmem [shape: f32[8,1], index: 2, kind: input, shape index: {}]
  %s3 = inlined_call_operand.vmem [shape: f32[4,8], index: 3, kind: input, shape index: {}]
  %s4 = inlined_call_operand.vmem [shape: f32[4,8], index: 4, kind: input, shape index: {}]
  %s5 = inlined_call_operand.vmem [shape: f32[4,1], index: 5, kind: input, shape index: {}]
  %s6 = inlined_call_operand.vmem [shape: f32[4], index: 6, kind: input, shape index: {}]
  %s7 = inlined_call_operand.<no memory space> [shape: f32[1], index: 7, kind: input, shape index: {}]
  %s8 = inlined_call_operand.hbm [shape: f32[2,8,256], index: 8, kind: output, shape index: {}]
  %s9 = sld [smem:[#allocation0]]
  $region73: #{tpu_custom_call.1} parent=0
    _
  %s11 = ssub.s32 1, %s9
  %s12 = scalar_select 0, %s11, %s9
  %13 = sst [smem:[#allocation5]] %s7
  $region1: #{tpu_custom_call.1} parent=0
    #allocation6 [shape = 'u8[16384]{0}', space=vmem, size = 0x4000, scoped, tag = 'input window, operand 0']
    #allocation7 [shape = 's32[2]{0}', space=sflag, size = 0x8, scoped, tag = 'scoped memory for tpu_custom_call.1']
    #allocation8 [shape = 's32[2]{0}', space=sflag, size = 0x8, scoped, tag = 'scoped memory for tpu_custom_call.1']
    #allocation9 [shape = 's32[2]{0}', space=sflag, size = 0x8, scoped, tag = 'scoped memory for tpu_custom_call.1']
    #allocation10 [shape = 'u8[512]{0}', space=smem, size = 0x200, scoped, tag = 'input window, operand 6, single buffered']
    #allocation11 [shape = 'u8[16384]{0}', space=vmem, size = 0x4000, scoped, tag = 'output window, operand 0']
    %14 = vsyncpa [#allocation7], 0
    %s15 = scalar_lea.sflag [#allocation7], 1
    %16 = vsyncpa %s15, 0
    %17 = vsyncpa [#allocation9], 0
    %18 = vsyncpa [#allocation8], 0
    %s19 = scalar_lea.sflag [#allocation8], 1
    %20 = vsyncpa %s19, 0
    loop: start=0, step=1, limit=4
    $region2: #{tpu_custom_call.1} parent=1 // loop_pre_header
      _
    $region3: #{tpu_custom_call.1} parent=1 // loop_header
      %s22 = sphi 0, %s26
      %p23 = scmp.ge.s32.totalorder %s22, 4
      %s32 = sphi 0, %s34
      %s35 = sphi 0, %s32
      %s36 = sphi 0, %s35
      %s52 = sphi 0, %s36
      %s56 = sphi 0, %s56
      %s58 = sphi 0, %s56
      %s59 = sphi 0, %s58
      %s73 = sphi 0, %s59
      %s77 = sphi 0, %s77
      %s79 = sphi 0, %s77
      %s80 = sphi 0, %s79
      %s94 = sphi 0, %s80
      %s98 = sphi 0, %s98
      %s100 = sphi 0, %s98
      %s101 = sphi 0, %s100
      %s115 = sphi 0, %s101
      %s119 = sphi 0, %s119
      %s121 = sphi 0, %s119
      %s122 = sphi 0, %s121
      %s136 = sphi 0, %s122
      %s140 = sphi 0, %s140
      %s142 = sphi 0, %s140
      %s143 = sphi 0, %s142
      %s157 = sphi 0, %s143
      %s161 = sphi 0, %s161
      %s163 = sphi 0, %s161
      %s164 = sphi 0, %s163
      %s178 = sphi 0, %s164
      %s182 = sphi 0, %s182
      %s184 = sphi 0, %s182
      %s185 = sphi 0, %s184
      %s199 = sphi 0, %s185
      %s205 = sphi 0, %s207
      %s208 = sphi 0, %s205
      %s209 = sphi 0, %s208
      %s225 = sphi 0, %s209
    $region4: #{tpu_custom_call.1} parent=1 // loop_header_branch
      %25 = sbr.rel (%p23) target = $region8
    $region5: #{tpu_custom_call.1} parent=1 // loop_body
      %s27 = ssub.s32 %s22, 1
      %s28 = ssub.s32 %s22, 2
      %s29 = sadd.s32 %s22, 1
      %s30 = ssub.s32 %s22, %s29
      %p31 = scmp.eq.s32.totalorder %s30, 0
      %s33 = sadd.s32 %s32, 1
      %s34 = scalar_select %p31, %s32, %s33
      %p37 = pneg %p31
      %p38 = scmp.eq.s32.totalorder %s22, 1
      %p39 = por %p37, %p38
      %p40 = scmp.ne.s32.totalorder %s32, %s35
      %p41 = scmp.eq.s32.totalorder %s22, 0
      %p42 = por %p40, %p41
      %p43 = scmp.ne.s32.totalorder %s32, %s35
      %p44 = scmp.eq.s32.totalorder %s27, 1
      %p45 = por %p43, %p44
      %p46 = scmp.ne.s32.totalorder %s35, %s36
      %p47 = scmp.eq.s32.totalorder %s27, 0
      %p48 = por %p46, %p47
      %p49 = scmp.ne.s32.totalorder %s35, %s36
      %p50 = scmp.eq.s32.totalorder %s28, 1
      %p51 = por %p49, %p50
      %p53 = scmp.ne.s32.totalorder %s36, %s52
      %p54 = scmp.eq.s32.totalorder %s28, 0
      %p55 = por %p53, %p54
      %s57 = sadd.s32 %s56, 1
      %p60 = scmp.eq.s32.totalorder %s22, 1
      %p61 = scmp.ne.s32.totalorder %s56, %s58
      %p62 = scmp.eq.s32.totalorder %s22, 0
      %p63 = por %p61, %p62
      %p64 = scmp.ne.s32.totalorder %s56, %s58
      %p65 = scmp.eq.s32.totalorder %s27, 1
      %p66 = por %p64, %p65
      %p67 = scmp.ne.s32.totalorder %s58, %s59
      %p68 = scmp.eq.s32.totalorder %s27, 0
      %p69 = por %p67, %p68
      %p70 = scmp.ne.s32.totalorder %s58, %s59
      %p71 = scmp.eq.s32.totalorder %s28, 1
      %p72 = por %p70, %p71
      %p74 = scmp.ne.s32.totalorder %s59, %s73
      %p75 = scmp.eq.s32.totalorder %s28, 0
      %p76 = por %p74, %p75
      %s78 = sadd.s32 %s77, 1
      %p81 = scmp.eq.s32.totalorder %s22, 1
      %p82 = scmp.ne.s32.totalorder %s77, %s79
      %p83 = scmp.eq.s32.totalorder %s22, 0
      %p84 = por %p82, %p83
      %p85 = scmp.ne.s32.totalorder %s77, %s79
      %p86 = scmp.eq.s32.totalorder %s27, 1
      %p87 = por %p85, %p86
      %p88 = scmp.ne.s32.totalorder %s79, %s80
      %p89 = scmp.eq.s32.totalorder %s27, 0
      %p90 = por %p88, %p89
      %p91 = scmp.ne.s32.totalorder %s79, %s80
      %p92 = scmp.eq.s32.totalorder %s28, 1
      %p93 = por %p91, %p92
      %p95 = scmp.ne.s32.totalorder %s80, %s94
      %p96 = scmp.eq.s32.totalorder %s28, 0
      %p97 = por %p95, %p96
      %s99 = sadd.s32 %s98, 1
      %p102 = scmp.eq.s32.totalorder %s22, 1
      %p103 = scmp.ne.s32.totalorder %s98, %s100
      %p104 = scmp.eq.s32.totalorder %s22, 0
      %p105 = por %p103, %p104
      %p106 = scmp.ne.s32.totalorder %s98, %s100
      %p107 = scmp.eq.s32.totalorder %s27, 1
      %p108 = por %p106, %p107
      %p109 = scmp.ne.s32.totalorder %s100, %s101
      %p110 = scmp.eq.s32.totalorder %s27, 0
      %p111 = por %p109, %p110
      %p112 = scmp.ne.s32.totalorder %s100, %s101
      %p113 = scmp.eq.s32.totalorder %s28, 1
      %p114 = por %p112, %p113
      %p116 = scmp.ne.s32.totalorder %s101, %s115
      %p117 = scmp.eq.s32.totalorder %s28, 0
      %p118 = por %p116, %p117
      %s120 = sadd.s32 %s119, 1
      %p123 = scmp.eq.s32.totalorder %s22, 1
      %p124 = scmp.ne.s32.totalorder %s119, %s121
      %p125 = scmp.eq.s32.totalorder %s22, 0
      %p126 = por %p124, %p125
      %p127 = scmp.ne.s32.totalorder %s119, %s121
      %p128 = scmp.eq.s32.totalorder %s27, 1
      %p129 = por %p127, %p128
      %p130 = scmp.ne.s32.totalorder %s121, %s122
      %p131 = scmp.eq.s32.totalorder %s27, 0
      %p132 = por %p130, %p131
      %p133 = scmp.ne.s32.totalorder %s121, %s122
      %p134 = scmp.eq.s32.totalorder %s28, 1
      %p135 = por %p133, %p134
      %p137 = scmp.ne.s32.totalorder %s122, %s136
      %p138 = scmp.eq.s32.totalorder %s28, 0
      %p139 = por %p137, %p138
      %s141 = sadd.s32 %s140, 1
      %p144 = scmp.eq.s32.totalorder %s22, 1
      %p145 = scmp.ne.s32.totalorder %s140, %s142
      %p146 = scmp.eq.s32.totalorder %s22, 0
      %p147 = por %p145, %p146
      %p148 = scmp.ne.s32.totalorder %s140, %s142
      %p149 = scmp.eq.s32.totalorder %s27, 1
      %p150 = por %p148, %p149
      %p151 = scmp.ne.s32.totalorder %s142, %s143
      %p152 = scmp.eq.s32.totalorder %s27, 0
      %p153 = por %p151, %p152
      %p154 = scmp.ne.s32.totalorder %s142, %s143
      %p155 = scmp.eq.s32.totalorder %s28, 1
      %p156 = por %p154, %p155
      %p158 = scmp.ne.s32.totalorder %s143, %s157
      %p159 = scmp.eq.s32.totalorder %s28, 0
      %p160 = por %p158, %p159
      %s162 = sadd.s32 %s161, 1
      %p165 = scmp.eq.s32.totalorder %s22, 1
      %p166 = scmp.ne.s32.totalorder %s161, %s163
      %p167 = scmp.eq.s32.totalorder %s22, 0
      %p168 = por %p166, %p167
      %p169 = scmp.ne.s32.totalorder %s161, %s163
      %p170 = scmp.eq.s32.totalorder %s27, 1
      %p171 = por %p169, %p170
      %p172 = scmp.ne.s32.totalorder %s163, %s164
      %p173 = scmp.eq.s32.totalorder %s27, 0
      %p174 = por %p172, %p173
      %p175 = scmp.ne.s32.totalorder %s163, %s164
      %p176 = scmp.eq.s32.totalorder %s28, 1
      %p177 = por %p175, %p176
      %p179 = scmp.ne.s32.totalorder %s164, %s178
      %p180 = scmp.eq.s32.totalorder %s28, 0
      %p181 = por %p179, %p180
      %s183 = sadd.s32 %s182, 1
      %p186 = scmp.eq.s32.totalorder %s22, 1
      %p187 = scmp.ne.s32.totalorder %s182, %s184
      %p188 = scmp.eq.s32.totalorder %s22, 0
      %p189 = por %p187, %p188
      %p190 = scmp.ne.s32.totalorder %s182, %s184
      %p191 = scmp.eq.s32.totalorder %s27, 1
      %p192 = por %p190, %p191
      %p193 = scmp.ne.s32.totalorder %s184, %s185
      %p194 = scmp.eq.s32.totalorder %s27, 0
      %p195 = por %p193, %p194
      %p196 = scmp.ne.s32.totalorder %s184, %s185
      %p197 = scmp.eq.s32.totalorder %s28, 1
      %p198 = por %p196, %p197
      %p200 = scmp.ne.s32.totalorder %s185, %s199
      %p201 = scmp.eq.s32.totalorder %s28, 0
      %p202 = por %p200, %p201
      %s203 = ssub.s32 %s22, %s29
      %p204 = scmp.eq.s32.totalorder %s203, 0
      %s206 = sadd.s32 %s205, 1
      %s207 = scalar_select %p204, %s205, %s206
      %p210 = pneg %p204
      %p211 = scmp.eq.s32.totalorder %s22, 1
      %p212 = por %p210, %p211
      %p213 = scmp.ne.s32.totalorder %s205, %s208
      %p214 = scmp.eq.s32.totalorder %s22, 0
      %p215 = por %p213, %p214
      %p216 = scmp.ne.s32.totalorder %s205, %s208
      %p217 = scmp.eq.s32.totalorder %s27, 1
      %p218 = por %p216, %p217
      %p219 = scmp.ne.s32.totalorder %s208, %s209
      %p220 = scmp.eq.s32.totalorder %s27, 0
      %p221 = por %p219, %p220
      %p222 = scmp.ne.s32.totalorder %s208, %s209
      %p223 = scmp.eq.s32.totalorder %s28, 1
      %p224 = por %p222, %p223
      %p226 = scmp.ne.s32.totalorder %s209, %s225
      %p227 = scmp.eq.s32.totalorder %s28, 0
      %p228 = por %p226, %p227
      %p229 = scmp.le.s32.totalorder 1, %s22
      %p230 = scmp.lt.s32.totalorder %s22, 3
      %p231 = pnand %p229, %p230
      %p232 = pneg %p231
      // Predicated region
      $region9: #{tpu_custom_call.1} parent=5 // pred_check
        _
      $region10: #{tpu_custom_call.1} parent=5 // pred_check_branch
        %234 = sbr.rel (%p231) target = $region12
      $region11: #{tpu_custom_call.1} parent=5 // pred_region
        %s235 = ssub.s32 %s22, 1
        // Predicated region
        $region13: #{tpu_custom_call.1} parent=11 // pred_check
          %p236 = pneg %p69
        $region14: #{tpu_custom_call.1} parent=11 // pred_check_branch
          %238 = sbr.rel (%p236) target = $region16
        $region15: #{tpu_custom_call.1} parent=11 // pred_region
          _
        $region16: #{tpu_custom_call.1} parent=11 // pred_fallthru
          _
        // Predicated region
        $region17: #{tpu_custom_call.1} parent=11 // pred_check
          %p239 = pneg %p90
        $region18: #{tpu_custom_call.1} parent=11 // pred_check_branch
          %241 = sbr.rel (%p239) target = $region20
        $region19: #{tpu_custom_call.1} parent=11 // pred_region
          _
        $region20: #{tpu_custom_call.1} parent=11 // pred_fallthru
          _
        // Predicated region
        $region21: #{tpu_custom_call.1} parent=11 // pred_check
          %p242 = pneg %p111
        $region22: #{tpu_custom_call.1} parent=11 // pred_check_branch
          %244 = sbr.rel (%p242) target = $region24
        $region23: #{tpu_custom_call.1} parent=11 // pred_region
          _
        $region24: #{tpu_custom_call.1} parent=11 // pred_fallthru
          _
        // Predicated region
        $region25: #{tpu_custom_call.1} parent=11 // pred_check
          %p245 = pneg %p132
        $region26: #{tpu_custom_call.1} parent=11 // pred_check_branch
          %247 = sbr.rel (%p245) target = $region28
        $region27: #{tpu_custom_call.1} parent=11 // pred_region
          _
        $region28: #{tpu_custom_call.1} parent=11 // pred_fallthru
          _
        // Predicated region
        $region29: #{tpu_custom_call.1} parent=11 // pred_check
          %p248 = pneg %p153
        $region30: #{tpu_custom_call.1} parent=11 // pred_check_branch
          %250 = sbr.rel (%p248) target = $region32
        $region31: #{tpu_custom_call.1} parent=11 // pred_region
          _
        $region32: #{tpu_custom_call.1} parent=11 // pred_fallthru
          _
        // Predicated region
        $region33: #{tpu_custom_call.1} parent=11 // pred_check
          %p251 = pneg %p174
        $region34: #{tpu_custom_call.1} parent=11 // pred_check_branch
          %253 = sbr.rel (%p251) target = $region36
        $region35: #{tpu_custom_call.1} parent=11 // pred_region
          %255 = vsyncadd [#allocation9], 0
          %s257 = sshll.u32 %s6, 4
          %s258 = int_to_ptr.vmem [resolvable:$true] %s257
          %260 = dma.vmem_to_smem %s258, 16, [#allocation10], [#allocation9]
        $region36: #{tpu_custom_call.1} parent=11 // pred_fallthru
          _
        // Predicated region
        $region37: #{tpu_custom_call.1} parent=11 // pred_check
          %p261 = pneg %p195
        $region38: #{tpu_custom_call.1} parent=11 // pred_check_branch
          %263 = sbr.rel (%p261) target = $region40
        $region39: #{tpu_custom_call.1} parent=11 // pred_region
          _
        $region40: #{tpu_custom_call.1} parent=11 // pred_fallthru
          _
      $region12: #{tpu_custom_call.1} parent=5 // pred_fallthru
        _
      %p264 = scmp.lt.s32.totalorder %s22, 2
      // Predicated region
      $region41: #{tpu_custom_call.1} parent=5 // pred_check
        %p265 = pneg %p264
      $region42: #{tpu_custom_call.1} parent=5 // pred_check_branch
        %267 = sbr.rel (%p265) target = $region44
      $region43: #{tpu_custom_call.1} parent=5 // pred_region
        // Predicated region
        $region45: #{tpu_custom_call.1} parent=43 // pred_check
          %p268 = pneg %p42
        $region46: #{tpu_custom_call.1} parent=43 // pred_check_branch
          %270 = sbr.rel (%p268) target = $region48
        $region47: #{tpu_custom_call.1} parent=43 // pred_region
          %s271 = sand.u32 %s32, 1
          %s272 = scalar_lea.sflag [#allocation7], %s271
          %s273 = sand.u32 %s32, 1
          %s274 = smul.addr %s273, 16
          %s275 = scalar_lea.vmem [#allocation6], %s274
          %277 = vsyncadd %s272, 0
          %s278 = smul.addr %s22, 2
          %s279 = smul.addr %s278, 8
          %s280 = scalar_lea.hbm %s0, %s279
          %s282 = sshll.u32 %s280, 4
          %s283 = int_to_ptr.hbm [resolvable:$true] %s282
          %s284 = sshll.u32 %s275, 4
          %s285 = int_to_ptr.vmem [resolvable:$true] %s284
          %287 = dma.hbm_to_vmem [thread:$0]  %s283, 256, %s285, %s272
        $region48: #{tpu_custom_call.1} parent=43 // pred_fallthru
          _
      $region44: #{tpu_custom_call.1} parent=5 // pred_fallthru
        _
      %p288 = scmp.le.s32.totalorder 1, %s22
      %p289 = scmp.lt.s32.totalorder %s22, 3
      %p290 = pnand %p288, %p289
      %p291 = pneg %p290
      // Predicated region
      $region49: #{tpu_custom_call.1} parent=5 // pred_check
        _
      $region50: #{tpu_custom_call.1} parent=5 // pred_check_branch
        %293 = sbr.rel (%p290) target = $region52
      $region51: #{tpu_custom_call.1} parent=5 // pred_region
        %s294 = ssub.s32 %s22, 1
        %s295 = sand.u32 %s35, 1
        %s296 = scalar_lea.sflag [#allocation7], %s295
        %s297 = sand.u32 %s35, 1
        %s298 = smul.addr %s297, 16
        %s299 = scalar_lea.vmem [#allocation6], %s298
        // Predicated region
        $region53: #{tpu_custom_call.1} parent=51 // pred_check
          %p300 = pneg %p48
        $region54: #{tpu_custom_call.1} parent=51 // pred_check_branch
          %302 = sbr.rel (%p300) target = $region56
        $region55: #{tpu_custom_call.1} parent=51 // pred_region
          %304 = dma.done %s296, 256
        $region56: #{tpu_custom_call.1} parent=51 // pred_fallthru
          _
        // Predicated region
        $region57: #{tpu_custom_call.1} parent=51 // pred_check
          %p305 = pneg %p174
        $region58: #{tpu_custom_call.1} parent=51 // pred_check_branch
          %307 = sbr.rel (%p305) target = $region60
        $region59: #{tpu_custom_call.1} parent=51 // pred_region
          %309 = dma.done [#allocation9], 16
        $region60: #{tpu_custom_call.1} parent=51 // pred_fallthru
          _
        %310 = sfence
        %s311 = sand.u32 %s35, 1
        %s312 = scalar_lea.sflag [#allocation7], %s311
        %s313 = sand.u32 %s35, 1
        %s314 = smul.addr %s313, 16
        %s315 = scalar_lea.vmem [#allocation6], %s314
        %p316 = pneg %p48
        %p317 = pneg %p45
        %p318 = pneg %p69
        %p319 = pneg %p66
        %p320 = pneg %p90
        %p321 = pneg %p87
        %p322 = pneg %p111
        %p323 = pneg %p108
        %p324 = pneg %p132
        %p325 = pneg %p129
        %p326 = pneg %p153
        %p327 = pneg %p150
        %p328 = pneg %p174
        %p329 = pneg %p171
        %p330 = pneg %p195
        %p331 = pneg %p192
        %p332 = pneg %p221
        %p333 = pneg %p218
        %s334 = sand.u32 %s208, 1
        %s335 = scalar_lea.sflag [#allocation8], %s334
        %s336 = sand.u32 %s208, 1
        %s337 = smul.addr %s336, 16
        %s338 = scalar_lea.vmem [#allocation11], %s337
        %s339 = sld [smem:[#allocation5]]
        %s340 = sld [smem:[#allocation10]]
        %s341 = sld [smem:[#allocation10 + $0x1]]
        %s342 = sld [smem:[#allocation10 + $0x2]]
        %s343 = sld [smem:[#allocation10 + $0x3]]
        %v344 = vld [vmem:[%s299] sm:$0xff]
        %v345 = vld [vmem:[%s299 + $0x8] sm:$0xff]
        %v346 = vld [vmem:[%s1] sm:$0xff]
        %v347 = vld [vmem:[%s2] sm:$0xff]
        %349 = vset.pattern.permute.xlu0 0
        %350 = vperm.xlu0 %349, %v347
        %v351 = vpop.permute.xlu0 %350
        %vm353 = vcmask 64512
        %v355 = vsel %vm353, %v346, 0
        %357 = vmatpush.msra.mxu0 0.0
        %358 = vmatpush.msra.mxu0 0.0
        %359 = vmatpush.msra.mxu0 0.0
        %360 = vmatpush.msra.mxu0 0.0
        %361 = vmatpush.msra.mxu0 0.0
        %362 = vmatpush.msra.mxu0 0.0
        %363 = vmatpush.msra.mxu0 0.0
        %364 = vmatpush.msra.mxu0 0.0
        %365 = vmatpush.msra.mxu0 0.0
        %366 = vmatpush.msra.mxu0 0.0
        %367 = vmatpush.msra.mxu0 0.0
        %368 = vmatpush.msra.mxu0 0.0
        %369 = vmatpush.msra.mxu0 0.0
        %370 = vmatpush.msra.mxu0 0.0
        %371 = vmatpush.msra.mxu0 0.0
        %372 = vmatpush.msra.mxu0 %v344
        %373 = vmatmul.f32.gmra.mxu0 %v355
        %v374 = vpop.f32.mrf.mxu0
        %v375 = vadd.f32 %v351, %v374
        %376 = vdwg.mxu0
        %377 = vmatpush.msra.mxu0 0.0
        %378 = vmatpush.msra.mxu0 0.0
        %379 = vmatpush.msra.mxu0 0.0
        %380 = vmatpush.msra.mxu0 0.0
        %381 = vmatpush.msra.mxu0 0.0
        %382 = vmatpush.msra.mxu0 0.0
        %383 = vmatpush.msra.mxu0 0.0
        %384 = vmatpush.msra.mxu0 0.0
        %385 = vmatpush.msra.mxu0 0.0
        %386 = vmatpush.msra.mxu0 0.0
        %387 = vmatpush.msra.mxu0 0.0
        %388 = vmatpush.msra.mxu0 0.0
        %389 = vmatpush.msra.mxu0 0.0
        %390 = vmatpush.msra.mxu0 0.0
        %391 = vmatpush.msra.mxu0 0.0
        %392 = vmatpush.msra.mxu0 %v345
        %393 = vmatmul.f32.gmra.mxu0 %v355
        %v394 = vpop.f32.mrf.mxu0
        %v395 = vadd.f32 %v351, %v394
        %396 = vdwg.mxu0
        %v397 = vmax.f32 %v375, 0.0
        %v398 = vmax.f32 %v395, 0.0
        %399 = vst [vmem:[#allocation3] sm:$0xff] %v397
        %400 = vst [vmem:[#allocation3 + $0x8] sm:$0xff] %v398
        %v401 = vld [vmem:[%s3] sm:$0xf]
        %v402 = vld [vmem:[%s5] sm:$0xf]
        %404 = vset.pattern.permute.xlu0 0
        %405 = vperm.xlu0 %404, %v402
        %v406 = vpop.permute.xlu0 %405
        %v409 = vsel %vm353, %v401, 0
        %411 = vmatpush.msra.mxu0 0.0
        %412 = vmatpush.msra.mxu0 0.0
        %413 = vmatpush.msra.mxu0 0.0
        %414 = vmatpush.msra.mxu0 0.0
        %415 = vmatpush.msra.mxu0 0.0
        %416 = vmatpush.msra.mxu0 0.0
        %417 = vmatpush.msra.mxu0 0.0
        %418 = vmatpush.msra.mxu0 0.0
        %419 = vmatpush.msra.mxu0 0.0
        %420 = vmatpush.msra.mxu0 0.0
        %421 = vmatpush.msra.mxu0 0.0
        %422 = vmatpush.msra.mxu0 0.0
        %423 = vmatpush.msra.mxu0 0.0
        %424 = vmatpush.msra.mxu0 0.0
        %425 = vmatpush.msra.mxu0 0.0
        %426 = vmatpush.msra.mxu0 %v397
        %427 = vmatmul.f32.gmra.mxu0 %v409
        %v428 = vpop.f32.mrf.mxu0
        %v429 = vadd.f32 %v406, %v428
        %430 = vdwg.mxu0
        %431 = vmatpush.msra.mxu0 0.0
        %432 = vmatpush.msra.mxu0 0.0
        %433 = vmatpush.msra.mxu0 0.0
        %434 = vmatpush.msra.mxu0 0.0
        %435 = vmatpush.msra.mxu0 0.0
        %436 = vmatpush.msra.mxu0 0.0
        %437 = vmatpush.msra.mxu0 0.0
        %438 = vmatpush.msra.mxu0 0.0
        %439 = vmatpush.msra.mxu0 0.0
        %440 = vmatpush.msra.mxu0 0.0
        %441 = vmatpush.msra.mxu0 0.0
        %442 = vmatpush.msra.mxu0 0.0
        %443 = vmatpush.msra.mxu0 0.0
        %444 = vmatpush.msra.mxu0 0.0
        %445 = vmatpush.msra.mxu0 0.0
        %446 = vmatpush.msra.mxu0 %v398
        %447 = vmatmul.f32.gmra.mxu0 %v409
        %v448 = vpop.f32.mrf.mxu0
        %v449 = vadd.f32 %v406, %v448
        %450 = vdwg.mxu0
        %v451 = vld [vmem:[%s4] sm:$0xf]
        %v453 = vsel %vm353, %v451, 0
        %455 = vmatpush.msra.mxu0 0.0
        %456 = vmatpush.msra.mxu0 0.0
        %457 = vmatpush.msra.mxu0 0.0
        %458 = vmatpush.msra.mxu0 0.0
        %459 = vmatpush.msra.mxu0 0.0
        %460 = vmatpush.msra.mxu0 0.0
        %461 = vmatpush.msra.mxu0 0.0
        %462 = vmatpush.msra.mxu0 0.0
        %463 = vmatpush.msra.mxu0 0.0
        %464 = vmatpush.msra.mxu0 0.0
        %465 = vmatpush.msra.mxu0 0.0
        %466 = vmatpush.msra.mxu0 0.0
        %467 = vmatpush.msra.mxu0 0.0
        %468 = vmatpush.msra.mxu0 0.0
        %469 = vmatpush.msra.mxu0 0.0
        %470 = vmatpush.msra.mxu0 %v397
        %471 = vmatmul.f32.gmra.mxu0 %v453
        %v472 = vpop.f32.mrf.mxu0
        %v473 = vadd.f32 0.0, %v472
        %474 = vdwg.mxu0
        %475 = vmatpush.msra.mxu0 0.0
        %476 = vmatpush.msra.mxu0 0.0
        %477 = vmatpush.msra.mxu0 0.0
        %478 = vmatpush.msra.mxu0 0.0
        %479 = vmatpush.msra.mxu0 0.0
        %480 = vmatpush.msra.mxu0 0.0
        %481 = vmatpush.msra.mxu0 0.0
        %482 = vmatpush.msra.mxu0 0.0
        %483 = vmatpush.msra.mxu0 0.0
        %484 = vmatpush.msra.mxu0 0.0
        %485 = vmatpush.msra.mxu0 0.0
        %486 = vmatpush.msra.mxu0 0.0
        %487 = vmatpush.msra.mxu0 0.0
        %488 = vmatpush.msra.mxu0 0.0
        %489 = vmatpush.msra.mxu0 0.0
        %490 = vmatpush.msra.mxu0 %v398
        %491 = vmatmul.f32.gmra.mxu0 %v453
        %v492 = vpop.f32.mrf.mxu0
        %v493 = vadd.f32 0.0, %v492
        %494 = vdwg.mxu0
        %495 = vxpose.xlu0.b32.start [1/16] %v429, 128
        %496 = vxpose.xlu0.b32.cont [2/16] 0.0, 128
        %497 = vxpose.xlu0.b32.cont [3/16] 0.0, 128
        %498 = vxpose.xlu0.b32.cont [4/16] 0.0, 128
        %499 = vxpose.xlu0.b32.cont [5/16] 0.0, 128
        %500 = vxpose.xlu0.b32.cont [6/16] 0.0, 128
        %501 = vxpose.xlu0.b32.cont [7/16] 0.0, 128
        %502 = vxpose.xlu0.b32.cont [8/16] 0.0, 128
        %503 = vxpose.xlu0.b32.cont [9/16] 0.0, 128
        %504 = vxpose.xlu0.b32.cont [10/16] 0.0, 128
        %505 = vxpose.xlu0.b32.cont [11/16] 0.0, 128
        %506 = vxpose.xlu0.b32.cont [12/16] 0.0, 128
        %507 = vxpose.xlu0.b32.cont [13/16] 0.0, 128
        %508 = vxpose.xlu0.b32.cont [14/16] 0.0, 128
        %509 = vxpose.xlu0.b32.cont [15/16] 0.0, 128
        %510 = vxpose.xlu0.b32.end [16/16] 0.0, 128
        %v511 = vpop.trf.xlu0
        %v512 = vpop.trf.xlu0
        %v513 = vpop.trf.xlu0
        %v514 = vpop.trf.xlu0
        %v515 = vpop.trf.xlu0
        %v516 = vpop.trf.xlu0
        %v517 = vpop.trf.xlu0
        %v518 = vpop.trf.xlu0
        %v519 = vpop.trf.xlu0
        %v520 = vpop.trf.xlu0
        %v521 = vpop.trf.xlu0
        %v522 = vpop.trf.xlu0
        %v523 = vpop.trf.xlu0
        %v524 = vpop.trf.xlu0
        %v525 = vpop.trf.xlu0
        %v526 = vpop.trf.xlu0
        %527 = vxpose.xlu0.b32.start [1/16] %v449, 128
        %528 = vxpose.xlu0.b32.cont [2/16] 0.0, 128
        %529 = vxpose.xlu0.b32.cont [3/16] 0.0, 128
        %530 = vxpose.xlu0.b32.cont [4/16] 0.0, 128
        %531 = vxpose.xlu0.b32.cont [5/16] 0.0, 128
        %532 = vxpose.xlu0.b32.cont [6/16] 0.0, 128
        %533 = vxpose.xlu0.b32.cont [7/16] 0.0, 128
        %534 = vxpose.xlu0.b32.cont [8/16] 0.0, 128
        %535 = vxpose.xlu0.b32.cont [9/16] 0.0, 128
        %536 = vxpose.xlu0.b32.cont [10/16] 0.0, 128
        %537 = vxpose.xlu0.b32.cont [11/16] 0.0, 128
        %538 = vxpose.xlu0.b32.cont [12/16] 0.0, 128
        %539 = vxpose.xlu0.b32.cont [13/16] 0.0, 128
        %540 = vxpose.xlu0.b32.cont [14/16] 0.0, 128
        %541 = vxpose.xlu0.b32.cont [15/16] 0.0, 128
        %542 = vxpose.xlu0.b32.end [16/16] 0.0, 128
        %v543 = vpop.trf.xlu0
        %v544 = vpop.trf.xlu0
        %v545 = vpop.trf.xlu0
        %v546 = vpop.trf.xlu0
        %v547 = vpop.trf.xlu0
        %v548 = vpop.trf.xlu0
        %v549 = vpop.trf.xlu0
        %v550 = vpop.trf.xlu0
        %v551 = vpop.trf.xlu0
        %v552 = vpop.trf.xlu0
        %v553 = vpop.trf.xlu0
        %v554 = vpop.trf.xlu0
        %v555 = vpop.trf.xlu0
        %v556 = vpop.trf.xlu0
        %v557 = vpop.trf.xlu0
        %v558 = vpop.trf.xlu0
        %vm559 = vcmask 31744
        %560 = vst.msk [vmem:[#allocation2] sm:$0xff] %vm559, %v511
        %561 = vst.msk [vmem:[#allocation2 + $0x8] sm:$0xff] %vm559, %v512
        %562 = vst.msk [vmem:[#allocation2 + $0x10] sm:$0xff] %vm559, %v513
        %563 = vst.msk [vmem:[#allocation2 + $0x18] sm:$0xff] %vm559, %v514
        %564 = vst.msk [vmem:[#allocation2 + $0x20] sm:$0xff] %vm559, %v515
        %565 = vst.msk [vmem:[#allocation2 + $0x28] sm:$0xff] %vm559, %v516
        %566 = vst.msk [vmem:[#allocation2 + $0x30] sm:$0xff] %vm559, %v517
        %567 = vst.msk [vmem:[#allocation2 + $0x38] sm:$0xff] %vm559, %v518
        %568 = vst.msk [vmem:[#allocation2 + $0x40] sm:$0xff] %vm559, %v519
        %569 = vst.msk [vmem:[#allocation2 + $0x48] sm:$0xff] %vm559, %v520
        %570 = vst.msk [vmem:[#allocation2 + $0x50] sm:$0xff] %vm559, %v521
        %571 = vst.msk [vmem:[#allocation2 + $0x58] sm:$0xff] %vm559, %v522
        %572 = vst.msk [vmem:[#allocation2 + $0x60] sm:$0xff] %vm559, %v523
        %573 = vst.msk [vmem:[#allocation2 + $0x68] sm:$0xff] %vm559, %v524
        %574 = vst.msk [vmem:[#allocation2 + $0x70] sm:$0xff] %vm559, %v525
        %575 = vst.msk [vmem:[#allocation2 + $0x78] sm:$0xff] %vm559, %v526
        %576 = vst.msk [vmem:[#allocation2 + $0x80] sm:$0xff] %vm559, %v543
        %577 = vst.msk [vmem:[#allocation2 + $0x88] sm:$0xff] %vm559, %v544
        %578 = vst.msk [vmem:[#allocation2 + $0x90] sm:$0xff] %vm559, %v545
        %579 = vst.msk [vmem:[#allocation2 + $0x98] sm:$0xff] %vm559, %v546
        %580 = vst.msk [vmem:[#allocation2 + $0xa0] sm:$0xff] %vm559, %v547
        %581 = vst.msk [vmem:[#allocation2 + $0xa8] sm:$0xff] %vm559, %v548
        %582 = vst.msk [vmem:[#allocation2 + $0xb0] sm:$0xff] %vm559, %v549
        %583 = vst.msk [vmem:[#allocation2 + $0xb8] sm:$0xff] %vm559, %v550
        %584 = vst.msk [vmem:[#allocation2 + $0xc0] sm:$0xff] %vm559, %v551
        %585 = vst.msk [vmem:[#allocation2 + $0xc8] sm:$0xff] %vm559, %v552
        %586 = vst.msk [vmem:[#allocation2 + $0xd0] sm:$0xff] %vm559, %v553
        %587 = vst.msk [vmem:[#allocation2 + $0xd8] sm:$0xff] %vm559, %v554
        %588 = vst.msk [vmem:[#allocation2 + $0xe0] sm:$0xff] %vm559, %v555
        %589 = vst.msk [vmem:[#allocation2 + $0xe8] sm:$0xff] %vm559, %v556
        %590 = vst.msk [vmem:[#allocation2 + $0xf0] sm:$0xff] %vm559, %v557
        %591 = vst.msk [vmem:[#allocation2 + $0xf8] sm:$0xff] %vm559, %v558
        %592 = vst [vmem:[#allocation4] sm:$0xff] 0.0
        %593 = vst [vmem:[#allocation4 + $0x8] sm:$0xff] 0.0
        %v594 = vld [vmem:[#allocation2] sm:$0xff]
        %v595 = vld [vmem:[#allocation2 + $0x8] sm:$0xff]
        %v596 = vld [vmem:[#allocation2 + $0x10] sm:$0xff]
        %v597 = vld [vmem:[#allocation2 + $0x18] sm:$0xff]
        %599 = vset.pattern.permute.xlu0 0
        %600 = vperm.xlu0 %599, %v594
        %v601 = vpop.permute.xlu0 %600
        %604 = vset.pattern.permute.xlu0 0
        %605 = vperm.xlu0 %604, %v595
        %v606 = vpop.permute.xlu0 %605
        %609 = vset.pattern.permute.xlu0 0
        %610 = vperm.xlu0 %609, %v596
        %v611 = vpop.permute.xlu0 %610
        %614 = vset.pattern.permute.xlu0 0
        %615 = vperm.xlu0 %614, %v597
        %v616 = vpop.permute.xlu0 %615
        %v618 = vperm.slane %v473, 0
        %v619 = vperm.slane %v493, 0
        %v620 = vadd.f32 %v601, %v618
        %v621 = vadd.f32 %v601, %v619
        %v622 = vadd.f32 %v606, %v618
        %v623 = vadd.f32 %v606, %v619
        %v624 = vadd.f32 %v611, %v618
        %v625 = vadd.f32 %v611, %v619
        %v626 = vadd.f32 %v616, %v618
        %v627 = vadd.f32 %v616, %v619
        %v628 = vmax.f32 %v620, 0.0
        %v629 = vmax.f32 %v621, 0.0
        %v630 = vmax.f32 %v622, 0.0
        %v631 = vmax.f32 %v623, 0.0
        %v632 = vmax.f32 %v624, 0.0
        %v633 = vmax.f32 %v625, 0.0
        %v634 = vmax.f32 %v626, 0.0
        %v635 = vmax.f32 %v627, 0.0
        %v636 = vstv %s340
        %v637 = vmul.f32 %v636, %v628
        %v638 = vmul.f32 %v636, %v629
        %v639 = vmul.f32 %v636, %v630
        %v640 = vmul.f32 %v636, %v631
        %v641 = vmul.f32 %v636, %v632
        %v642 = vmul.f32 %v636, %v633
        %v643 = vmul.f32 %v636, %v634
        %v644 = vmul.f32 %v636, %v635
        %v645 = vstv %s339
        %v646 = vadd.f32 %v637, %v645
        %v647 = vadd.f32 %v638, %v645
        %v648 = vadd.f32 %v639, %v645
        %v649 = vadd.f32 %v640, %v645
        %v650 = vadd.f32 %v641, %v645
        %v651 = vadd.f32 %v642, %v645
        %v652 = vadd.f32 %v643, %v645
        %v653 = vadd.f32 %v644, %v645
        %654 = vset.pattern.permute.xlu0 1
        %655 = vperm.xlu0 %654, %v594
        %v656 = vpop.permute.xlu0 %655
        %658 = vset.pattern.permute.xlu0 1
        %659 = vperm.xlu0 %658, %v595
        %v660 = vpop.permute.xlu0 %659
        %662 = vset.pattern.permute.xlu0 1
        %663 = vperm.xlu0 %662, %v596
        %v664 = vpop.permute.xlu0 %663
        %666 = vset.pattern.permute.xlu0 1
        %667 = vperm.xlu0 %666, %v597
        %v668 = vpop.permute.xlu0 %667
        %v670 = vperm.slane %v473, 1
        %v671 = vperm.slane %v493, 1
        %v672 = vadd.f32 %v656, %v670
        %v673 = vadd.f32 %v656, %v671
        %v674 = vadd.f32 %v660, %v670
        %v675 = vadd.f32 %v660, %v671
        %v676 = vadd.f32 %v664, %v670
        %v677 = vadd.f32 %v664, %v671
        %v678 = vadd.f32 %v668, %v670
        %v679 = vadd.f32 %v668, %v671
        %v680 = vmax.f32 %v672, 0.0
        %v681 = vmax.f32 %v673, 0.0
        %v682 = vmax.f32 %v674, 0.0
        %v683 = vmax.f32 %v675, 0.0
        %v684 = vmax.f32 %v676, 0.0
        %v685 = vmax.f32 %v677, 0.0
        %v686 = vmax.f32 %v678, 0.0
        %v687 = vmax.f32 %v679, 0.0
        %v688 = vstv %s341
        %v689 = vmul.f32 %v688, %v680
        %v690 = vmul.f32 %v688, %v681
        %v691 = vmul.f32 %v688, %v682
        %v692 = vmul.f32 %v688, %v683
        %v693 = vmul.f32 %v688, %v684
        %v694 = vmul.f32 %v688, %v685
        %v695 = vmul.f32 %v688, %v686
        %v696 = vmul.f32 %v688, %v687
        %v697 = vadd.f32 %v646, %v689
        %v698 = vadd.f32 %v647, %v690
        %v699 = vadd.f32 %v648, %v691
        %v700 = vadd.f32 %v649, %v692
        %v701 = vadd.f32 %v650, %v693
        %v702 = vadd.f32 %v651, %v694
        %v703 = vadd.f32 %v652, %v695
        %v704 = vadd.f32 %v653, %v696
        %705 = vset.pattern.permute.xlu0 2
        %706 = vperm.xlu0 %705, %v594
        %v707 = vpop.permute.xlu0 %706
        %709 = vset.pattern.permute.xlu0 2
        %710 = vperm.xlu0 %709, %v595
        %v711 = vpop.permute.xlu0 %710
        %713 = vset.pattern.permute.xlu0 2
        %714 = vperm.xlu0 %713, %v596
        %v715 = vpop.permute.xlu0 %714
        %717 = vset.pattern.permute.xlu0 2
        %718 = vperm.xlu0 %717, %v597
        %v719 = vpop.permute.xlu0 %718
        %v721 = vperm.slane %v473, 2
        %v722 = vperm.slane %v493, 2
        %v723 = vadd.f32 %v707, %v721
        %v724 = vadd.f32 %v707, %v722
        %v725 = vadd.f32 %v711, %v721
        %v726 = vadd.f32 %v711, %v722
        %v727 = vadd.f32 %v715, %v721
        %v728 = vadd.f32 %v715, %v722
        %v729 = vadd.f32 %v719, %v721
        %v730 = vadd.f32 %v719, %v722
        %v731 = vmax.f32 %v723, 0.0
        %v732 = vmax.f32 %v724, 0.0
        %v733 = vmax.f32 %v725, 0.0
        %v734 = vmax.f32 %v726, 0.0
        %v735 = vmax.f32 %v727, 0.0
        %v736 = vmax.f32 %v728, 0.0
        %v737 = vmax.f32 %v729, 0.0
        %v738 = vmax.f32 %v730, 0.0
        %v739 = vstv %s342
        %v740 = vmul.f32 %v739, %v731
        %v741 = vmul.f32 %v739, %v732
        %v742 = vmul.f32 %v739, %v733
        %v743 = vmul.f32 %v739, %v734
        %v744 = vmul.f32 %v739, %v735
        %v745 = vmul.f32 %v739, %v736
        %v746 = vmul.f32 %v739, %v737
        %v747 = vmul.f32 %v739, %v738
        %v748 = vadd.f32 %v697, %v740
        %v749 = vadd.f32 %v698, %v741
        %v750 = vadd.f32 %v699, %v742
        %v751 = vadd.f32 %v700, %v743
        %v752 = vadd.f32 %v701, %v744
        %v753 = vadd.f32 %v702, %v745
        %v754 = vadd.f32 %v703, %v746
        %v755 = vadd.f32 %v704, %v747
        %756 = vset.pattern.permute.xlu0 3
        %757 = vperm.xlu0 %756, %v594
        %v758 = vpop.permute.xlu0 %757
        %760 = vset.pattern.permute.xlu0 3
        %761 = vperm.xlu0 %760, %v595
        %v762 = vpop.permute.xlu0 %761
        %764 = vset.pattern.permute.xlu0 3
        %765 = vperm.xlu0 %764, %v596
        %v766 = vpop.permute.xlu0 %765
        %768 = vset.pattern.permute.xlu0 3
        %769 = vperm.xlu0 %768, %v597
        %v770 = vpop.permute.xlu0 %769
        %v772 = vperm.slane %v473, 3
        %v773 = vperm.slane %v493, 3
        %v774 = vadd.f32 %v758, %v772
        %v775 = vadd.f32 %v758, %v773
        %v776 = vadd.f32 %v762, %v772
        %v777 = vadd.f32 %v762, %v773
        %v778 = vadd.f32 %v766, %v772
        %v779 = vadd.f32 %v766, %v773
        %v780 = vadd.f32 %v770, %v772
        %v781 = vadd.f32 %v770, %v773
        %v782 = vmax.f32 %v774, 0.0
        %v783 = vmax.f32 %v775, 0.0
        %v784 = vmax.f32 %v776, 0.0
        %v785 = vmax.f32 %v777, 0.0
        %v786 = vmax.f32 %v778, 0.0
        %v787 = vmax.f32 %v779, 0.0
        %v788 = vmax.f32 %v780, 0.0
        %v789 = vmax.f32 %v781, 0.0
        %v790 = vstv %s343
        %v791 = vmul.f32 %v790, %v782
        %v792 = vmul.f32 %v790, %v783
        %v793 = vmul.f32 %v790, %v784
        %v794 = vmul.f32 %v790, %v785
        %v795 = vmul.f32 %v790, %v786
        %v796 = vmul.f32 %v790, %v787
        %v797 = vmul.f32 %v790, %v788
        %v798 = vmul.f32 %v790, %v789
        %v799 = vadd.f32 %v748, %v791
        %v800 = vadd.f32 %v749, %v792
        %v801 = vadd.f32 %v750, %v793
        %v802 = vadd.f32 %v751, %v794
        %v803 = vadd.f32 %v752, %v795
        %v804 = vadd.f32 %v753, %v796
        %v805 = vadd.f32 %v754, %v797
        %v806 = vadd.f32 %v755, %v798
        %v807 = vtanh.pop %v799
        %v808 = vtanh.pop %v800
        %v809 = vtanh.pop %v801
        %v810 = vtanh.pop %v802
        %v811 = vtanh.pop %v803
        %v812 = vtanh.pop %v804
        %v813 = vtanh.pop %v805
        %v814 = vtanh.pop %v806
        %v815 = vmul.f32 %v807, 0.5
        %v816 = vmul.f32 %v808, 0.5
        %v817 = vmul.f32 %v809, 0.5
        %v818 = vmul.f32 %v810, 0.5
        %v819 = vmul.f32 %v811, 0.5
        %v820 = vmul.f32 %v812, 0.5
        %v821 = vmul.f32 %v813, 0.5
        %v822 = vmul.f32 %v814, 0.5
        %v823 = vmul.f32 %v815, 1.442695
        %v824 = vpow.pop %v823
        %v825 = vmul.f32 %v816, 1.442695
        %v826 = vpow.pop %v825
        %v827 = vmul.f32 %v817, 1.442695
        %v828 = vpow.pop %v827
        %v829 = vmul.f32 %v818, 1.442695
        %v830 = vpow.pop %v829
        %v831 = vmul.f32 %v819, 1.442695
        %v832 = vpow.pop %v831
        %v833 = vmul.f32 %v820, 1.442695
        %v834 = vpow.pop %v833
        %v835 = vmul.f32 %v821, 1.442695
        %v836 = vpow.pop %v835
        %v837 = vmul.f32 %v822, 1.442695
        %v838 = vpow.pop %v837
        %839 = vmatpush.xpose.msra.mxu0 0.0
        %840 = vmatpush.xpose.msra.mxu0 0.0
        %841 = vmatpush.xpose.msra.mxu0 0.0
        %842 = vmatpush.xpose.msra.mxu0 0.0
        %843 = vmatpush.xpose.msra.mxu0 0.0
        %844 = vmatpush.xpose.msra.mxu0 0.0
        %845 = vmatpush.xpose.msra.mxu0 0.0
        %846 = vmatpush.xpose.msra.mxu0 0.0
        %847 = vmatpush.xpose.msra.mxu0 0.0
        %848 = vmatpush.xpose.msra.mxu0 0.0
        %849 = vmatpush.xpose.msra.mxu0 0.0
        %850 = vmatpush.xpose.msra.mxu0 0.0
        %851 = vmatpush.xpose.msra.mxu0 %v836
        %852 = vmatpush.xpose.msra.mxu0 %v832
        %853 = vmatpush.xpose.msra.mxu0 %v828
        %854 = vmatpush.xpose.msra.mxu0 %v824
        %855 = vmatmul.f32.gmra.mxu0 1.0
        %v856 = vpop.f32.mrf.mxu0
        %v857 = vadd.f32 0.0, %v856
        %858 = vdwg.mxu0
        %859 = vmatpush.xpose.msra.mxu0 0.0
        %860 = vmatpush.xpose.msra.mxu0 0.0
        %861 = vmatpush.xpose.msra.mxu0 0.0
        %862 = vmatpush.xpose.msra.mxu0 0.0
        %863 = vmatpush.xpose.msra.mxu0 0.0
        %864 = vmatpush.xpose.msra.mxu0 0.0
        %865 = vmatpush.xpose.msra.mxu0 0.0
        %866 = vmatpush.xpose.msra.mxu0 0.0
        %867 = vmatpush.xpose.msra.mxu0 0.0
        %868 = vmatpush.xpose.msra.mxu0 0.0
        %869 = vmatpush.xpose.msra.mxu0 0.0
        %870 = vmatpush.xpose.msra.mxu0 0.0
        %871 = vmatpush.xpose.msra.mxu0 %v838
        %872 = vmatpush.xpose.msra.mxu0 %v834
        %873 = vmatpush.xpose.msra.mxu0 %v830
        %874 = vmatpush.xpose.msra.mxu0 %v826
        %875 = vmatmul.f32.gmra.mxu0 1.0
        %v876 = vpop.f32.mrf.mxu0
        %v877 = vadd.f32 %v857, %v876
        %878 = vdwg.mxu0
        %v879 = vld [vmem:[#allocation3] sm:$0xff]
        %v880 = vrcp.pop %v877
        %v881 = vmul.f32 %v877, %v880
        %v882 = vsub.f32 1.0, %v881
        %v883 = vmul.f32 %v880, %v882
        %v884 = vadd.f32 %v880, %v883
        %vm885 = vweird.f32 %v877
        %vm886 = vweird.f32 %v880
        %vm887 = vmor %vm885, %vm886
        %v888 = vsel %vm887, %v880, %v884
        %v889 = vand.u32 2147483647, %v877
        %vm890 = vcmp.eq.f32.partialorder %v889, 8.507059e+37
        %v891 = vand.u32 %v877, 2147483648
        %v892 = vor.u32 1.1754944e-38, %v891
        %v893 = vsel %vm890, %v892, %v888
        %v894 = vmul.f32 1.0, %v893
        %v895 = vperm.slane %v894, 0
        %v896 = vmul.f32 %v879, %v895
        %v897 = vld [vmem:[#allocation4] sm:$0xff]
        %v898 = vld [vmem:[#allocation4 + $0x8] sm:$0xff]
        %vm899 = vcmask 261120
        %v901 = vsel %vm899, %v896, 0
        %903 = vmatpush.msra.mxu0 0.0
        %904 = vmatpush.msra.mxu0 0.0
        %905 = vmatpush.msra.mxu0 0.0
        %906 = vmatpush.msra.mxu0 0.0
        %907 = vmatpush.msra.mxu0 0.0
        %908 = vmatpush.msra.mxu0 0.0
        %909 = vmatpush.msra.mxu0 0.0
        %910 = vmatpush.msra.mxu0 0.0
        %911 = vmatpush.msra.mxu0 0.0
        %912 = vmatpush.msra.mxu0 0.0
        %913 = vmatpush.msra.mxu0 0.0
        %914 = vmatpush.msra.mxu0 0.0
        %915 = vmatpush.msra.mxu0 %v836
        %916 = vmatpush.msra.mxu0 %v832
        %917 = vmatpush.msra.mxu0 %v828
        %918 = vmatpush.msra.mxu0 %v824
        %919 = vmatmul.f32.gmra.mxu0 %v901
        %v920 = vpop.f32.mrf.mxu0
        %v921 = vadd.f32 0.0, %v920
        %922 = vdwg.mxu0
        %923 = vmatpush.msra.mxu0 0.0
        %924 = vmatpush.msra.mxu0 0.0
        %925 = vmatpush.msra.mxu0 0.0
        %926 = vmatpush.msra.mxu0 0.0
        %927 = vmatpush.msra.mxu0 0.0
        %928 = vmatpush.msra.mxu0 0.0
        %929 = vmatpush.msra.mxu0 0.0
        %930 = vmatpush.msra.mxu0 0.0
        %931 = vmatpush.msra.mxu0 0.0
        %932 = vmatpush.msra.mxu0 0.0
        %933 = vmatpush.msra.mxu0 0.0
        %934 = vmatpush.msra.mxu0 0.0
        %935 = vmatpush.msra.mxu0 %v838
        %936 = vmatpush.msra.mxu0 %v834
        %937 = vmatpush.msra.mxu0 %v830
        %938 = vmatpush.msra.mxu0 %v826
        %939 = vmatmul.f32.gmra.mxu0 %v901
        %v940 = vpop.f32.mrf.mxu0
        %v941 = vadd.f32 0.0, %v940
        %942 = vdwg.mxu0
        %v943 = vadd.f32 %v897, %v921
        %v944 = vadd.f32 %v898, %v941
        %945 = vst [vmem:[#allocation4] sm:$0xff] %v943
        %946 = vst [vmem:[#allocation4 + $0x8] sm:$0xff] %v944
        %v947 = vld [vmem:[#allocation2 + $0x20] sm:$0xff]
        %v948 = vld [vmem:[#allocation2 + $0x28] sm:$0xff]
        %v949 = vld [vmem:[#allocation2 + $0x30] sm:$0xff]
        %v950 = vld [vmem:[#allocation2 + $0x38] sm:$0xff]
        %952 = vset.pattern.permute.xlu0 0
        %953 = vperm.xlu0 %952, %v947
        %v954 = vpop.permute.xlu0 %953
        %957 = vset.pattern.permute.xlu0 0
        %958 = vperm.xlu0 %957, %v948
        %v959 = vpop.permute.xlu0 %958
        %962 = vset.pattern.permute.xlu0 0
        %963 = vperm.xlu0 %962, %v949
        %v964 = vpop.permute.xlu0 %963
        %967 = vset.pattern.permute.xlu0 0
        %968 = vperm.xlu0 %967, %v950
        %v969 = vpop.permute.xlu0 %968
        %v971 = vadd.f32 %v954, %v618
        %v972 = vadd.f32 %v954, %v619
        %v973 = vadd.f32 %v959, %v618
        %v974 = vadd.f32 %v959, %v619
        %v975 = vadd.f32 %v964, %v618
        %v976 = vadd.f32 %v964, %v619
        %v977 = vadd.f32 %v969, %v618
        %v978 = vadd.f32 %v969, %v619
        %v979 = vmax.f32 %v971, 0.0
        %v980 = vmax.f32 %v972, 0.0
        %v981 = vmax.f32 %v973, 0.0
        %v982 = vmax.f32 %v974, 0.0
        %v983 = vmax.f32 %v975, 0.0
        %v984 = vmax.f32 %v976, 0.0
        %v985 = vmax.f32 %v977, 0.0
        %v986 = vmax.f32 %v978, 0.0
        %v987 = vmul.f32 %v636, %v979
        %v988 = vmul.f32 %v636, %v980
        %v989 = vmul.f32 %v636, %v981
        %v990 = vmul.f32 %v636, %v982
        %v991 = vmul.f32 %v636, %v983
        %v992 = vmul.f32 %v636, %v984
        %v993 = vmul.f32 %v636, %v985
        %v994 = vmul.f32 %v636, %v986
        %v995 = vadd.f32 %v987, %v645
        %v996 = vadd.f32 %v988, %v645
        %v997 = vadd.f32 %v989, %v645
        %v998 = vadd.f32 %v990, %v645
        %v999 = vadd.f32 %v991, %v645
        %v1000 = vadd.f32 %v992, %v645
        %v1001 = vadd.f32 %v993, %v645
        %v1002 = vadd.f32 %v994, %v645
        %1003 = vset.pattern.permute.xlu0 1
        %1004 = vperm.xlu0 %1003, %v947
        %v1005 = vpop.permute.xlu0 %1004
        %1007 = vset.pattern.permute.xlu0 1
        %1008 = vperm.xlu0 %1007, %v948
        %v1009 = vpop.permute.xlu0 %1008
        %1011 = vset.pattern.permute.xlu0 1
        %1012 = vperm.xlu0 %1011, %v949
        %v1013 = vpop.permute.xlu0 %1012
        %1015 = vset.pattern.permute.xlu0 1
        %1016 = vperm.xlu0 %1015, %v950
        %v1017 = vpop.permute.xlu0 %1016
        %v1019 = vadd.f32 %v1005, %v670
        %v1020 = vadd.f32 %v1005, %v671
        %v1021 = vadd.f32 %v1009, %v670
        %v1022 = vadd.f32 %v1009, %v671
        %v1023 = vadd.f32 %v1013, %v670
        %v1024 = vadd.f32 %v1013, %v671
        %v1025 = vadd.f32 %v1017, %v670
        %v1026 = vadd.f32 %v1017, %v671
        %v1027 = vmax.f32 %v1019, 0.0
        %v1028 = vmax.f32 %v1020, 0.0
        %v1029 = vmax.f32 %v1021, 0.0
        %v1030 = vmax.f32 %v1022, 0.0
        %v1031 = vmax.f32 %v1023, 0.0
        %v1032 = vmax.f32 %v1024, 0.0
        %v1033 = vmax.f32 %v1025, 0.0
        %v1034 = vmax.f32 %v1026, 0.0
        %v1035 = vmul.f32 %v688, %v1027
        %v1036 = vmul.f32 %v688, %v1028
        %v1037 = vmul.f32 %v688, %v1029
        %v1038 = vmul.f32 %v688, %v1030
        %v1039 = vmul.f32 %v688, %v1031
        %v1040 = vmul.f32 %v688, %v1032
        %v1041 = vmul.f32 %v688, %v1033
        %v1042 = vmul.f32 %v688, %v1034
        %v1043 = vadd.f32 %v995, %v1035
        %v1044 = vadd.f32 %v996, %v1036
        %v1045 = vadd.f32 %v997, %v1037
        %v1046 = vadd.f32 %v998, %v1038
        %v1047 = vadd.f32 %v999, %v1039
        %v1048 = vadd.f32 %v1000, %v1040
        %v1049 = vadd.f32 %v1001, %v1041
        %v1050 = vadd.f32 %v1002, %v1042
        %1051 = vset.pattern.permute.xlu0 2
        %1052 = vperm.xlu0 %1051, %v947
        %v1053 = vpop.permute.xlu0 %1052
        %1055 = vset.pattern.permute.xlu0 2
        %1056 = vperm.xlu0 %1055, %v948
        %v1057 = vpop.permute.xlu0 %1056
        %1059 = vset.pattern.permute.xlu0 2
        %1060 = vperm.xlu0 %1059, %v949
        %v1061 = vpop.permute.xlu0 %1060
        %1063 = vset.pattern.permute.xlu0 2
        %1064 = vperm.xlu0 %1063, %v950
        %v1065 = vpop.permute.xlu0 %1064
        %v1067 = vadd.f32 %v1053, %v721
        %v1068 = vadd.f32 %v1053, %v722
        %v1069 = vadd.f32 %v1057, %v721
        %v1070 = vadd.f32 %v1057, %v722
        %v1071 = vadd.f32 %v1061, %v721
        %v1072 = vadd.f32 %v1061, %v722
        %v1073 = vadd.f32 %v1065, %v721
        %v1074 = vadd.f32 %v1065, %v722
        %v1075 = vmax.f32 %v1067, 0.0
        %v1076 = vmax.f32 %v1068, 0.0
        %v1077 = vmax.f32 %v1069, 0.0
        %v1078 = vmax.f32 %v1070, 0.0
        %v1079 = vmax.f32 %v1071, 0.0
        %v1080 = vmax.f32 %v1072, 0.0
        %v1081 = vmax.f32 %v1073, 0.0
        %v1082 = vmax.f32 %v1074, 0.0
        %v1083 = vmul.f32 %v739, %v1075
        %v1084 = vmul.f32 %v739, %v1076
        %v1085 = vmul.f32 %v739, %v1077
        %v1086 = vmul.f32 %v739, %v1078
        %v1087 = vmul.f32 %v739, %v1079
        %v1088 = vmul.f32 %v739, %v1080
        %v1089 = vmul.f32 %v739, %v1081
        %v1090 = vmul.f32 %v739, %v1082
        %v1091 = vadd.f32 %v1043, %v1083
        %v1092 = vadd.f32 %v1044, %v1084
        %v1093 = vadd.f32 %v1045, %v1085
        %v1094 = vadd.f32 %v1046, %v1086
        %v1095 = vadd.f32 %v1047, %v1087
        %v1096 = vadd.f32 %v1048, %v1088
        %v1097 = vadd.f32 %v1049, %v1089
        %v1098 = vadd.f32 %v1050, %v1090
        %1099 = vset.pattern.permute.xlu0 3
        %1100 = vperm.xlu0 %1099, %v947
        %v1101 = vpop.permute.xlu0 %1100
        %1103 = vset.pattern.permute.xlu0 3
        %1104 = vperm.xlu0 %1103, %v948
        %v1105 = vpop.permute.xlu0 %1104
        %1107 = vset.pattern.permute.xlu0 3
        %1108 = vperm.xlu0 %1107, %v949
        %v1109 = vpop.permute.xlu0 %1108
        %1111 = vset.pattern.permute.xlu0 3
        %1112 = vperm.xlu0 %1111, %v950
        %v1113 = vpop.permute.xlu0 %1112
        %v1115 = vadd.f32 %v1101, %v772
        %v1116 = vadd.f32 %v1101, %v773
        %v1117 = vadd.f32 %v1105, %v772
        %v1118 = vadd.f32 %v1105, %v773
        %v1119 = vadd.f32 %v1109, %v772
        %v1120 = vadd.f32 %v1109, %v773
        %v1121 = vadd.f32 %v1113, %v772
        %v1122 = vadd.f32 %v1113, %v773
        %v1123 = vmax.f32 %v1115, 0.0
        %v1124 = vmax.f32 %v1116, 0.0
        %v1125 = vmax.f32 %v1117, 0.0
        %v1126 = vmax.f32 %v1118, 0.0
        %v1127 = vmax.f32 %v1119, 0.0
        %v1128 = vmax.f32 %v1120, 0.0
        %v1129 = vmax.f32 %v1121, 0.0
        %v1130 = vmax.f32 %v1122, 0.0
        %v1131 = vmul.f32 %v790, %v1123
        %v1132 = vmul.f32 %v790, %v1124
        %v1133 = vmul.f32 %v790, %v1125
        %v1134 = vmul.f32 %v790, %v1126
        %v1135 = vmul.f32 %v790, %v1127
        %v1136 = vmul.f32 %v790, %v1128
        %v1137 = vmul.f32 %v790, %v1129
        %v1138 = vmul.f32 %v790, %v1130
        %v1139 = vadd.f32 %v1091, %v1131
        %v1140 = vadd.f32 %v1092, %v1132
        %v1141 = vadd.f32 %v1093, %v1133
        %v1142 = vadd.f32 %v1094, %v1134
        %v1143 = vadd.f32 %v1095, %v1135
        %v1144 = vadd.f32 %v1096, %v1136
        %v1145 = vadd.f32 %v1097, %v1137
        %v1146 = vadd.f32 %v1098, %v1138
        %v1147 = vtanh.pop %v1139
        %v1148 = vtanh.pop %v1140
        %v1149 = vtanh.pop %v1141
        %v1150 = vtanh.pop %v1142
        %v1151 = vtanh.pop %v1143
        %v1152 = vtanh.pop %v1144
        %v1153 = vtanh.pop %v1145
        %v1154 = vtanh.pop %v1146
        %v1155 = vmul.f32 %v1147, 0.5
        %v1156 = vmul.f32 %v1148, 0.5
        %v1157 = vmul.f32 %v1149, 0.5
        %v1158 = vmul.f32 %v1150, 0.5
        %v1159 = vmul.f32 %v1151, 0.5
        %v1160 = vmul.f32 %v1152, 0.5
        %v1161 = vmul.f32 %v1153, 0.5
        %v1162 = vmul.f32 %v1154, 0.5
        %v1163 = vmul.f32 %v1155, 1.442695
        %v1164 = vpow.pop %v1163
        %v1165 = vmul.f32 %v1156, 1.442695
        %v1166 = vpow.pop %v1165
        %v1167 = vmul.f32 %v1157, 1.442695
        %v1168 = vpow.pop %v1167
        %v1169 = vmul.f32 %v1158, 1.442695
        %v1170 = vpow.pop %v1169
        %v1171 = vmul.f32 %v1159, 1.442695
        %v1172 = vpow.pop %v1171
        %v1173 = vmul.f32 %v1160, 1.442695
        %v1174 = vpow.pop %v1173
        %v1175 = vmul.f32 %v1161, 1.442695
        %v1176 = vpow.pop %v1175
        %v1177 = vmul.f32 %v1162, 1.442695
        %v1178 = vpow.pop %v1177
        %1179 = vmatpush.xpose.msra.mxu0 0.0
        %1180 = vmatpush.xpose.msra.mxu0 0.0
        %1181 = vmatpush.xpose.msra.mxu0 0.0
        %1182 = vmatpush.xpose.msra.mxu0 0.0
        %1183 = vmatpush.xpose.msra.mxu0 0.0
        %1184 = vmatpush.xpose.msra.mxu0 0.0
        %1185 = vmatpush.xpose.msra.mxu0 0.0
        %1186 = vmatpush.xpose.msra.mxu0 0.0
        %1187 = vmatpush.xpose.msra.mxu0 0.0
        %1188 = vmatpush.xpose.msra.mxu0 0.0
        %1189 = vmatpush.xpose.msra.mxu0 0.0
        %1190 = vmatpush.xpose.msra.mxu0 0.0
        %1191 = vmatpush.xpose.msra.mxu0 %v1176
        %1192 = vmatpush.xpose.msra.mxu0 %v1172
        %1193 = vmatpush.xpose.msra.mxu0 %v1168
        %1194 = vmatpush.xpose.msra.mxu0 %v1164
        %1195 = vmatmul.f32.gmra.mxu0 1.0
        %v1196 = vpop.f32.mrf.mxu0
        %v1197 = vadd.f32 0.0, %v1196
        %1198 = vdwg.mxu0
        %1199 = vmatpush.xpose.msra.mxu0 0.0
        %1200 = vmatpush.xpose.msra.mxu0 0.0
        %1201 = vmatpush.xpose.msra.mxu0 0.0
        %1202 = vmatpush.xpose.msra.mxu0 0.0
        %1203 = vmatpush.xpose.msra.mxu0 0.0
        %1204 = vmatpush.xpose.msra.mxu0 0.0
        %1205 = vmatpush.xpose.msra.mxu0 0.0
        %1206 = vmatpush.xpose.msra.mxu0 0.0
        %1207 = vmatpush.xpose.msra.mxu0 0.0
        %1208 = vmatpush.xpose.msra.mxu0 0.0
        %1209 = vmatpush.xpose.msra.mxu0 0.0
        %1210 = vmatpush.xpose.msra.mxu0 0.0
        %1211 = vmatpush.xpose.msra.mxu0 %v1178
        %1212 = vmatpush.xpose.msra.mxu0 %v1174
        %1213 = vmatpush.xpose.msra.mxu0 %v1170
        %1214 = vmatpush.xpose.msra.mxu0 %v1166
        %1215 = vmatmul.f32.gmra.mxu0 1.0
        %v1216 = vpop.f32.mrf.mxu0
        %v1217 = vadd.f32 %v1197, %v1216
        %1218 = vdwg.mxu0
        %v1219 = vld [vmem:[#allocation3] sm:$0xff]
        %v1220 = vrcp.pop %v1217
        %v1221 = vmul.f32 %v1217, %v1220
        %v1222 = vsub.f32 1.0, %v1221
        %v1223 = vmul.f32 %v1220, %v1222
        %v1224 = vadd.f32 %v1220, %v1223
        %vm1225 = vweird.f32 %v1217
        %vm1226 = vweird.f32 %v1220
        %vm1227 = vmor %vm1225, %vm1226
        %v1228 = vsel %vm1227, %v1220, %v1224
        %v1229 = vand.u32 2147483647, %v1217
        %vm1230 = vcmp.eq.f32.partialorder %v1229, 8.507059e+37
        %v1231 = vand.u32 %v1217, 2147483648
        %v1232 = vor.u32 1.1754944e-38, %v1231
        %v1233 = vsel %vm1230, %v1232, %v1228
        %v1234 = vmul.f32 1.0, %v1233
        %v1235 = vperm.slane %v1234, 0
        %1237 = vrot.lane.b32.xlu0 %v1235, 32
        %v1238 = vpop.permute.xlu0 %1237
        %v1240 = vmul.f32 %v1219, %v1238
        %v1241 = vld [vmem:[#allocation4] sm:$0xff]
        %v1242 = vld [vmem:[#allocation4 + $0x8] sm:$0xff]
        %1244 = vrot.lane.b32.xlu0 %v1240, 96
        %v1245 = vpop.permute.xlu0 %1244
        %v1246 = vsel %vm899, %v1245, 0
        %1248 = vmatpush.msra.mxu0 0.0
        %1249 = vmatpush.msra.mxu0 0.0
        %1250 = vmatpush.msra.mxu0 0.0
        %1251 = vmatpush.msra.mxu0 0.0
        %1252 = vmatpush.msra.mxu0 0.0
        %1253 = vmatpush.msra.mxu0 0.0
        %1254 = vmatpush.msra.mxu0 0.0
        %1255 = vmatpush.msra.mxu0 0.0
        %1256 = vmatpush.msra.mxu0 0.0
        %1257 = vmatpush.msra.mxu0 0.0
        %1258 = vmatpush.msra.mxu0 0.0
        %1259 = vmatpush.msra.mxu0 0.0
        %1260 = vmatpush.msra.mxu0 %v1176
        %1261 = vmatpush.msra.mxu0 %v1172
        %1262 = vmatpush.msra.mxu0 %v1168
        %1263 = vmatpush.msra.mxu0 %v1164
        %1264 = vmatmul.f32.gmra.mxu0 %v1246
        %v1265 = vpop.f32.mrf.mxu0
        %v1266 = vadd.f32 0.0, %v1265
        %1267 = vdwg.mxu0
        %1268 = vmatpush.msra.mxu0 0.0
        %1269 = vmatpush.msra.mxu0 0.0
        %1270 = vmatpush.msra.mxu0 0.0
        %1271 = vmatpush.msra.mxu0 0.0
        %1272 = vmatpush.msra.mxu0 0.0
        %1273 = vmatpush.msra.mxu0 0.0
        %1274 = vmatpush.msra.mxu0 0.0
        %1275 = vmatpush.msra.mxu0 0.0
        %1276 = vmatpush.msra.mxu0 0.0
        %1277 = vmatpush.msra.mxu0 0.0
        %1278 = vmatpush.msra.mxu0 0.0
        %1279 = vmatpush.msra.mxu0 0.0
        %1280 = vmatpush.msra.mxu0 %v1178
        %1281 = vmatpush.msra.mxu0 %v1174
        %1282 = vmatpush.msra.mxu0 %v1170
        %1283 = vmatpush.msra.mxu0 %v1166
        %1284 = vmatmul.f32.gmra.mxu0 %v1246
        %v1285 = vpop.f32.mrf.mxu0
        %v1286 = vadd.f32 0.0, %v1285
        %1287 = vdwg.mxu0
        %v1288 = vadd.f32 %v1241, %v1266
        %v1289 = vadd.f32 %v1242, %v1286
        %1290 = vst [vmem:[#allocation4] sm:$0xff] %v1288
        %1291 = vst [vmem:[#allocation4 + $0x8] sm:$0xff] %v1289
        %v1292 = vld [vmem:[#allocation2 + $0x40] sm:$0xff]
        %v1293 = vld [vmem:[#allocation2 + $0x48] sm:$0xff]
        %v1294 = vld [vmem:[#allocation2 + $0x50] sm:$0xff]
        %v1295 = vld [vmem:[#allocation2 + $0x58] sm:$0xff]
        %1297 = vset.pattern.permute.xlu0 0
        %1298 = vperm.xlu0 %1297, %v1292
        %v1299 = vpop.permute.xlu0 %1298
        %1302 = vset.pattern.permute.xlu0 0
        %1303 = vperm.xlu0 %1302, %v1293
        %v1304 = vpop.permute.xlu0 %1303
        %1307 = vset.pattern.permute.xlu0 0
        %1308 = vperm.xlu0 %1307, %v1294
        %v1309 = vpop.permute.xlu0 %1308
        %1312 = vset.pattern.permute.xlu0 0
        %1313 = vperm.xlu0 %1312, %v1295
        %v1314 = vpop.permute.xlu0 %1313
        %v1316 = vadd.f32 %v1299, %v618
        %v1317 = vadd.f32 %v1299, %v619
        %v1318 = vadd.f32 %v1304, %v618
        %v1319 = vadd.f32 %v1304, %v619
        %v1320 = vadd.f32 %v1309, %v618
        %v1321 = vadd.f32 %v1309, %v619
        %v1322 = vadd.f32 %v1314, %v618
        %v1323 = vadd.f32 %v1314, %v619
        %v1324 = vmax.f32 %v1316, 0.0
        %v1325 = vmax.f32 %v1317, 0.0
        %v1326 = vmax.f32 %v1318, 0.0
        %v1327 = vmax.f32 %v1319, 0.0
        %v1328 = vmax.f32 %v1320, 0.0
        %v1329 = vmax.f32 %v1321, 0.0
        %v1330 = vmax.f32 %v1322, 0.0
        %v1331 = vmax.f32 %v1323, 0.0
        %v1332 = vmul.f32 %v636, %v1324
        %v1333 = vmul.f32 %v636, %v1325
        %v1334 = vmul.f32 %v636, %v1326
        %v1335 = vmul.f32 %v636, %v1327
        %v1336 = vmul.f32 %v636, %v1328
        %v1337 = vmul.f32 %v636, %v1329
        %v1338 = vmul.f32 %v636, %v1330
        %v1339 = vmul.f32 %v636, %v1331
        %v1340 = vadd.f32 %v1332, %v645
        %v1341 = vadd.f32 %v1333, %v645
        %v1342 = vadd.f32 %v1334, %v645
        %v1343 = vadd.f32 %v1335, %v645
        %v1344 = vadd.f32 %v1336, %v645
        %v1345 = vadd.f32 %v1337, %v645
        %v1346 = vadd.f32 %v1338, %v645
        %v1347 = vadd.f32 %v1339, %v645
        %1348 = vset.pattern.permute.xlu0 1
        %1349 = vperm.xlu0 %1348, %v1292
        %v1350 = vpop.permute.xlu0 %1349
        %1352 = vset.pattern.permute.xlu0 1
        %1353 = vperm.xlu0 %1352, %v1293
        %v1354 = vpop.permute.xlu0 %1353
        %1356 = vset.pattern.permute.xlu0 1
        %1357 = vperm.xlu0 %1356, %v1294
        %v1358 = vpop.permute.xlu0 %1357
        %1360 = vset.pattern.permute.xlu0 1
        %1361 = vperm.xlu0 %1360, %v1295
        %v1362 = vpop.permute.xlu0 %1361
        %v1364 = vadd.f32 %v1350, %v670
        %v1365 = vadd.f32 %v1350, %v671
        %v1366 = vadd.f32 %v1354, %v670
        %v1367 = vadd.f32 %v1354, %v671
        %v1368 = vadd.f32 %v1358, %v670
        %v1369 = vadd.f32 %v1358, %v671
        %v1370 = vadd.f32 %v1362, %v670
        %v1371 = vadd.f32 %v1362, %v671
        %v1372 = vmax.f32 %v1364, 0.0
        %v1373 = vmax.f32 %v1365, 0.0
        %v1374 = vmax.f32 %v1366, 0.0
        %v1375 = vmax.f32 %v1367, 0.0
        %v1376 = vmax.f32 %v1368, 0.0
        %v1377 = vmax.f32 %v1369, 0.0
        %v1378 = vmax.f32 %v1370, 0.0
        %v1379 = vmax.f32 %v1371, 0.0
        %v1380 = vmul.f32 %v688, %v1372
        %v1381 = vmul.f32 %v688, %v1373
        %v1382 = vmul.f32 %v688, %v1374
        %v1383 = vmul.f32 %v688, %v1375
        %v1384 = vmul.f32 %v688, %v1376
        %v1385 = vmul.f32 %v688, %v1377
        %v1386 = vmul.f32 %v688, %v1378
        %v1387 = vmul.f32 %v688, %v1379
        %v1388 = vadd.f32 %v1340, %v1380
        %v1389 = vadd.f32 %v1341, %v1381
        %v1390 = vadd.f32 %v1342, %v1382
        %v1391 = vadd.f32 %v1343, %v1383
        %v1392 = vadd.f32 %v1344, %v1384
        %v1393 = vadd.f32 %v1345, %v1385
        %v1394 = vadd.f32 %v1346, %v1386
        %v1395 = vadd.f32 %v1347, %v1387
        %1396 = vset.pattern.permute.xlu0 2
        %1397 = vperm.xlu0 %1396, %v1292
        %v1398 = vpop.permute.xlu0 %1397
        %1400 = vset.pattern.permute.xlu0 2
        %1401 = vperm.xlu0 %1400, %v1293
        %v1402 = vpop.permute.xlu0 %1401
        %1404 = vset.pattern.permute.xlu0 2
        %1405 = vperm.xlu0 %1404, %v1294
        %v1406 = vpop.permute.xlu0 %1405
        %1408 = vset.pattern.permute.xlu0 2
        %1409 = vperm.xlu0 %1408, %v1295
        %v1410 = vpop.permute.xlu0 %1409
        %v1412 = vadd.f32 %v1398, %v721
        %v1413 = vadd.f32 %v1398, %v722
        %v1414 = vadd.f32 %v1402, %v721
        %v1415 = vadd.f32 %v1402, %v722
        %v1416 = vadd.f32 %v1406, %v721
        %v1417 = vadd.f32 %v1406, %v722
        %v1418 = vadd.f32 %v1410, %v721
        %v1419 = vadd.f32 %v1410, %v722
        %v1420 = vmax.f32 %v1412, 0.0
        %v1421 = vmax.f32 %v1413, 0.0
        %v1422 = vmax.f32 %v1414, 0.0
        %v1423 = vmax.f32 %v1415, 0.0
        %v1424 = vmax.f32 %v1416, 0.0
        %v1425 = vmax.f32 %v1417, 0.0
        %v1426 = vmax.f32 %v1418, 0.0
        %v1427 = vmax.f32 %v1419, 0.0
        %v1428 = vmul.f32 %v739, %v1420
        %v1429 = vmul.f32 %v739, %v1421
        %v1430 = vmul.f32 %v739, %v1422
        %v1431 = vmul.f32 %v739, %v1423
        %v1432 = vmul.f32 %v739, %v1424
        %v1433 = vmul.f32 %v739, %v1425
        %v1434 = vmul.f32 %v739, %v1426
        %v1435 = vmul.f32 %v739, %v1427
        %v1436 = vadd.f32 %v1388, %v1428
        %v1437 = vadd.f32 %v1389, %v1429
        %v1438 = vadd.f32 %v1390, %v1430
        %v1439 = vadd.f32 %v1391, %v1431
        %v1440 = vadd.f32 %v1392, %v1432
        %v1441 = vadd.f32 %v1393, %v1433
        %v1442 = vadd.f32 %v1394, %v1434
        %v1443 = vadd.f32 %v1395, %v1435
        %1444 = vset.pattern.permute.xlu0 3
        %1445 = vperm.xlu0 %1444, %v1292
        %v1446 = vpop.permute.xlu0 %1445
        %1448 = vset.pattern.permute.xlu0 3
        %1449 = vperm.xlu0 %1448, %v1293
        %v1450 = vpop.permute.xlu0 %1449
        %1452 = vset.pattern.permute.xlu0 3
        %1453 = vperm.xlu0 %1452, %v1294
        %v1454 = vpop.permute.xlu0 %1453
        %1456 = vset.pattern.permute.xlu0 3
        %1457 = vperm.xlu0 %1456, %v1295
        %v1458 = vpop.permute.xlu0 %1457
        %v1460 = vadd.f32 %v1446, %v772
        %v1461 = vadd.f32 %v1446, %v773
        %v1462 = vadd.f32 %v1450, %v772
        %v1463 = vadd.f32 %v1450, %v773
        %v1464 = vadd.f32 %v1454, %v772
        %v1465 = vadd.f32 %v1454, %v773
        %v1466 = vadd.f32 %v1458, %v772
        %v1467 = vadd.f32 %v1458, %v773
        %v1468 = vmax.f32 %v1460, 0.0
        %v1469 = vmax.f32 %v1461, 0.0
        %v1470 = vmax.f32 %v1462, 0.0
        %v1471 = vmax.f32 %v1463, 0.0
        %v1472 = vmax.f32 %v1464, 0.0
        %v1473 = vmax.f32 %v1465, 0.0
        %v1474 = vmax.f32 %v1466, 0.0
        %v1475 = vmax.f32 %v1467, 0.0
        %v1476 = vmul.f32 %v790, %v1468
        %v1477 = vmul.f32 %v790, %v1469
        %v1478 = vmul.f32 %v790, %v1470
        %v1479 = vmul.f32 %v790, %v1471
        %v1480 = vmul.f32 %v790, %v1472
        %v1481 = vmul.f32 %v790, %v1473
        %v1482 = vmul.f32 %v790, %v1474
        %v1483 = vmul.f32 %v790, %v1475
        %v1484 = vadd.f32 %v1436, %v1476
        %v1485 = vadd.f32 %v1437, %v1477
        %v1486 = vadd.f32 %v1438, %v1478
        %v1487 = vadd.f32 %v1439, %v1479
        %v1488 = vadd.f32 %v1440, %v1480
        %v1489 = vadd.f32 %v1441, %v1481
        %v1490 = vadd.f32 %v1442, %v1482
        %v1491 = vadd.f32 %v1443, %v1483
        %v1492 = vtanh.pop %v1484
        %v1493 = vtanh.pop %v1485
        %v1494 = vtanh.pop %v1486
        %v1495 = vtanh.pop %v1487
        %v1496 = vtanh.pop %v1488
        %v1497 = vtanh.pop %v1489
        %v1498 = vtanh.pop %v1490
        %v1499 = vtanh.pop %v1491
        %v1500 = vmul.f32 %v1492, 0.5
        %v1501 = vmul.f32 %v1493, 0.5
        %v1502 = vmul.f32 %v1494, 0.5
        %v1503 = vmul.f32 %v1495, 0.5
        %v1504 = vmul.f32 %v1496, 0.5
        %v1505 = vmul.f32 %v1497, 0.5
        %v1506 = vmul.f32 %v1498, 0.5
        %v1507 = vmul.f32 %v1499, 0.5
        %v1508 = vmul.f32 %v1500, 1.442695
        %v1509 = vpow.pop %v1508
        %v1510 = vmul.f32 %v1501, 1.442695
        %v1511 = vpow.pop %v1510
        %v1512 = vmul.f32 %v1502, 1.442695
        %v1513 = vpow.pop %v1512
        %v1514 = vmul.f32 %v1503, 1.442695
        %v1515 = vpow.pop %v1514
        %v1516 = vmul.f32 %v1504, 1.442695
        %v1517 = vpow.pop %v1516
        %v1518 = vmul.f32 %v1505, 1.442695
        %v1519 = vpow.pop %v1518
        %v1520 = vmul.f32 %v1506, 1.442695
        %v1521 = vpow.pop %v1520
        %v1522 = vmul.f32 %v1507, 1.442695
        %v1523 = vpow.pop %v1522
        %1524 = vmatpush.xpose.msra.mxu0 0.0
        %1525 = vmatpush.xpose.msra.mxu0 0.0
        %1526 = vmatpush.xpose.msra.mxu0 0.0
        %1527 = vmatpush.xpose.msra.mxu0 0.0
        %1528 = vmatpush.xpose.msra.mxu0 0.0
        %1529 = vmatpush.xpose.msra.mxu0 0.0
        %1530 = vmatpush.xpose.msra.mxu0 0.0
        %1531 = vmatpush.xpose.msra.mxu0 0.0
        %1532 = vmatpush.xpose.msra.mxu0 0.0
        %1533 = vmatpush.xpose.msra.mxu0 0.0
        %1534 = vmatpush.xpose.msra.mxu0 0.0
        %1535 = vmatpush.xpose.msra.mxu0 0.0
        %1536 = vmatpush.xpose.msra.mxu0 %v1521
        %1537 = vmatpush.xpose.msra.mxu0 %v1517
        %1538 = vmatpush.xpose.msra.mxu0 %v1513
        %1539 = vmatpush.xpose.msra.mxu0 %v1509
        %1540 = vmatmul.f32.gmra.mxu0 1.0
        %v1541 = vpop.f32.mrf.mxu0
        %v1542 = vadd.f32 0.0, %v1541
        %1543 = vdwg.mxu0
        %1544 = vmatpush.xpose.msra.mxu0 0.0
        %1545 = vmatpush.xpose.msra.mxu0 0.0
        %1546 = vmatpush.xpose.msra.mxu0 0.0
        %1547 = vmatpush.xpose.msra.mxu0 0.0
        %1548 = vmatpush.xpose.msra.mxu0 0.0
        %1549 = vmatpush.xpose.msra.mxu0 0.0
        %1550 = vmatpush.xpose.msra.mxu0 0.0
        %1551 = vmatpush.xpose.msra.mxu0 0.0
        %1552 = vmatpush.xpose.msra.mxu0 0.0
        %1553 = vmatpush.xpose.msra.mxu0 0.0
        %1554 = vmatpush.xpose.msra.mxu0 0.0
        %1555 = vmatpush.xpose.msra.mxu0 0.0
        %1556 = vmatpush.xpose.msra.mxu0 %v1523
        %1557 = vmatpush.xpose.msra.mxu0 %v1519
        %1558 = vmatpush.xpose.msra.mxu0 %v1515
        %1559 = vmatpush.xpose.msra.mxu0 %v1511
        %1560 = vmatmul.f32.gmra.mxu0 1.0
        %v1561 = vpop.f32.mrf.mxu0
        %v1562 = vadd.f32 %v1542, %v1561
        %1563 = vdwg.mxu0
        %v1564 = vld [vmem:[#allocation3] sm:$0xff]
        %v1565 = vrcp.pop %v1562
        %v1566 = vmul.f32 %v1562, %v1565
        %v1567 = vsub.f32 1.0, %v1566
        %v1568 = vmul.f32 %v1565, %v1567
        %v1569 = vadd.f32 %v1565, %v1568
        %vm1570 = vweird.f32 %v1562
        %vm1571 = vweird.f32 %v1565
        %vm1572 = vmor %vm1570, %vm1571
        %v1573 = vsel %vm1572, %v1565, %v1569
        %v1574 = vand.u32 2147483647, %v1562
        %vm1575 = vcmp.eq.f32.partialorder %v1574, 8.507059e+37
        %v1576 = vand.u32 %v1562, 2147483648
        %v1577 = vor.u32 1.1754944e-38, %v1576
        %v1578 = vsel %vm1575, %v1577, %v1573
        %v1579 = vmul.f32 1.0, %v1578
        %v1580 = vperm.slane %v1579, 0
        %1582 = vrot.lane.b32.xlu0 %v1580, 64
        %v1583 = vpop.permute.xlu0 %1582
        %v1585 = vmul.f32 %v1564, %v1583
        %v1586 = vld [vmem:[#allocation4] sm:$0xff]
        %v1587 = vld [vmem:[#allocation4 + $0x8] sm:$0xff]
        %1589 = vrot.lane.b32.xlu0 %v1585, 64
        %v1590 = vpop.permute.xlu0 %1589
        %v1591 = vsel %vm899, %v1590, 0
        %1593 = vmatpush.msra.mxu0 0.0
        %1594 = vmatpush.msra.mxu0 0.0
        %1595 = vmatpush.msra.mxu0 0.0
        %1596 = vmatpush.msra.mxu0 0.0
        %1597 = vmatpush.msra.mxu0 0.0
        %1598 = vmatpush.msra.mxu0 0.0
        %1599 = vmatpush.msra.mxu0 0.0
        %1600 = vmatpush.msra.mxu0 0.0
        %1601 = vmatpush.msra.mxu0 0.0
        %1602 = vmatpush.msra.mxu0 0.0
        %1603 = vmatpush.msra.mxu0 0.0
        %1604 = vmatpush.msra.mxu0 0.0
        %1605 = vmatpush.msra.mxu0 %v1521
        %1606 = vmatpush.msra.mxu0 %v1517
        %1607 = vmatpush.msra.mxu0 %v1513
        %1608 = vmatpush.msra.mxu0 %v1509
        %1609 = vmatmul.f32.gmra.mxu0 %v1591
        %v1610 = vpop.f32.mrf.mxu0
        %v1611 = vadd.f32 0.0, %v1610
        %1612 = vdwg.mxu0
        %1613 = vmatpush.msra.mxu0 0.0
        %1614 = vmatpush.msra.mxu0 0.0
        %1615 = vmatpush.msra.mxu0 0.0
        %1616 = vmatpush.msra.mxu0 0.0
        %1617 = vmatpush.msra.mxu0 0.0
        %1618 = vmatpush.msra.mxu0 0.0
        %1619 = vmatpush.msra.mxu0 0.0
        %1620 = vmatpush.msra.mxu0 0.0
        %1621 = vmatpush.msra.mxu0 0.0
        %1622 = vmatpush.msra.mxu0 0.0
        %1623 = vmatpush.msra.mxu0 0.0
        %1624 = vmatpush.msra.mxu0 0.0
        %1625 = vmatpush.msra.mxu0 %v1523
        %1626 = vmatpush.msra.mxu0 %v1519
        %1627 = vmatpush.msra.mxu0 %v1515
        %1628 = vmatpush.msra.mxu0 %v1511
        %1629 = vmatmul.f32.gmra.mxu0 %v1591
        %v1630 = vpop.f32.mrf.mxu0
        %v1631 = vadd.f32 0.0, %v1630
        %1632 = vdwg.mxu0
        %v1633 = vadd.f32 %v1586, %v1611
        %v1634 = vadd.f32 %v1587, %v1631
        %1635 = vst [vmem:[#allocation4] sm:$0xff] %v1633
        %1636 = vst [vmem:[#allocation4 + $0x8] sm:$0xff] %v1634
        %v1637 = vld [vmem:[#allocation2 + $0x60] sm:$0xff]
        %v1638 = vld [vmem:[#allocation2 + $0x68] sm:$0xff]
        %v1639 = vld [vmem:[#allocation2 + $0x70] sm:$0xff]
        %v1640 = vld [vmem:[#allocation2 + $0x78] sm:$0xff]
        %1642 = vset.pattern.permute.xlu0 0
        %1643 = vperm.xlu0 %1642, %v1637
        %v1644 = vpop.permute.xlu0 %1643
        %1647 = vset.pattern.permute.xlu0 0
        %1648 = vperm.xlu0 %1647, %v1638
        %v1649 = vpop.permute.xlu0 %1648
        %1652 = vset.pattern.permute.xlu0 0
        %1653 = vperm.xlu0 %1652, %v1639
        %v1654 = vpop.permute.xlu0 %1653
        %1657 = vset.pattern.permute.xlu0 0
        %1658 = vperm.xlu0 %1657, %v1640
        %v1659 = vpop.permute.xlu0 %1658
        %v1661 = vadd.f32 %v1644, %v618
        %v1662 = vadd.f32 %v1644, %v619
        %v1663 = vadd.f32 %v1649, %v618
        %v1664 = vadd.f32 %v1649, %v619
        %v1665 = vadd.f32 %v1654, %v618
        %v1666 = vadd.f32 %v1654, %v619
        %v1667 = vadd.f32 %v1659, %v618
        %v1668 = vadd.f32 %v1659, %v619
        %v1669 = vmax.f32 %v1661, 0.0
        %v1670 = vmax.f32 %v1662, 0.0
        %v1671 = vmax.f32 %v1663, 0.0
        %v1672 = vmax.f32 %v1664, 0.0
        %v1673 = vmax.f32 %v1665, 0.0
        %v1674 = vmax.f32 %v1666, 0.0
        %v1675 = vmax.f32 %v1667, 0.0
        %v1676 = vmax.f32 %v1668, 0.0
        %v1677 = vmul.f32 %v636, %v1669
        %v1678 = vmul.f32 %v636, %v1670
        %v1679 = vmul.f32 %v636, %v1671
        %v1680 = vmul.f32 %v636, %v1672
        %v1681 = vmul.f32 %v636, %v1673
        %v1682 = vmul.f32 %v636, %v1674
        %v1683 = vmul.f32 %v636, %v1675
        %v1684 = vmul.f32 %v636, %v1676
        %v1685 = vadd.f32 %v1677, %v645
        %v1686 = vadd.f32 %v1678, %v645
        %v1687 = vadd.f32 %v1679, %v645
        %v1688 = vadd.f32 %v1680, %v645
        %v1689 = vadd.f32 %v1681, %v645
        %v1690 = vadd.f32 %v1682, %v645
        %v1691 = vadd.f32 %v1683, %v645
        %v1692 = vadd.f32 %v1684, %v645
        %1693 = vset.pattern.permute.xlu0 1
        %1694 = vperm.xlu0 %1693, %v1637
        %v1695 = vpop.permute.xlu0 %1694
        %1697 = vset.pattern.permute.xlu0 1
        %1698 = vperm.xlu0 %1697, %v1638
        %v1699 = vpop.permute.xlu0 %1698
        %1701 = vset.pattern.permute.xlu0 1
        %1702 = vperm.xlu0 %1701, %v1639
        %v1703 = vpop.permute.xlu0 %1702
        %1705 = vset.pattern.permute.xlu0 1
        %1706 = vperm.xlu0 %1705, %v1640
        %v1707 = vpop.permute.xlu0 %1706
        %v1709 = vadd.f32 %v1695, %v670
        %v1710 = vadd.f32 %v1695, %v671
        %v1711 = vadd.f32 %v1699, %v670
        %v1712 = vadd.f32 %v1699, %v671
        %v1713 = vadd.f32 %v1703, %v670
        %v1714 = vadd.f32 %v1703, %v671
        %v1715 = vadd.f32 %v1707, %v670
        %v1716 = vadd.f32 %v1707, %v671
        %v1717 = vmax.f32 %v1709, 0.0
        %v1718 = vmax.f32 %v1710, 0.0
        %v1719 = vmax.f32 %v1711, 0.0
        %v1720 = vmax.f32 %v1712, 0.0
        %v1721 = vmax.f32 %v1713, 0.0
        %v1722 = vmax.f32 %v1714, 0.0
        %v1723 = vmax.f32 %v1715, 0.0
        %v1724 = vmax.f32 %v1716, 0.0
        %v1725 = vmul.f32 %v688, %v1717
        %v1726 = vmul.f32 %v688, %v1718
        %v1727 = vmul.f32 %v688, %v1719
        %v1728 = vmul.f32 %v688, %v1720
        %v1729 = vmul.f32 %v688, %v1721
        %v1730 = vmul.f32 %v688, %v1722
        %v1731 = vmul.f32 %v688, %v1723
        %v1732 = vmul.f32 %v688, %v1724
        %v1733 = vadd.f32 %v1685, %v1725
        %v1734 = vadd.f32 %v1686, %v1726
        %v1735 = vadd.f32 %v1687, %v1727
        %v1736 = vadd.f32 %v1688, %v1728
        %v1737 = vadd.f32 %v1689, %v1729
        %v1738 = vadd.f32 %v1690, %v1730
        %v1739 = vadd.f32 %v1691, %v1731
        %v1740 = vadd.f32 %v1692, %v1732
        %1741 = vset.pattern.permute.xlu0 2
        %1742 = vperm.xlu0 %1741, %v1637
        %v1743 = vpop.permute.xlu0 %1742
        %1745 = vset.pattern.permute.xlu0 2
        %1746 = vperm.xlu0 %1745, %v1638
        %v1747 = vpop.permute.xlu0 %1746
        %1749 = vset.pattern.permute.xlu0 2
        %1750 = vperm.xlu0 %1749, %v1639
        %v1751 = vpop.permute.xlu0 %1750
        %1753 = vset.pattern.permute.xlu0 2
        %1754 = vperm.xlu0 %1753, %v1640
        %v1755 = vpop.permute.xlu0 %1754
        %v1757 = vadd.f32 %v1743, %v721
        %v1758 = vadd.f32 %v1743, %v722
        %v1759 = vadd.f32 %v1747, %v721
        %v1760 = vadd.f32 %v1747, %v722
        %v1761 = vadd.f32 %v1751, %v721
        %v1762 = vadd.f32 %v1751, %v722
        %v1763 = vadd.f32 %v1755, %v721
        %v1764 = vadd.f32 %v1755, %v722
        %v1765 = vmax.f32 %v1757, 0.0
        %v1766 = vmax.f32 %v1758, 0.0
        %v1767 = vmax.f32 %v1759, 0.0
        %v1768 = vmax.f32 %v1760, 0.0
        %v1769 = vmax.f32 %v1761, 0.0
        %v1770 = vmax.f32 %v1762, 0.0
        %v1771 = vmax.f32 %v1763, 0.0
        %v1772 = vmax.f32 %v1764, 0.0
        %v1773 = vmul.f32 %v739, %v1765
        %v1774 = vmul.f32 %v739, %v1766
        %v1775 = vmul.f32 %v739, %v1767
        %v1776 = vmul.f32 %v739, %v1768
        %v1777 = vmul.f32 %v739, %v1769
        %v1778 = vmul.f32 %v739, %v1770
        %v1779 = vmul.f32 %v739, %v1771
        %v1780 = vmul.f32 %v739, %v1772
        %v1781 = vadd.f32 %v1733, %v1773
        %v1782 = vadd.f32 %v1734, %v1774
        %v1783 = vadd.f32 %v1735, %v1775
        %v1784 = vadd.f32 %v1736, %v1776
        %v1785 = vadd.f32 %v1737, %v1777
        %v1786 = vadd.f32 %v1738, %v1778
        %v1787 = vadd.f32 %v1739, %v1779
        %v1788 = vadd.f32 %v1740, %v1780
        %1789 = vset.pattern.permute.xlu0 3
        %1790 = vperm.xlu0 %1789, %v1637
        %v1791 = vpop.permute.xlu0 %1790
        %1793 = vset.pattern.permute.xlu0 3
        %1794 = vperm.xlu0 %1793, %v1638
        %v1795 = vpop.permute.xlu0 %1794
        %1797 = vset.pattern.permute.xlu0 3
        %1798 = vperm.xlu0 %1797, %v1639
        %v1799 = vpop.permute.xlu0 %1798
        %1801 = vset.pattern.permute.xlu0 3
        %1802 = vperm.xlu0 %1801, %v1640
        %v1803 = vpop.permute.xlu0 %1802
        %v1805 = vadd.f32 %v1791, %v772
        %v1806 = vadd.f32 %v1791, %v773
        %v1807 = vadd.f32 %v1795, %v772
        %v1808 = vadd.f32 %v1795, %v773
        %v1809 = vadd.f32 %v1799, %v772
        %v1810 = vadd.f32 %v1799, %v773
        %v1811 = vadd.f32 %v1803, %v772
        %v1812 = vadd.f32 %v1803, %v773
        %v1813 = vmax.f32 %v1805, 0.0
        %v1814 = vmax.f32 %v1806, 0.0
        %v1815 = vmax.f32 %v1807, 0.0
        %v1816 = vmax.f32 %v1808, 0.0
        %v1817 = vmax.f32 %v1809, 0.0
        %v1818 = vmax.f32 %v1810, 0.0
        %v1819 = vmax.f32 %v1811, 0.0
        %v1820 = vmax.f32 %v1812, 0.0
        %v1821 = vmul.f32 %v790, %v1813
        %v1822 = vmul.f32 %v790, %v1814
        %v1823 = vmul.f32 %v790, %v1815
        %v1824 = vmul.f32 %v790, %v1816
        %v1825 = vmul.f32 %v790, %v1817
        %v1826 = vmul.f32 %v790, %v1818
        %v1827 = vmul.f32 %v790, %v1819
        %v1828 = vmul.f32 %v790, %v1820
        %v1829 = vadd.f32 %v1781, %v1821
        %v1830 = vadd.f32 %v1782, %v1822
        %v1831 = vadd.f32 %v1783, %v1823
        %v1832 = vadd.f32 %v1784, %v1824
        %v1833 = vadd.f32 %v1785, %v1825
        %v1834 = vadd.f32 %v1786, %v1826
        %v1835 = vadd.f32 %v1787, %v1827
        %v1836 = vadd.f32 %v1788, %v1828
        %v1837 = vtanh.pop %v1829
        %v1838 = vtanh.pop %v1830
        %v1839 = vtanh.pop %v1831
        %v1840 = vtanh.pop %v1832
        %v1841 = vtanh.pop %v1833
        %v1842 = vtanh.pop %v1834
        %v1843 = vtanh.pop %v1835
        %v1844 = vtanh.pop %v1836
        %v1845 = vmul.f32 %v1837, 0.5
        %v1846 = vmul.f32 %v1838, 0.5
        %v1847 = vmul.f32 %v1839, 0.5
        %v1848 = vmul.f32 %v1840, 0.5
        %v1849 = vmul.f32 %v1841, 0.5
        %v1850 = vmul.f32 %v1842, 0.5
        %v1851 = vmul.f32 %v1843, 0.5
        %v1852 = vmul.f32 %v1844, 0.5
        %v1853 = vmul.f32 %v1845, 1.442695
        %v1854 = vpow.pop %v1853
        %v1855 = vmul.f32 %v1846, 1.442695
        %v1856 = vpow.pop %v1855
        %v1857 = vmul.f32 %v1847, 1.442695
        %v1858 = vpow.pop %v1857
        %v1859 = vmul.f32 %v1848, 1.442695
        %v1860 = vpow.pop %v1859
        %v1861 = vmul.f32 %v1849, 1.442695
        %v1862 = vpow.pop %v1861
        %v1863 = vmul.f32 %v1850, 1.442695
        %v1864 = vpow.pop %v1863
        %v1865 = vmul.f32 %v1851, 1.442695
        %v1866 = vpow.pop %v1865
        %v1867 = vmul.f32 %v1852, 1.442695
        %v1868 = vpow.pop %v1867
        %1869 = vmatpush.xpose.msra.mxu0 0.0
        %1870 = vmatpush.xpose.msra.mxu0 0.0
        %1871 = vmatpush.xpose.msra.mxu0 0.0
        %1872 = vmatpush.xpose.msra.mxu0 0.0
        %1873 = vmatpush.xpose.msra.mxu0 0.0
        %1874 = vmatpush.xpose.msra.mxu0 0.0
        %1875 = vmatpush.xpose.msra.mxu0 0.0
        %1876 = vmatpush.xpose.msra.mxu0 0.0
        %1877 = vmatpush.xpose.msra.mxu0 0.0
        %1878 = vmatpush.xpose.msra.mxu0 0.0
        %1879 = vmatpush.xpose.msra.mxu0 0.0
        %1880 = vmatpush.xpose.msra.mxu0 0.0
        %1881 = vmatpush.xpose.msra.mxu0 %v1866
        %1882 = vmatpush.xpose.msra.mxu0 %v1862
        %1883 = vmatpush.xpose.msra.mxu0 %v1858
        %1884 = vmatpush.xpose.msra.mxu0 %v1854
        %1885 = vmatmul.f32.gmra.mxu0 1.0
        %v1886 = vpop.f32.mrf.mxu0
        %v1887 = vadd.f32 0.0, %v1886
        %1888 = vdwg.mxu0
        %1889 = vmatpush.xpose.msra.mxu0 0.0
        %1890 = vmatpush.xpose.msra.mxu0 0.0
        %1891 = vmatpush.xpose.msra.mxu0 0.0
        %1892 = vmatpush.xpose.msra.mxu0 0.0
        %1893 = vmatpush.xpose.msra.mxu0 0.0
        %1894 = vmatpush.xpose.msra.mxu0 0.0
        %1895 = vmatpush.xpose.msra.mxu0 0.0
        %1896 = vmatpush.xpose.msra.mxu0 0.0
        %1897 = vmatpush.xpose.msra.mxu0 0.0
        %1898 = vmatpush.xpose.msra.mxu0 0.0
        %1899 = vmatpush.xpose.msra.mxu0 0.0
        %1900 = vmatpush.xpose.msra.mxu0 0.0
        %1901 = vmatpush.xpose.msra.mxu0 %v1868
        %1902 = vmatpush.xpose.msra.mxu0 %v1864
        %1903 = vmatpush.xpose.msra.mxu0 %v1860
        %1904 = vmatpush.xpose.msra.mxu0 %v1856
        %1905 = vmatmul.f32.gmra.mxu0 1.0
        %v1906 = vpop.f32.mrf.mxu0
        %v1907 = vadd.f32 %v1887, %v1906
        %1908 = vdwg.mxu0
        %v1909 = vld [vmem:[#allocation3] sm:$0xff]
        %v1910 = vrcp.pop %v1907
        %v1911 = vmul.f32 %v1907, %v1910
        %v1912 = vsub.f32 1.0, %v1911
        %v1913 = vmul.f32 %v1910, %v1912
        %v1914 = vadd.f32 %v1910, %v1913
        %vm1915 = vweird.f32 %v1907
        %vm1916 = vweird.f32 %v1910
        %vm1917 = vmor %vm1915, %vm1916
        %v1918 = vsel %vm1917, %v1910, %v1914
        %v1919 = vand.u32 2147483647, %v1907
        %vm1920 = vcmp.eq.f32.partialorder %v1919, 8.507059e+37
        %v1921 = vand.u32 %v1907, 2147483648
        %v1922 = vor.u32 1.1754944e-38, %v1921
        %v1923 = vsel %vm1920, %v1922, %v1918
        %v1924 = vmul.f32 1.0, %v1923
        %v1925 = vperm.slane %v1924, 0
        %1927 = vrot.lane.b32.xlu0 %v1925, 96
        %v1928 = vpop.permute.xlu0 %1927
        %v1930 = vmul.f32 %v1909, %v1928
        %v1931 = vld [vmem:[#allocation4] sm:$0xff]
        %v1932 = vld [vmem:[#allocation4 + $0x8] sm:$0xff]
        %1934 = vrot.lane.b32.xlu0 %v1930, 32
        %v1935 = vpop.permute.xlu0 %1934
        %v1936 = vsel %vm899, %v1935, 0
        %1938 = vmatpush.msra.mxu0 0.0
        %1939 = vmatpush.msra.mxu0 0.0
        %1940 = vmatpush.msra.mxu0 0.0
        %1941 = vmatpush.msra.mxu0 0.0
        %1942 = vmatpush.msra.mxu0 0.0
        %1943 = vmatpush.msra.mxu0 0.0
        %1944 = vmatpush.msra.mxu0 0.0
        %1945 = vmatpush.msra.mxu0 0.0
        %1946 = vmatpush.msra.mxu0 0.0
        %1947 = vmatpush.msra.mxu0 0.0
        %1948 = vmatpush.msra.mxu0 0.0
        %1949 = vmatpush.msra.mxu0 0.0
        %1950 = vmatpush.msra.mxu0 %v1866
        %1951 = vmatpush.msra.mxu0 %v1862
        %1952 = vmatpush.msra.mxu0 %v1858
        %1953 = vmatpush.msra.mxu0 %v1854
        %1954 = vmatmul.f32.gmra.mxu0 %v1936
        %v1955 = vpop.f32.mrf.mxu0
        %v1956 = vadd.f32 0.0, %v1955
        %1957 = vdwg.mxu0
        %1958 = vmatpush.msra.mxu0 0.0
        %1959 = vmatpush.msra.mxu0 0.0
        %1960 = vmatpush.msra.mxu0 0.0
        %1961 = vmatpush.msra.mxu0 0.0
        %1962 = vmatpush.msra.mxu0 0.0
        %1963 = vmatpush.msra.mxu0 0.0
        %1964 = vmatpush.msra.mxu0 0.0
        %1965 = vmatpush.msra.mxu0 0.0
        %1966 = vmatpush.msra.mxu0 0.0
        %1967 = vmatpush.msra.mxu0 0.0
        %1968 = vmatpush.msra.mxu0 0.0
        %1969 = vmatpush.msra.mxu0 0.0
        %1970 = vmatpush.msra.mxu0 %v1868
        %1971 = vmatpush.msra.mxu0 %v1864
        %1972 = vmatpush.msra.mxu0 %v1860
        %1973 = vmatpush.msra.mxu0 %v1856
        %1974 = vmatmul.f32.gmra.mxu0 %v1936
        %v1975 = vpop.f32.mrf.mxu0
        %v1976 = vadd.f32 0.0, %v1975
        %1977 = vdwg.mxu0
        %v1978 = vadd.f32 %v1931, %v1956
        %v1979 = vadd.f32 %v1932, %v1976
        %1980 = vst [vmem:[#allocation4] sm:$0xff] %v1978
        %1981 = vst [vmem:[#allocation4 + $0x8] sm:$0xff] %v1979
        %v1982 = vld [vmem:[#allocation2 + $0x80] sm:$0xff]
        %v1983 = vld [vmem:[#allocation2 + $0x88] sm:$0xff]
        %v1984 = vld [vmem:[#allocation2 + $0x90] sm:$0xff]
        %v1985 = vld [vmem:[#allocation2 + $0x98] sm:$0xff]
        %1987 = vset.pattern.permute.xlu0 0
        %1988 = vperm.xlu0 %1987, %v1982
        %v1989 = vpop.permute.xlu0 %1988
        %1992 = vset.pattern.permute.xlu0 0
        %1993 = vperm.xlu0 %1992, %v1983
        %v1994 = vpop.permute.xlu0 %1993
        %1997 = vset.pattern.permute.xlu0 0
        %1998 = vperm.xlu0 %1997, %v1984
        %v1999 = vpop.permute.xlu0 %1998
        %2002 = vset.pattern.permute.xlu0 0
        %2003 = vperm.xlu0 %2002, %v1985
        %v2004 = vpop.permute.xlu0 %2003
        %v2006 = vadd.f32 %v1989, %v618
        %v2007 = vadd.f32 %v1989, %v619
        %v2008 = vadd.f32 %v1994, %v618
        %v2009 = vadd.f32 %v1994, %v619
        %v2010 = vadd.f32 %v1999, %v618
        %v2011 = vadd.f32 %v1999, %v619
        %v2012 = vadd.f32 %v2004, %v618
        %v2013 = vadd.f32 %v2004, %v619
        %v2014 = vmax.f32 %v2006, 0.0
        %v2015 = vmax.f32 %v2007, 0.0
        %v2016 = vmax.f32 %v2008, 0.0
        %v2017 = vmax.f32 %v2009, 0.0
        %v2018 = vmax.f32 %v2010, 0.0
        %v2019 = vmax.f32 %v2011, 0.0
        %v2020 = vmax.f32 %v2012, 0.0
        %v2021 = vmax.f32 %v2013, 0.0
        %v2022 = vmul.f32 %v636, %v2014
        %v2023 = vmul.f32 %v636, %v2015
        %v2024 = vmul.f32 %v636, %v2016
        %v2025 = vmul.f32 %v636, %v2017
        %v2026 = vmul.f32 %v636, %v2018
        %v2027 = vmul.f32 %v636, %v2019
        %v2028 = vmul.f32 %v636, %v2020
        %v2029 = vmul.f32 %v636, %v2021
        %v2030 = vadd.f32 %v2022, %v645
        %v2031 = vadd.f32 %v2023, %v645
        %v2032 = vadd.f32 %v2024, %v645
        %v2033 = vadd.f32 %v2025, %v645
        %v2034 = vadd.f32 %v2026, %v645
        %v2035 = vadd.f32 %v2027, %v645
        %v2036 = vadd.f32 %v2028, %v645
        %v2037 = vadd.f32 %v2029, %v645
        %2038 = vset.pattern.permute.xlu0 1
        %2039 = vperm.xlu0 %2038, %v1982
        %v2040 = vpop.permute.xlu0 %2039
        %2042 = vset.pattern.permute.xlu0 1
        %2043 = vperm.xlu0 %2042, %v1983
        %v2044 = vpop.permute.xlu0 %2043
        %2046 = vset.pattern.permute.xlu0 1
        %2047 = vperm.xlu0 %2046, %v1984
        %v2048 = vpop.permute.xlu0 %2047
        %2050 = vset.pattern.permute.xlu0 1
        %2051 = vperm.xlu0 %2050, %v1985
        %v2052 = vpop.permute.xlu0 %2051
        %v2054 = vadd.f32 %v2040, %v670
        %v2055 = vadd.f32 %v2040, %v671
        %v2056 = vadd.f32 %v2044, %v670
        %v2057 = vadd.f32 %v2044, %v671
        %v2058 = vadd.f32 %v2048, %v670
        %v2059 = vadd.f32 %v2048, %v671
        %v2060 = vadd.f32 %v2052, %v670
        %v2061 = vadd.f32 %v2052, %v671
        %v2062 = vmax.f32 %v2054, 0.0
        %v2063 = vmax.f32 %v2055, 0.0
        %v2064 = vmax.f32 %v2056, 0.0
        %v2065 = vmax.f32 %v2057, 0.0
        %v2066 = vmax.f32 %v2058, 0.0
        %v2067 = vmax.f32 %v2059, 0.0
        %v2068 = vmax.f32 %v2060, 0.0
        %v2069 = vmax.f32 %v2061, 0.0
        %v2070 = vmul.f32 %v688, %v2062
        %v2071 = vmul.f32 %v688, %v2063
        %v2072 = vmul.f32 %v688, %v2064
        %v2073 = vmul.f32 %v688, %v2065
        %v2074 = vmul.f32 %v688, %v2066
        %v2075 = vmul.f32 %v688, %v2067
        %v2076 = vmul.f32 %v688, %v2068
        %v2077 = vmul.f32 %v688, %v2069
        %v2078 = vadd.f32 %v2030, %v2070
        %v2079 = vadd.f32 %v2031, %v2071
        %v2080 = vadd.f32 %v2032, %v2072
        %v2081 = vadd.f32 %v2033, %v2073
        %v2082 = vadd.f32 %v2034, %v2074
        %v2083 = vadd.f32 %v2035, %v2075
        %v2084 = vadd.f32 %v2036, %v2076
        %v2085 = vadd.f32 %v2037, %v2077
        %2086 = vset.pattern.permute.xlu0 2
        %2087 = vperm.xlu0 %2086, %v1982
        %v2088 = vpop.permute.xlu0 %2087
        %2090 = vset.pattern.permute.xlu0 2
        %2091 = vperm.xlu0 %2090, %v1983
        %v2092 = vpop.permute.xlu0 %2091
        %2094 = vset.pattern.permute.xlu0 2
        %2095 = vperm.xlu0 %2094, %v1984
        %v2096 = vpop.permute.xlu0 %2095
        %2098 = vset.pattern.permute.xlu0 2
        %2099 = vperm.xlu0 %2098, %v1985
        %v2100 = vpop.permute.xlu0 %2099
        %v2102 = vadd.f32 %v2088, %v721
        %v2103 = vadd.f32 %v2088, %v722
        %v2104 = vadd.f32 %v2092, %v721
        %v2105 = vadd.f32 %v2092, %v722
        %v2106 = vadd.f32 %v2096, %v721
        %v2107 = vadd.f32 %v2096, %v722
        %v2108 = vadd.f32 %v2100, %v721
        %v2109 = vadd.f32 %v2100, %v722
        %v2110 = vmax.f32 %v2102, 0.0
        %v2111 = vmax.f32 %v2103, 0.0
        %v2112 = vmax.f32 %v2104, 0.0
        %v2113 = vmax.f32 %v2105, 0.0
        %v2114 = vmax.f32 %v2106, 0.0
        %v2115 = vmax.f32 %v2107, 0.0
        %v2116 = vmax.f32 %v2108, 0.0
        %v2117 = vmax.f32 %v2109, 0.0
        %v2118 = vmul.f32 %v739, %v2110
        %v2119 = vmul.f32 %v739, %v2111
        %v2120 = vmul.f32 %v739, %v2112
        %v2121 = vmul.f32 %v739, %v2113
        %v2122 = vmul.f32 %v739, %v2114
        %v2123 = vmul.f32 %v739, %v2115
        %v2124 = vmul.f32 %v739, %v2116
        %v2125 = vmul.f32 %v739, %v2117
        %v2126 = vadd.f32 %v2078, %v2118
        %v2127 = vadd.f32 %v2079, %v2119
        %v2128 = vadd.f32 %v2080, %v2120
        %v2129 = vadd.f32 %v2081, %v2121
        %v2130 = vadd.f32 %v2082, %v2122
        %v2131 = vadd.f32 %v2083, %v2123
        %v2132 = vadd.f32 %v2084, %v2124
        %v2133 = vadd.f32 %v2085, %v2125
        %2134 = vset.pattern.permute.xlu0 3
        %2135 = vperm.xlu0 %2134, %v1982
        %v2136 = vpop.permute.xlu0 %2135
        %2138 = vset.pattern.permute.xlu0 3
        %2139 = vperm.xlu0 %2138, %v1983
        %v2140 = vpop.permute.xlu0 %2139
        %2142 = vset.pattern.permute.xlu0 3
        %2143 = vperm.xlu0 %2142, %v1984
        %v2144 = vpop.permute.xlu0 %2143
        %2146 = vset.pattern.permute.xlu0 3
        %2147 = vperm.xlu0 %2146, %v1985
        %v2148 = vpop.permute.xlu0 %2147
        %v2150 = vadd.f32 %v2136, %v772
        %v2151 = vadd.f32 %v2136, %v773
        %v2152 = vadd.f32 %v2140, %v772
        %v2153 = vadd.f32 %v2140, %v773
        %v2154 = vadd.f32 %v2144, %v772
        %v2155 = vadd.f32 %v2144, %v773
        %v2156 = vadd.f32 %v2148, %v772
        %v2157 = vadd.f32 %v2148, %v773
        %v2158 = vmax.f32 %v2150, 0.0
        %v2159 = vmax.f32 %v2151, 0.0
        %v2160 = vmax.f32 %v2152, 0.0
        %v2161 = vmax.f32 %v2153, 0.0
        %v2162 = vmax.f32 %v2154, 0.0
        %v2163 = vmax.f32 %v2155, 0.0
        %v2164 = vmax.f32 %v2156, 0.0
        %v2165 = vmax.f32 %v2157, 0.0
        %v2166 = vmul.f32 %v790, %v2158
        %v2167 = vmul.f32 %v790, %v2159
        %v2168 = vmul.f32 %v790, %v2160
        %v2169 = vmul.f32 %v790, %v2161
        %v2170 = vmul.f32 %v790, %v2162
        %v2171 = vmul.f32 %v790, %v2163
        %v2172 = vmul.f32 %v790, %v2164
        %v2173 = vmul.f32 %v790, %v2165
        %v2174 = vadd.f32 %v2126, %v2166
        %v2175 = vadd.f32 %v2127, %v2167
        %v2176 = vadd.f32 %v2128, %v2168
        %v2177 = vadd.f32 %v2129, %v2169
        %v2178 = vadd.f32 %v2130, %v2170
        %v2179 = vadd.f32 %v2131, %v2171
        %v2180 = vadd.f32 %v2132, %v2172
        %v2181 = vadd.f32 %v2133, %v2173
        %v2182 = vtanh.pop %v2174
        %v2183 = vtanh.pop %v2175
        %v2184 = vtanh.pop %v2176
        %v2185 = vtanh.pop %v2177
        %v2186 = vtanh.pop %v2178
        %v2187 = vtanh.pop %v2179
        %v2188 = vtanh.pop %v2180
        %v2189 = vtanh.pop %v2181
        %v2190 = vmul.f32 %v2182, 0.5
        %v2191 = vmul.f32 %v2183, 0.5
        %v2192 = vmul.f32 %v2184, 0.5
        %v2193 = vmul.f32 %v2185, 0.5
        %v2194 = vmul.f32 %v2186, 0.5
        %v2195 = vmul.f32 %v2187, 0.5
        %v2196 = vmul.f32 %v2188, 0.5
        %v2197 = vmul.f32 %v2189, 0.5
        %v2198 = vmul.f32 %v2190, 1.442695
        %v2199 = vpow.pop %v2198
        %v2200 = vmul.f32 %v2191, 1.442695
        %v2201 = vpow.pop %v2200
        %v2202 = vmul.f32 %v2192, 1.442695
        %v2203 = vpow.pop %v2202
        %v2204 = vmul.f32 %v2193, 1.442695
        %v2205 = vpow.pop %v2204
        %v2206 = vmul.f32 %v2194, 1.442695
        %v2207 = vpow.pop %v2206
        %v2208 = vmul.f32 %v2195, 1.442695
        %v2209 = vpow.pop %v2208
        %v2210 = vmul.f32 %v2196, 1.442695
        %v2211 = vpow.pop %v2210
        %v2212 = vmul.f32 %v2197, 1.442695
        %v2213 = vpow.pop %v2212
        %2214 = vmatpush.xpose.msra.mxu0 0.0
        %2215 = vmatpush.xpose.msra.mxu0 0.0
        %2216 = vmatpush.xpose.msra.mxu0 0.0
        %2217 = vmatpush.xpose.msra.mxu0 0.0
        %2218 = vmatpush.xpose.msra.mxu0 0.0
        %2219 = vmatpush.xpose.msra.mxu0 0.0
        %2220 = vmatpush.xpose.msra.mxu0 0.0
        %2221 = vmatpush.xpose.msra.mxu0 0.0
        %2222 = vmatpush.xpose.msra.mxu0 0.0
        %2223 = vmatpush.xpose.msra.mxu0 0.0
        %2224 = vmatpush.xpose.msra.mxu0 0.0
        %2225 = vmatpush.xpose.msra.mxu0 0.0
        %2226 = vmatpush.xpose.msra.mxu0 %v2211
        %2227 = vmatpush.xpose.msra.mxu0 %v2207
        %2228 = vmatpush.xpose.msra.mxu0 %v2203
        %2229 = vmatpush.xpose.msra.mxu0 %v2199
        %2230 = vmatmul.f32.gmra.mxu0 1.0
        %v2231 = vpop.f32.mrf.mxu0
        %v2232 = vadd.f32 0.0, %v2231
        %2233 = vdwg.mxu0
        %2234 = vmatpush.xpose.msra.mxu0 0.0
        %2235 = vmatpush.xpose.msra.mxu0 0.0
        %2236 = vmatpush.xpose.msra.mxu0 0.0
        %2237 = vmatpush.xpose.msra.mxu0 0.0
        %2238 = vmatpush.xpose.msra.mxu0 0.0
        %2239 = vmatpush.xpose.msra.mxu0 0.0
        %2240 = vmatpush.xpose.msra.mxu0 0.0
        %2241 = vmatpush.xpose.msra.mxu0 0.0
        %2242 = vmatpush.xpose.msra.mxu0 0.0
        %2243 = vmatpush.xpose.msra.mxu0 0.0
        %2244 = vmatpush.xpose.msra.mxu0 0.0
        %2245 = vmatpush.xpose.msra.mxu0 0.0
        %2246 = vmatpush.xpose.msra.mxu0 %v2213
        %2247 = vmatpush.xpose.msra.mxu0 %v2209
        %2248 = vmatpush.xpose.msra.mxu0 %v2205
        %2249 = vmatpush.xpose.msra.mxu0 %v2201
        %2250 = vmatmul.f32.gmra.mxu0 1.0
        %v2251 = vpop.f32.mrf.mxu0
        %v2252 = vadd.f32 %v2232, %v2251
        %2253 = vdwg.mxu0
        %v2254 = vld [vmem:[#allocation3 + $0x8] sm:$0xff]
        %v2255 = vrcp.pop %v2252
        %v2256 = vmul.f32 %v2252, %v2255
        %v2257 = vsub.f32 1.0, %v2256
        %v2258 = vmul.f32 %v2255, %v2257
        %v2259 = vadd.f32 %v2255, %v2258
        %vm2260 = vweird.f32 %v2252
        %vm2261 = vweird.f32 %v2255
        %vm2262 = vmor %vm2260, %vm2261
        %v2263 = vsel %vm2262, %v2255, %v2259
        %v2264 = vand.u32 2147483647, %v2252
        %vm2265 = vcmp.eq.f32.partialorder %v2264, 8.507059e+37
        %v2266 = vand.u32 %v2252, 2147483648
        %v2267 = vor.u32 1.1754944e-38, %v2266
        %v2268 = vsel %vm2265, %v2267, %v2263
        %v2269 = vmul.f32 1.0, %v2268
        %v2270 = vperm.slane %v2269, 0
        %v2271 = vmul.f32 %v2254, %v2270
        %v2272 = vld [vmem:[#allocation4] sm:$0xff]
        %v2273 = vld [vmem:[#allocation4 + $0x8] sm:$0xff]
        %v2275 = vsel %vm899, %v2271, 0
        %2277 = vmatpush.msra.mxu0 0.0
        %2278 = vmatpush.msra.mxu0 0.0
        %2279 = vmatpush.msra.mxu0 0.0
        %2280 = vmatpush.msra.mxu0 0.0
        %2281 = vmatpush.msra.mxu0 0.0
        %2282 = vmatpush.msra.mxu0 0.0
        %2283 = vmatpush.msra.mxu0 0.0
        %2284 = vmatpush.msra.mxu0 0.0
        %2285 = vmatpush.msra.mxu0 0.0
        %2286 = vmatpush.msra.mxu0 0.0
        %2287 = vmatpush.msra.mxu0 0.0
        %2288 = vmatpush.msra.mxu0 0.0
        %2289 = vmatpush.msra.mxu0 %v2211
        %2290 = vmatpush.msra.mxu0 %v2207
        %2291 = vmatpush.msra.mxu0 %v2203
        %2292 = vmatpush.msra.mxu0 %v2199
        %2293 = vmatmul.f32.gmra.mxu0 %v2275
        %v2294 = vpop.f32.mrf.mxu0
        %v2295 = vadd.f32 0.0, %v2294
        %2296 = vdwg.mxu0
        %2297 = vmatpush.msra.mxu0 0.0
        %2298 = vmatpush.msra.mxu0 0.0
        %2299 = vmatpush.msra.mxu0 0.0
        %2300 = vmatpush.msra.mxu0 0.0
        %2301 = vmatpush.msra.mxu0 0.0
        %2302 = vmatpush.msra.mxu0 0.0
        %2303 = vmatpush.msra.mxu0 0.0
        %2304 = vmatpush.msra.mxu0 0.0
        %2305 = vmatpush.msra.mxu0 0.0
        %2306 = vmatpush.msra.mxu0 0.0
        %2307 = vmatpush.msra.mxu0 0.0
        %2308 = vmatpush.msra.mxu0 0.0
        %2309 = vmatpush.msra.mxu0 %v2213
        %2310 = vmatpush.msra.mxu0 %v2209
        %2311 = vmatpush.msra.mxu0 %v2205
        %2312 = vmatpush.msra.mxu0 %v2201
        %2313 = vmatmul.f32.gmra.mxu0 %v2275
        %v2314 = vpop.f32.mrf.mxu0
        %v2315 = vadd.f32 0.0, %v2314
        %2316 = vdwg.mxu0
        %v2317 = vadd.f32 %v2272, %v2295
        %v2318 = vadd.f32 %v2273, %v2315
        %2319 = vst [vmem:[#allocation4] sm:$0xff] %v2317
        %2320 = vst [vmem:[#allocation4 + $0x8] sm:$0xff] %v2318
        %v2321 = vld [vmem:[#allocation2 + $0xa0] sm:$0xff]
        %v2322 = vld [vmem:[#allocation2 + $0xa8] sm:$0xff]
        %v2323 = vld [vmem:[#allocation2 + $0xb0] sm:$0xff]
        %v2324 = vld [vmem:[#allocation2 + $0xb8] sm:$0xff]
        %2326 = vset.pattern.permute.xlu0 0
        %2327 = vperm.xlu0 %2326, %v2321
        %v2328 = vpop.permute.xlu0 %2327
        %2331 = vset.pattern.permute.xlu0 0
        %2332 = vperm.xlu0 %2331, %v2322
        %v2333 = vpop.permute.xlu0 %2332
        %2336 = vset.pattern.permute.xlu0 0
        %2337 = vperm.xlu0 %2336, %v2323
        %v2338 = vpop.permute.xlu0 %2337
        %2341 = vset.pattern.permute.xlu0 0
        %2342 = vperm.xlu0 %2341, %v2324
        %v2343 = vpop.permute.xlu0 %2342
        %v2345 = vadd.f32 %v2328, %v618
        %v2346 = vadd.f32 %v2328, %v619
        %v2347 = vadd.f32 %v2333, %v618
        %v2348 = vadd.f32 %v2333, %v619
        %v2349 = vadd.f32 %v2338, %v618
        %v2350 = vadd.f32 %v2338, %v619
        %v2351 = vadd.f32 %v2343, %v618
        %v2352 = vadd.f32 %v2343, %v619
        %v2353 = vmax.f32 %v2345, 0.0
        %v2354 = vmax.f32 %v2346, 0.0
        %v2355 = vmax.f32 %v2347, 0.0
        %v2356 = vmax.f32 %v2348, 0.0
        %v2357 = vmax.f32 %v2349, 0.0
        %v2358 = vmax.f32 %v2350, 0.0
        %v2359 = vmax.f32 %v2351, 0.0
        %v2360 = vmax.f32 %v2352, 0.0
        %v2361 = vmul.f32 %v636, %v2353
        %v2362 = vmul.f32 %v636, %v2354
        %v2363 = vmul.f32 %v636, %v2355
        %v2364 = vmul.f32 %v636, %v2356
        %v2365 = vmul.f32 %v636, %v2357
        %v2366 = vmul.f32 %v636, %v2358
        %v2367 = vmul.f32 %v636, %v2359
        %v2368 = vmul.f32 %v636, %v2360
        %v2369 = vadd.f32 %v2361, %v645
        %v2370 = vadd.f32 %v2362, %v645
        %v2371 = vadd.f32 %v2363, %v645
        %v2372 = vadd.f32 %v2364, %v645
        %v2373 = vadd.f32 %v2365, %v645
        %v2374 = vadd.f32 %v2366, %v645
        %v2375 = vadd.f32 %v2367, %v645
        %v2376 = vadd.f32 %v2368, %v645
        %2377 = vset.pattern.permute.xlu0 1
        %2378 = vperm.xlu0 %2377, %v2321
        %v2379 = vpop.permute.xlu0 %2378
        %2381 = vset.pattern.permute.xlu0 1
        %2382 = vperm.xlu0 %2381, %v2322
        %v2383 = vpop.permute.xlu0 %2382
        %2385 = vset.pattern.permute.xlu0 1
        %2386 = vperm.xlu0 %2385, %v2323
        %v2387 = vpop.permute.xlu0 %2386
        %2389 = vset.pattern.permute.xlu0 1
        %2390 = vperm.xlu0 %2389, %v2324
        %v2391 = vpop.permute.xlu0 %2390
        %v2393 = vadd.f32 %v2379, %v670
        %v2394 = vadd.f32 %v2379, %v671
        %v2395 = vadd.f32 %v2383, %v670
        %v2396 = vadd.f32 %v2383, %v671
        %v2397 = vadd.f32 %v2387, %v670
        %v2398 = vadd.f32 %v2387, %v671
        %v2399 = vadd.f32 %v2391, %v670
        %v2400 = vadd.f32 %v2391, %v671
        %v2401 = vmax.f32 %v2393, 0.0
        %v2402 = vmax.f32 %v2394, 0.0
        %v2403 = vmax.f32 %v2395, 0.0
        %v2404 = vmax.f32 %v2396, 0.0
        %v2405 = vmax.f32 %v2397, 0.0
        %v2406 = vmax.f32 %v2398, 0.0
        %v2407 = vmax.f32 %v2399, 0.0
        %v2408 = vmax.f32 %v2400, 0.0
        %v2409 = vmul.f32 %v688, %v2401
        %v2410 = vmul.f32 %v688, %v2402
        %v2411 = vmul.f32 %v688, %v2403
        %v2412 = vmul.f32 %v688, %v2404
        %v2413 = vmul.f32 %v688, %v2405
        %v2414 = vmul.f32 %v688, %v2406
        %v2415 = vmul.f32 %v688, %v2407
        %v2416 = vmul.f32 %v688, %v2408
        %v2417 = vadd.f32 %v2369, %v2409
        %v2418 = vadd.f32 %v2370, %v2410
        %v2419 = vadd.f32 %v2371, %v2411
        %v2420 = vadd.f32 %v2372, %v2412
        %v2421 = vadd.f32 %v2373, %v2413
        %v2422 = vadd.f32 %v2374, %v2414
        %v2423 = vadd.f32 %v2375, %v2415
        %v2424 = vadd.f32 %v2376, %v2416
        %2425 = vset.pattern.permute.xlu0 2
        %2426 = vperm.xlu0 %2425, %v2321
        %v2427 = vpop.permute.xlu0 %2426
        %2429 = vset.pattern.permute.xlu0 2
        %2430 = vperm.xlu0 %2429, %v2322
        %v2431 = vpop.permute.xlu0 %2430
        %2433 = vset.pattern.permute.xlu0 2
        %2434 = vperm.xlu0 %2433, %v2323
        %v2435 = vpop.permute.xlu0 %2434
        %2437 = vset.pattern.permute.xlu0 2
        %2438 = vperm.xlu0 %2437, %v2324
        %v2439 = vpop.permute.xlu0 %2438
        %v2441 = vadd.f32 %v2427, %v721
        %v2442 = vadd.f32 %v2427, %v722
        %v2443 = vadd.f32 %v2431, %v721
        %v2444 = vadd.f32 %v2431, %v722
        %v2445 = vadd.f32 %v2435, %v721
        %v2446 = vadd.f32 %v2435, %v722
        %v2447 = vadd.f32 %v2439, %v721
        %v2448 = vadd.f32 %v2439, %v722
        %v2449 = vmax.f32 %v2441, 0.0
        %v2450 = vmax.f32 %v2442, 0.0
        %v2451 = vmax.f32 %v2443, 0.0
        %v2452 = vmax.f32 %v2444, 0.0
        %v2453 = vmax.f32 %v2445, 0.0
        %v2454 = vmax.f32 %v2446, 0.0
        %v2455 = vmax.f32 %v2447, 0.0
        %v2456 = vmax.f32 %v2448, 0.0
        %v2457 = vmul.f32 %v739, %v2449
        %v2458 = vmul.f32 %v739, %v2450
        %v2459 = vmul.f32 %v739, %v2451
        %v2460 = vmul.f32 %v739, %v2452
        %v2461 = vmul.f32 %v739, %v2453
        %v2462 = vmul.f32 %v739, %v2454
        %v2463 = vmul.f32 %v739, %v2455
        %v2464 = vmul.f32 %v739, %v2456
        %v2465 = vadd.f32 %v2417, %v2457
        %v2466 = vadd.f32 %v2418, %v2458
        %v2467 = vadd.f32 %v2419, %v2459
        %v2468 = vadd.f32 %v2420, %v2460
        %v2469 = vadd.f32 %v2421, %v2461
        %v2470 = vadd.f32 %v2422, %v2462
        %v2471 = vadd.f32 %v2423, %v2463
        %v2472 = vadd.f32 %v2424, %v2464
        %2473 = vset.pattern.permute.xlu0 3
        %2474 = vperm.xlu0 %2473, %v2321
        %v2475 = vpop.permute.xlu0 %2474
        %2477 = vset.pattern.permute.xlu0 3
        %2478 = vperm.xlu0 %2477, %v2322
        %v2479 = vpop.permute.xlu0 %2478
        %2481 = vset.pattern.permute.xlu0 3
        %2482 = vperm.xlu0 %2481, %v2323
        %v2483 = vpop.permute.xlu0 %2482
        %2485 = vset.pattern.permute.xlu0 3
        %2486 = vperm.xlu0 %2485, %v2324
        %v2487 = vpop.permute.xlu0 %2486
        %v2489 = vadd.f32 %v2475, %v772
        %v2490 = vadd.f32 %v2475, %v773
        %v2491 = vadd.f32 %v2479, %v772
        %v2492 = vadd.f32 %v2479, %v773
        %v2493 = vadd.f32 %v2483, %v772
        %v2494 = vadd.f32 %v2483, %v773
        %v2495 = vadd.f32 %v2487, %v772
        %v2496 = vadd.f32 %v2487, %v773
        %v2497 = vmax.f32 %v2489, 0.0
        %v2498 = vmax.f32 %v2490, 0.0
        %v2499 = vmax.f32 %v2491, 0.0
        %v2500 = vmax.f32 %v2492, 0.0
        %v2501 = vmax.f32 %v2493, 0.0
        %v2502 = vmax.f32 %v2494, 0.0
        %v2503 = vmax.f32 %v2495, 0.0
        %v2504 = vmax.f32 %v2496, 0.0
        %v2505 = vmul.f32 %v790, %v2497
        %v2506 = vmul.f32 %v790, %v2498
        %v2507 = vmul.f32 %v790, %v2499
        %v2508 = vmul.f32 %v790, %v2500
        %v2509 = vmul.f32 %v790, %v2501
        %v2510 = vmul.f32 %v790, %v2502
        %v2511 = vmul.f32 %v790, %v2503
        %v2512 = vmul.f32 %v790, %v2504
        %v2513 = vadd.f32 %v2465, %v2505
        %v2514 = vadd.f32 %v2466, %v2506
        %v2515 = vadd.f32 %v2467, %v2507
        %v2516 = vadd.f32 %v2468, %v2508
        %v2517 = vadd.f32 %v2469, %v2509
        %v2518 = vadd.f32 %v2470, %v2510
        %v2519 = vadd.f32 %v2471, %v2511
        %v2520 = vadd.f32 %v2472, %v2512
        %v2521 = vtanh.pop %v2513
        %v2522 = vtanh.pop %v2514
        %v2523 = vtanh.pop %v2515
        %v2524 = vtanh.pop %v2516
        %v2525 = vtanh.pop %v2517
        %v2526 = vtanh.pop %v2518
        %v2527 = vtanh.pop %v2519
        %v2528 = vtanh.pop %v2520
        %v2529 = vmul.f32 %v2521, 0.5
        %v2530 = vmul.f32 %v2522, 0.5
        %v2531 = vmul.f32 %v2523, 0.5
        %v2532 = vmul.f32 %v2524, 0.5
        %v2533 = vmul.f32 %v2525, 0.5
        %v2534 = vmul.f32 %v2526, 0.5
        %v2535 = vmul.f32 %v2527, 0.5
        %v2536 = vmul.f32 %v2528, 0.5
        %v2537 = vmul.f32 %v2529, 1.442695
        %v2538 = vpow.pop %v2537
        %v2539 = vmul.f32 %v2530, 1.442695
        %v2540 = vpow.pop %v2539
        %v2541 = vmul.f32 %v2531, 1.442695
        %v2542 = vpow.pop %v2541
        %v2543 = vmul.f32 %v2532, 1.442695
        %v2544 = vpow.pop %v2543
        %v2545 = vmul.f32 %v2533, 1.442695
        %v2546 = vpow.pop %v2545
        %v2547 = vmul.f32 %v2534, 1.442695
        %v2548 = vpow.pop %v2547
        %v2549 = vmul.f32 %v2535, 1.442695
        %v2550 = vpow.pop %v2549
        %v2551 = vmul.f32 %v2536, 1.442695
        %v2552 = vpow.pop %v2551
        %2553 = vmatpush.xpose.msra.mxu0 0.0
        %2554 = vmatpush.xpose.msra.mxu0 0.0
        %2555 = vmatpush.xpose.msra.mxu0 0.0
        %2556 = vmatpush.xpose.msra.mxu0 0.0
        %2557 = vmatpush.xpose.msra.mxu0 0.0
        %2558 = vmatpush.xpose.msra.mxu0 0.0
        %2559 = vmatpush.xpose.msra.mxu0 0.0
        %2560 = vmatpush.xpose.msra.mxu0 0.0
        %2561 = vmatpush.xpose.msra.mxu0 0.0
        %2562 = vmatpush.xpose.msra.mxu0 0.0
        %2563 = vmatpush.xpose.msra.mxu0 0.0
        %2564 = vmatpush.xpose.msra.mxu0 0.0
        %2565 = vmatpush.xpose.msra.mxu0 %v2550
        %2566 = vmatpush.xpose.msra.mxu0 %v2546
        %2567 = vmatpush.xpose.msra.mxu0 %v2542
        %2568 = vmatpush.xpose.msra.mxu0 %v2538
        %2569 = vmatmul.f32.gmra.mxu0 1.0
        %v2570 = vpop.f32.mrf.mxu0
        %v2571 = vadd.f32 0.0, %v2570
        %2572 = vdwg.mxu0
        %2573 = vmatpush.xpose.msra.mxu0 0.0
        %2574 = vmatpush.xpose.msra.mxu0 0.0
        %2575 = vmatpush.xpose.msra.mxu0 0.0
        %2576 = vmatpush.xpose.msra.mxu0 0.0
        %2577 = vmatpush.xpose.msra.mxu0 0.0
        %2578 = vmatpush.xpose.msra.mxu0 0.0
        %2579 = vmatpush.xpose.msra.mxu0 0.0
        %2580 = vmatpush.xpose.msra.mxu0 0.0
        %2581 = vmatpush.xpose.msra.mxu0 0.0
        %2582 = vmatpush.xpose.msra.mxu0 0.0
        %2583 = vmatpush.xpose.msra.mxu0 0.0
        %2584 = vmatpush.xpose.msra.mxu0 0.0
        %2585 = vmatpush.xpose.msra.mxu0 %v2552
        %2586 = vmatpush.xpose.msra.mxu0 %v2548
        %2587 = vmatpush.xpose.msra.mxu0 %v2544
        %2588 = vmatpush.xpose.msra.mxu0 %v2540
        %2589 = vmatmul.f32.gmra.mxu0 1.0
        %v2590 = vpop.f32.mrf.mxu0
        %v2591 = vadd.f32 %v2571, %v2590
        %2592 = vdwg.mxu0
        %v2593 = vld [vmem:[#allocation3 + $0x8] sm:$0xff]
        %v2594 = vrcp.pop %v2591
        %v2595 = vmul.f32 %v2591, %v2594
        %v2596 = vsub.f32 1.0, %v2595
        %v2597 = vmul.f32 %v2594, %v2596
        %v2598 = vadd.f32 %v2594, %v2597
        %vm2599 = vweird.f32 %v2591
        %vm2600 = vweird.f32 %v2594
        %vm2601 = vmor %vm2599, %vm2600
        %v2602 = vsel %vm2601, %v2594, %v2598
        %v2603 = vand.u32 2147483647, %v2591
        %vm2604 = vcmp.eq.f32.partialorder %v2603, 8.507059e+37
        %v2605 = vand.u32 %v2591, 2147483648
        %v2606 = vor.u32 1.1754944e-38, %v2605
        %v2607 = vsel %vm2604, %v2606, %v2602
        %v2608 = vmul.f32 1.0, %v2607
        %v2609 = vperm.slane %v2608, 0
        %2611 = vrot.lane.b32.xlu0 %v2609, 32
        %v2612 = vpop.permute.xlu0 %2611
        %v2614 = vmul.f32 %v2593, %v2612
        %v2615 = vld [vmem:[#allocation4] sm:$0xff]
        %v2616 = vld [vmem:[#allocation4 + $0x8] sm:$0xff]
        %2618 = vrot.lane.b32.xlu0 %v2614, 96
        %v2619 = vpop.permute.xlu0 %2618
        %v2620 = vsel %vm899, %v2619, 0
        %2622 = vmatpush.msra.mxu0 0.0
        %2623 = vmatpush.msra.mxu0 0.0
        %2624 = vmatpush.msra.mxu0 0.0
        %2625 = vmatpush.msra.mxu0 0.0
        %2626 = vmatpush.msra.mxu0 0.0
        %2627 = vmatpush.msra.mxu0 0.0
        %2628 = vmatpush.msra.mxu0 0.0
        %2629 = vmatpush.msra.mxu0 0.0
        %2630 = vmatpush.msra.mxu0 0.0
        %2631 = vmatpush.msra.mxu0 0.0
        %2632 = vmatpush.msra.mxu0 0.0
        %2633 = vmatpush.msra.mxu0 0.0
        %2634 = vmatpush.msra.mxu0 %v2550
        %2635 = vmatpush.msra.mxu0 %v2546
        %2636 = vmatpush.msra.mxu0 %v2542
        %2637 = vmatpush.msra.mxu0 %v2538
        %2638 = vmatmul.f32.gmra.mxu0 %v2620
        %v2639 = vpop.f32.mrf.mxu0
        %v2640 = vadd.f32 0.0, %v2639
        %2641 = vdwg.mxu0
        %2642 = vmatpush.msra.mxu0 0.0
        %2643 = vmatpush.msra.mxu0 0.0
        %2644 = vmatpush.msra.mxu0 0.0
        %2645 = vmatpush.msra.mxu0 0.0
        %2646 = vmatpush.msra.mxu0 0.0
        %2647 = vmatpush.msra.mxu0 0.0
        %2648 = vmatpush.msra.mxu0 0.0
        %2649 = vmatpush.msra.mxu0 0.0
        %2650 = vmatpush.msra.mxu0 0.0
        %2651 = vmatpush.msra.mxu0 0.0
        %2652 = vmatpush.msra.mxu0 0.0
        %2653 = vmatpush.msra.mxu0 0.0
        %2654 = vmatpush.msra.mxu0 %v2552
        %2655 = vmatpush.msra.mxu0 %v2548
        %2656 = vmatpush.msra.mxu0 %v2544
        %2657 = vmatpush.msra.mxu0 %v2540
        %2658 = vmatmul.f32.gmra.mxu0 %v2620
        %v2659 = vpop.f32.mrf.mxu0
        %v2660 = vadd.f32 0.0, %v2659
        %2661 = vdwg.mxu0
        %v2662 = vadd.f32 %v2615, %v2640
        %v2663 = vadd.f32 %v2616, %v2660
        %2664 = vst [vmem:[#allocation4] sm:$0xff] %v2662
        %2665 = vst [vmem:[#allocation4 + $0x8] sm:$0xff] %v2663
        %v2666 = vld [vmem:[#allocation2 + $0xc0] sm:$0xff]
        %v2667 = vld [vmem:[#allocation2 + $0xc8] sm:$0xff]
        %v2668 = vld [vmem:[#allocation2 + $0xd0] sm:$0xff]
        %v2669 = vld [vmem:[#allocation2 + $0xd8] sm:$0xff]
        %2671 = vset.pattern.permute.xlu0 0
        %2672 = vperm.xlu0 %2671, %v2666
        %v2673 = vpop.permute.xlu0 %2672
        %2676 = vset.pattern.permute.xlu0 0
        %2677 = vperm.xlu0 %2676, %v2667
        %v2678 = vpop.permute.xlu0 %2677
        %2681 = vset.pattern.permute.xlu0 0
        %2682 = vperm.xlu0 %2681, %v2668
        %v2683 = vpop.permute.xlu0 %2682
        %2686 = vset.pattern.permute.xlu0 0
        %2687 = vperm.xlu0 %2686, %v2669
        %v2688 = vpop.permute.xlu0 %2687
        %v2690 = vadd.f32 %v2673, %v618
        %v2691 = vadd.f32 %v2673, %v619
        %v2692 = vadd.f32 %v2678, %v618
        %v2693 = vadd.f32 %v2678, %v619
        %v2694 = vadd.f32 %v2683, %v618
        %v2695 = vadd.f32 %v2683, %v619
        %v2696 = vadd.f32 %v2688, %v618
        %v2697 = vadd.f32 %v2688, %v619
        %v2698 = vmax.f32 %v2690, 0.0
        %v2699 = vmax.f32 %v2691, 0.0
        %v2700 = vmax.f32 %v2692, 0.0
        %v2701 = vmax.f32 %v2693, 0.0
        %v2702 = vmax.f32 %v2694, 0.0
        %v2703 = vmax.f32 %v2695, 0.0
        %v2704 = vmax.f32 %v2696, 0.0
        %v2705 = vmax.f32 %v2697, 0.0
        %v2706 = vmul.f32 %v636, %v2698
        %v2707 = vmul.f32 %v636, %v2699
        %v2708 = vmul.f32 %v636, %v2700
        %v2709 = vmul.f32 %v636, %v2701
        %v2710 = vmul.f32 %v636, %v2702
        %v2711 = vmul.f32 %v636, %v2703
        %v2712 = vmul.f32 %v636, %v2704
        %v2713 = vmul.f32 %v636, %v2705
        %v2714 = vadd.f32 %v2706, %v645
        %v2715 = vadd.f32 %v2707, %v645
        %v2716 = vadd.f32 %v2708, %v645
        %v2717 = vadd.f32 %v2709, %v645
        %v2718 = vadd.f32 %v2710, %v645
        %v2719 = vadd.f32 %v2711, %v645
        %v2720 = vadd.f32 %v2712, %v645
        %v2721 = vadd.f32 %v2713, %v645
        %2722 = vset.pattern.permute.xlu0 1
        %2723 = vperm.xlu0 %2722, %v2666
        %v2724 = vpop.permute.xlu0 %2723
        %2726 = vset.pattern.permute.xlu0 1
        %2727 = vperm.xlu0 %2726, %v2667
        %v2728 = vpop.permute.xlu0 %2727
        %2730 = vset.pattern.permute.xlu0 1
        %2731 = vperm.xlu0 %2730, %v2668
        %v2732 = vpop.permute.xlu0 %2731
        %2734 = vset.pattern.permute.xlu0 1
        %2735 = vperm.xlu0 %2734, %v2669
        %v2736 = vpop.permute.xlu0 %2735
        %v2738 = vadd.f32 %v2724, %v670
        %v2739 = vadd.f32 %v2724, %v671
        %v2740 = vadd.f32 %v2728, %v670
        %v2741 = vadd.f32 %v2728, %v671
        %v2742 = vadd.f32 %v2732, %v670
        %v2743 = vadd.f32 %v2732, %v671
        %v2744 = vadd.f32 %v2736, %v670
        %v2745 = vadd.f32 %v2736, %v671
        %v2746 = vmax.f32 %v2738, 0.0
        %v2747 = vmax.f32 %v2739, 0.0
        %v2748 = vmax.f32 %v2740, 0.0
        %v2749 = vmax.f32 %v2741, 0.0
        %v2750 = vmax.f32 %v2742, 0.0
        %v2751 = vmax.f32 %v2743, 0.0
        %v2752 = vmax.f32 %v2744, 0.0
        %v2753 = vmax.f32 %v2745, 0.0
        %v2754 = vmul.f32 %v688, %v2746
        %v2755 = vmul.f32 %v688, %v2747
        %v2756 = vmul.f32 %v688, %v2748
        %v2757 = vmul.f32 %v688, %v2749
        %v2758 = vmul.f32 %v688, %v2750
        %v2759 = vmul.f32 %v688, %v2751
        %v2760 = vmul.f32 %v688, %v2752
        %v2761 = vmul.f32 %v688, %v2753
        %v2762 = vadd.f32 %v2714, %v2754
        %v2763 = vadd.f32 %v2715, %v2755
        %v2764 = vadd.f32 %v2716, %v2756
        %v2765 = vadd.f32 %v2717, %v2757
        %v2766 = vadd.f32 %v2718, %v2758
        %v2767 = vadd.f32 %v2719, %v2759
        %v2768 = vadd.f32 %v2720, %v2760
        %v2769 = vadd.f32 %v2721, %v2761
        %2770 = vset.pattern.permute.xlu0 2
        %2771 = vperm.xlu0 %2770, %v2666
        %v2772 = vpop.permute.xlu0 %2771
        %2774 = vset.pattern.permute.xlu0 2
        %2775 = vperm.xlu0 %2774, %v2667
        %v2776 = vpop.permute.xlu0 %2775
        %2778 = vset.pattern.permute.xlu0 2
        %2779 = vperm.xlu0 %2778, %v2668
        %v2780 = vpop.permute.xlu0 %2779
        %2782 = vset.pattern.permute.xlu0 2
        %2783 = vperm.xlu0 %2782, %v2669
        %v2784 = vpop.permute.xlu0 %2783
        %v2786 = vadd.f32 %v2772, %v721
        %v2787 = vadd.f32 %v2772, %v722
        %v2788 = vadd.f32 %v2776, %v721
        %v2789 = vadd.f32 %v2776, %v722
        %v2790 = vadd.f32 %v2780, %v721
        %v2791 = vadd.f32 %v2780, %v722
        %v2792 = vadd.f32 %v2784, %v721
        %v2793 = vadd.f32 %v2784, %v722
        %v2794 = vmax.f32 %v2786, 0.0
        %v2795 = vmax.f32 %v2787, 0.0
        %v2796 = vmax.f32 %v2788, 0.0
        %v2797 = vmax.f32 %v2789, 0.0
        %v2798 = vmax.f32 %v2790, 0.0
        %v2799 = vmax.f32 %v2791, 0.0
        %v2800 = vmax.f32 %v2792, 0.0
        %v2801 = vmax.f32 %v2793, 0.0
        %v2802 = vmul.f32 %v739, %v2794
        %v2803 = vmul.f32 %v739, %v2795
        %v2804 = vmul.f32 %v739, %v2796
        %v2805 = vmul.f32 %v739, %v2797
        %v2806 = vmul.f32 %v739, %v2798
        %v2807 = vmul.f32 %v739, %v2799
        %v2808 = vmul.f32 %v739, %v2800
        %v2809 = vmul.f32 %v739, %v2801
        %v2810 = vadd.f32 %v2762, %v2802
        %v2811 = vadd.f32 %v2763, %v2803
        %v2812 = vadd.f32 %v2764, %v2804
        %v2813 = vadd.f32 %v2765, %v2805
        %v2814 = vadd.f32 %v2766, %v2806
        %v2815 = vadd.f32 %v2767, %v2807
        %v2816 = vadd.f32 %v2768, %v2808
        %v2817 = vadd.f32 %v2769, %v2809
        %2818 = vset.pattern.permute.xlu0 3
        %2819 = vperm.xlu0 %2818, %v2666
        %v2820 = vpop.permute.xlu0 %2819
        %2822 = vset.pattern.permute.xlu0 3
        %2823 = vperm.xlu0 %2822, %v2667
        %v2824 = vpop.permute.xlu0 %2823
        %2826 = vset.pattern.permute.xlu0 3
        %2827 = vperm.xlu0 %2826, %v2668
        %v2828 = vpop.permute.xlu0 %2827
        %2830 = vset.pattern.permute.xlu0 3
        %2831 = vperm.xlu0 %2830, %v2669
        %v2832 = vpop.permute.xlu0 %2831
        %v2834 = vadd.f32 %v2820, %v772
        %v2835 = vadd.f32 %v2820, %v773
        %v2836 = vadd.f32 %v2824, %v772
        %v2837 = vadd.f32 %v2824, %v773
        %v2838 = vadd.f32 %v2828, %v772
        %v2839 = vadd.f32 %v2828, %v773
        %v2840 = vadd.f32 %v2832, %v772
        %v2841 = vadd.f32 %v2832, %v773
        %v2842 = vmax.f32 %v2834, 0.0
        %v2843 = vmax.f32 %v2835, 0.0
        %v2844 = vmax.f32 %v2836, 0.0
        %v2845 = vmax.f32 %v2837, 0.0
        %v2846 = vmax.f32 %v2838, 0.0
        %v2847 = vmax.f32 %v2839, 0.0
        %v2848 = vmax.f32 %v2840, 0.0
        %v2849 = vmax.f32 %v2841, 0.0
        %v2850 = vmul.f32 %v790, %v2842
        %v2851 = vmul.f32 %v790, %v2843
        %v2852 = vmul.f32 %v790, %v2844
        %v2853 = vmul.f32 %v790, %v2845
        %v2854 = vmul.f32 %v790, %v2846
        %v2855 = vmul.f32 %v790, %v2847
        %v2856 = vmul.f32 %v790, %v2848
        %v2857 = vmul.f32 %v790, %v2849
        %v2858 = vadd.f32 %v2810, %v2850
        %v2859 = vadd.f32 %v2811, %v2851
        %v2860 = vadd.f32 %v2812, %v2852
        %v2861 = vadd.f32 %v2813, %v2853
        %v2862 = vadd.f32 %v2814, %v2854
        %v2863 = vadd.f32 %v2815, %v2855
        %v2864 = vadd.f32 %v2816, %v2856
        %v2865 = vadd.f32 %v2817, %v2857
        %v2866 = vtanh.pop %v2858
        %v2867 = vtanh.pop %v2859
        %v2868 = vtanh.pop %v2860
        %v2869 = vtanh.pop %v2861
        %v2870 = vtanh.pop %v2862
        %v2871 = vtanh.pop %v2863
        %v2872 = vtanh.pop %v2864
        %v2873 = vtanh.pop %v2865
        %v2874 = vmul.f32 %v2866, 0.5
        %v2875 = vmul.f32 %v2867, 0.5
        %v2876 = vmul.f32 %v2868, 0.5
        %v2877 = vmul.f32 %v2869, 0.5
        %v2878 = vmul.f32 %v2870, 0.5
        %v2879 = vmul.f32 %v2871, 0.5
        %v2880 = vmul.f32 %v2872, 0.5
        %v2881 = vmul.f32 %v2873, 0.5
        %v2882 = vmul.f32 %v2874, 1.442695
        %v2883 = vpow.pop %v2882
        %v2884 = vmul.f32 %v2875, 1.442695
        %v2885 = vpow.pop %v2884
        %v2886 = vmul.f32 %v2876, 1.442695
        %v2887 = vpow.pop %v2886
        %v2888 = vmul.f32 %v2877, 1.442695
        %v2889 = vpow.pop %v2888
        %v2890 = vmul.f32 %v2878, 1.442695
        %v2891 = vpow.pop %v2890
        %v2892 = vmul.f32 %v2879, 1.442695
        %v2893 = vpow.pop %v2892
        %v2894 = vmul.f32 %v2880, 1.442695
        %v2895 = vpow.pop %v2894
        %v2896 = vmul.f32 %v2881, 1.442695
        %v2897 = vpow.pop %v2896
        %2898 = vmatpush.xpose.msra.mxu0 0.0
        %2899 = vmatpush.xpose.msra.mxu0 0.0
        %2900 = vmatpush.xpose.msra.mxu0 0.0
        %2901 = vmatpush.xpose.msra.mxu0 0.0
        %2902 = vmatpush.xpose.msra.mxu0 0.0
        %2903 = vmatpush.xpose.msra.mxu0 0.0
        %2904 = vmatpush.xpose.msra.mxu0 0.0
        %2905 = vmatpush.xpose.msra.mxu0 0.0
        %2906 = vmatpush.xpose.msra.mxu0 0.0
        %2907 = vmatpush.xpose.msra.mxu0 0.0
        %2908 = vmatpush.xpose.msra.mxu0 0.0
        %2909 = vmatpush.xpose.msra.mxu0 0.0
        %2910 = vmatpush.xpose.msra.mxu0 %v2895
        %2911 = vmatpush.xpose.msra.mxu0 %v2891
        %2912 = vmatpush.xpose.msra.mxu0 %v2887
        %2913 = vmatpush.xpose.msra.mxu0 %v2883
        %2914 = vmatmul.f32.gmra.mxu0 1.0
        %v2915 = vpop.f32.mrf.mxu0
        %v2916 = vadd.f32 0.0, %v2915
        %2917 = vdwg.mxu0
        %2918 = vmatpush.xpose.msra.mxu0 0.0
        %2919 = vmatpush.xpose.msra.mxu0 0.0
        %2920 = vmatpush.xpose.msra.mxu0 0.0
        %2921 = vmatpush.xpose.msra.mxu0 0.0
        %2922 = vmatpush.xpose.msra.mxu0 0.0
        %2923 = vmatpush.xpose.msra.mxu0 0.0
        %2924 = vmatpush.xpose.msra.mxu0 0.0
        %2925 = vmatpush.xpose.msra.mxu0 0.0
        %2926 = vmatpush.xpose.msra.mxu0 0.0
        %2927 = vmatpush.xpose.msra.mxu0 0.0
        %2928 = vmatpush.xpose.msra.mxu0 0.0
        %2929 = vmatpush.xpose.msra.mxu0 0.0
        %2930 = vmatpush.xpose.msra.mxu0 %v2897
        %2931 = vmatpush.xpose.msra.mxu0 %v2893
        %2932 = vmatpush.xpose.msra.mxu0 %v2889
        %2933 = vmatpush.xpose.msra.mxu0 %v2885
        %2934 = vmatmul.f32.gmra.mxu0 1.0
        %v2935 = vpop.f32.mrf.mxu0
        %v2936 = vadd.f32 %v2916, %v2935
        %2937 = vdwg.mxu0
        %v2938 = vld [vmem:[#allocation3 + $0x8] sm:$0xff]
        %v2939 = vrcp.pop %v2936
        %v2940 = vmul.f32 %v2936, %v2939
        %v2941 = vsub.f32 1.0, %v2940
        %v2942 = vmul.f32 %v2939, %v2941
        %v2943 = vadd.f32 %v2939, %v2942
        %vm2944 = vweird.f32 %v2936
        %vm2945 = vweird.f32 %v2939
        %vm2946 = vmor %vm2944, %vm2945
        %v2947 = vsel %vm2946, %v2939, %v2943
        %v2948 = vand.u32 2147483647, %v2936
        %vm2949 = vcmp.eq.f32.partialorder %v2948, 8.507059e+37
        %v2950 = vand.u32 %v2936, 2147483648
        %v2951 = vor.u32 1.1754944e-38, %v2950
        %v2952 = vsel %vm2949, %v2951, %v2947
        %v2953 = vmul.f32 1.0, %v2952
        %v2954 = vperm.slane %v2953, 0
        %2956 = vrot.lane.b32.xlu0 %v2954, 64
        %v2957 = vpop.permute.xlu0 %2956
        %v2959 = vmul.f32 %v2938, %v2957
        %v2960 = vld [vmem:[#allocation4] sm:$0xff]
        %v2961 = vld [vmem:[#allocation4 + $0x8] sm:$0xff]
        %2963 = vrot.lane.b32.xlu0 %v2959, 64
        %v2964 = vpop.permute.xlu0 %2963
        %v2965 = vsel %vm899, %v2964, 0
        %2967 = vmatpush.msra.mxu0 0.0
        %2968 = vmatpush.msra.mxu0 0.0
        %2969 = vmatpush.msra.mxu0 0.0
        %2970 = vmatpush.msra.mxu0 0.0
        %2971 = vmatpush.msra.mxu0 0.0
        %2972 = vmatpush.msra.mxu0 0.0
        %2973 = vmatpush.msra.mxu0 0.0
        %2974 = vmatpush.msra.mxu0 0.0
        %2975 = vmatpush.msra.mxu0 0.0
        %2976 = vmatpush.msra.mxu0 0.0
        %2977 = vmatpush.msra.mxu0 0.0
        %2978 = vmatpush.msra.mxu0 0.0
        %2979 = vmatpush.msra.mxu0 %v2895
        %2980 = vmatpush.msra.mxu0 %v2891
        %2981 = vmatpush.msra.mxu0 %v2887
        %2982 = vmatpush.msra.mxu0 %v2883
        %2983 = vmatmul.f32.gmra.mxu0 %v2965
        %v2984 = vpop.f32.mrf.mxu0
        %v2985 = vadd.f32 0.0, %v2984
        %2986 = vdwg.mxu0
        %2987 = vmatpush.msra.mxu0 0.0
        %2988 = vmatpush.msra.mxu0 0.0
        %2989 = vmatpush.msra.mxu0 0.0
        %2990 = vmatpush.msra.mxu0 0.0
        %2991 = vmatpush.msra.mxu0 0.0
        %2992 = vmatpush.msra.mxu0 0.0
        %2993 = vmatpush.msra.mxu0 0.0
        %2994 = vmatpush.msra.mxu0 0.0
        %2995 = vmatpush.msra.mxu0 0.0
        %2996 = vmatpush.msra.mxu0 0.0
        %2997 = vmatpush.msra.mxu0 0.0
        %2998 = vmatpush.msra.mxu0 0.0
        %2999 = vmatpush.msra.mxu0 %v2897
        %3000 = vmatpush.msra.mxu0 %v2893
        %3001 = vmatpush.msra.mxu0 %v2889
        %3002 = vmatpush.msra.mxu0 %v2885
        %3003 = vmatmul.f32.gmra.mxu0 %v2965
        %v3004 = vpop.f32.mrf.mxu0
        %v3005 = vadd.f32 0.0, %v3004
        %3006 = vdwg.mxu0
        %v3007 = vadd.f32 %v2960, %v2985
        %v3008 = vadd.f32 %v2961, %v3005
        %3009 = vst [vmem:[#allocation4] sm:$0xff] %v3007
        %3010 = vst [vmem:[#allocation4 + $0x8] sm:$0xff] %v3008
        %v3011 = vld [vmem:[#allocation2 + $0xe0] sm:$0xff]
        %v3012 = vld [vmem:[#allocation2 + $0xe8] sm:$0xff]
        %v3013 = vld [vmem:[#allocation2 + $0xf0] sm:$0xff]
        %v3014 = vld [vmem:[#allocation2 + $0xf8] sm:$0xff]
        %3016 = vset.pattern.permute.xlu0 0
        %3017 = vperm.xlu0 %3016, %v3011
        %v3018 = vpop.permute.xlu0 %3017
        %3021 = vset.pattern.permute.xlu0 0
        %3022 = vperm.xlu0 %3021, %v3012
        %v3023 = vpop.permute.xlu0 %3022
        %3026 = vset.pattern.permute.xlu0 0
        %3027 = vperm.xlu0 %3026, %v3013
        %v3028 = vpop.permute.xlu0 %3027
        %3031 = vset.pattern.permute.xlu0 0
        %3032 = vperm.xlu0 %3031, %v3014
        %v3033 = vpop.permute.xlu0 %3032
        %v3035 = vadd.f32 %v3018, %v618
        %v3036 = vadd.f32 %v3018, %v619
        %v3037 = vadd.f32 %v3023, %v618
        %v3038 = vadd.f32 %v3023, %v619
        %v3039 = vadd.f32 %v3028, %v618
        %v3040 = vadd.f32 %v3028, %v619
        %v3041 = vadd.f32 %v3033, %v618
        %v3042 = vadd.f32 %v3033, %v619
        %v3043 = vmax.f32 %v3035, 0.0
        %v3044 = vmax.f32 %v3036, 0.0
        %v3045 = vmax.f32 %v3037, 0.0
        %v3046 = vmax.f32 %v3038, 0.0
        %v3047 = vmax.f32 %v3039, 0.0
        %v3048 = vmax.f32 %v3040, 0.0
        %v3049 = vmax.f32 %v3041, 0.0
        %v3050 = vmax.f32 %v3042, 0.0
        %v3051 = vmul.f32 %v636, %v3043
        %v3052 = vmul.f32 %v636, %v3044
        %v3053 = vmul.f32 %v636, %v3045
        %v3054 = vmul.f32 %v636, %v3046
        %v3055 = vmul.f32 %v636, %v3047
        %v3056 = vmul.f32 %v636, %v3048
        %v3057 = vmul.f32 %v636, %v3049
        %v3058 = vmul.f32 %v636, %v3050
        %v3059 = vadd.f32 %v3051, %v645
        %v3060 = vadd.f32 %v3052, %v645
        %v3061 = vadd.f32 %v3053, %v645
        %v3062 = vadd.f32 %v3054, %v645
        %v3063 = vadd.f32 %v3055, %v645
        %v3064 = vadd.f32 %v3056, %v645
        %v3065 = vadd.f32 %v3057, %v645
        %v3066 = vadd.f32 %v3058, %v645
        %3067 = vset.pattern.permute.xlu0 1
        %3068 = vperm.xlu0 %3067, %v3011
        %v3069 = vpop.permute.xlu0 %3068
        %3071 = vset.pattern.permute.xlu0 1
        %3072 = vperm.xlu0 %3071, %v3012
        %v3073 = vpop.permute.xlu0 %3072
        %3075 = vset.pattern.permute.xlu0 1
        %3076 = vperm.xlu0 %3075, %v3013
        %v3077 = vpop.permute.xlu0 %3076
        %3079 = vset.pattern.permute.xlu0 1
        %3080 = vperm.xlu0 %3079, %v3014
        %v3081 = vpop.permute.xlu0 %3080
        %v3083 = vadd.f32 %v3069, %v670
        %v3084 = vadd.f32 %v3069, %v671
        %v3085 = vadd.f32 %v3073, %v670
        %v3086 = vadd.f32 %v3073, %v671
        %v3087 = vadd.f32 %v3077, %v670
        %v3088 = vadd.f32 %v3077, %v671
        %v3089 = vadd.f32 %v3081, %v670
        %v3090 = vadd.f32 %v3081, %v671
        %v3091 = vmax.f32 %v3083, 0.0
        %v3092 = vmax.f32 %v3084, 0.0
        %v3093 = vmax.f32 %v3085, 0.0
        %v3094 = vmax.f32 %v3086, 0.0
        %v3095 = vmax.f32 %v3087, 0.0
        %v3096 = vmax.f32 %v3088, 0.0
        %v3097 = vmax.f32 %v3089, 0.0
        %v3098 = vmax.f32 %v3090, 0.0
        %v3099 = vmul.f32 %v688, %v3091
        %v3100 = vmul.f32 %v688, %v3092
        %v3101 = vmul.f32 %v688, %v3093
        %v3102 = vmul.f32 %v688, %v3094
        %v3103 = vmul.f32 %v688, %v3095
        %v3104 = vmul.f32 %v688, %v3096
        %v3105 = vmul.f32 %v688, %v3097
        %v3106 = vmul.f32 %v688, %v3098
        %v3107 = vadd.f32 %v3059, %v3099
        %v3108 = vadd.f32 %v3060, %v3100
        %v3109 = vadd.f32 %v3061, %v3101
        %v3110 = vadd.f32 %v3062, %v3102
        %v3111 = vadd.f32 %v3063, %v3103
        %v3112 = vadd.f32 %v3064, %v3104
        %v3113 = vadd.f32 %v3065, %v3105
        %v3114 = vadd.f32 %v3066, %v3106
        %3115 = vset.pattern.permute.xlu0 2
        %3116 = vperm.xlu0 %3115, %v3011
        %v3117 = vpop.permute.xlu0 %3116
        %3119 = vset.pattern.permute.xlu0 2
        %3120 = vperm.xlu0 %3119, %v3012
        %v3121 = vpop.permute.xlu0 %3120
        %3123 = vset.pattern.permute.xlu0 2
        %3124 = vperm.xlu0 %3123, %v3013
        %v3125 = vpop.permute.xlu0 %3124
        %3127 = vset.pattern.permute.xlu0 2
        %3128 = vperm.xlu0 %3127, %v3014
        %v3129 = vpop.permute.xlu0 %3128
        %v3131 = vadd.f32 %v3117, %v721
        %v3132 = vadd.f32 %v3117, %v722
        %v3133 = vadd.f32 %v3121, %v721
        %v3134 = vadd.f32 %v3121, %v722
        %v3135 = vadd.f32 %v3125, %v721
        %v3136 = vadd.f32 %v3125, %v722
        %v3137 = vadd.f32 %v3129, %v721
        %v3138 = vadd.f32 %v3129, %v722
        %v3139 = vmax.f32 %v3131, 0.0
        %v3140 = vmax.f32 %v3132, 0.0
        %v3141 = vmax.f32 %v3133, 0.0
        %v3142 = vmax.f32 %v3134, 0.0
        %v3143 = vmax.f32 %v3135, 0.0
        %v3144 = vmax.f32 %v3136, 0.0
        %v3145 = vmax.f32 %v3137, 0.0
        %v3146 = vmax.f32 %v3138, 0.0
        %v3147 = vmul.f32 %v739, %v3139
        %v3148 = vmul.f32 %v739, %v3140
        %v3149 = vmul.f32 %v739, %v3141
        %v3150 = vmul.f32 %v739, %v3142
        %v3151 = vmul.f32 %v739, %v3143
        %v3152 = vmul.f32 %v739, %v3144
        %v3153 = vmul.f32 %v739, %v3145
        %v3154 = vmul.f32 %v739, %v3146
        %v3155 = vadd.f32 %v3107, %v3147
        %v3156 = vadd.f32 %v3108, %v3148
        %v3157 = vadd.f32 %v3109, %v3149
        %v3158 = vadd.f32 %v3110, %v3150
        %v3159 = vadd.f32 %v3111, %v3151
        %v3160 = vadd.f32 %v3112, %v3152
        %v3161 = vadd.f32 %v3113, %v3153
        %v3162 = vadd.f32 %v3114, %v3154
        %3163 = vset.pattern.permute.xlu0 3
        %3164 = vperm.xlu0 %3163, %v3011
        %v3165 = vpop.permute.xlu0 %3164
        %3167 = vset.pattern.permute.xlu0 3
        %3168 = vperm.xlu0 %3167, %v3012
        %v3169 = vpop.permute.xlu0 %3168
        %3171 = vset.pattern.permute.xlu0 3
        %3172 = vperm.xlu0 %3171, %v3013
        %v3173 = vpop.permute.xlu0 %3172
        %3175 = vset.pattern.permute.xlu0 3
        %3176 = vperm.xlu0 %3175, %v3014
        %v3177 = vpop.permute.xlu0 %3176
        %v3179 = vadd.f32 %v3165, %v772
        %v3180 = vadd.f32 %v3165, %v773
        %v3181 = vadd.f32 %v3169, %v772
        %v3182 = vadd.f32 %v3169, %v773
        %v3183 = vadd.f32 %v3173, %v772
        %v3184 = vadd.f32 %v3173, %v773
        %v3185 = vadd.f32 %v3177, %v772
        %v3186 = vadd.f32 %v3177, %v773
        %v3187 = vmax.f32 %v3179, 0.0
        %v3188 = vmax.f32 %v3180, 0.0
        %v3189 = vmax.f32 %v3181, 0.0
        %v3190 = vmax.f32 %v3182, 0.0
        %v3191 = vmax.f32 %v3183, 0.0
        %v3192 = vmax.f32 %v3184, 0.0
        %v3193 = vmax.f32 %v3185, 0.0
        %v3194 = vmax.f32 %v3186, 0.0
        %v3195 = vmul.f32 %v790, %v3187
        %v3196 = vmul.f32 %v790, %v3188
        %v3197 = vmul.f32 %v790, %v3189
        %v3198 = vmul.f32 %v790, %v3190
        %v3199 = vmul.f32 %v790, %v3191
        %v3200 = vmul.f32 %v790, %v3192
        %v3201 = vmul.f32 %v790, %v3193
        %v3202 = vmul.f32 %v790, %v3194
        %v3203 = vadd.f32 %v3155, %v3195
        %v3204 = vadd.f32 %v3156, %v3196
        %v3205 = vadd.f32 %v3157, %v3197
        %v3206 = vadd.f32 %v3158, %v3198
        %v3207 = vadd.f32 %v3159, %v3199
        %v3208 = vadd.f32 %v3160, %v3200
        %v3209 = vadd.f32 %v3161, %v3201
        %v3210 = vadd.f32 %v3162, %v3202
        %v3211 = vtanh.pop %v3203
        %v3212 = vtanh.pop %v3204
        %v3213 = vtanh.pop %v3205
        %v3214 = vtanh.pop %v3206
        %v3215 = vtanh.pop %v3207
        %v3216 = vtanh.pop %v3208
        %v3217 = vtanh.pop %v3209
        %v3218 = vtanh.pop %v3210
        %v3219 = vmul.f32 %v3211, 0.5
        %v3220 = vmul.f32 %v3212, 0.5
        %v3221 = vmul.f32 %v3213, 0.5
        %v3222 = vmul.f32 %v3214, 0.5
        %v3223 = vmul.f32 %v3215, 0.5
        %v3224 = vmul.f32 %v3216, 0.5
        %v3225 = vmul.f32 %v3217, 0.5
        %v3226 = vmul.f32 %v3218, 0.5
        %v3227 = vmul.f32 %v3219, 1.442695
        %v3228 = vpow.pop %v3227
        %v3229 = vmul.f32 %v3220, 1.442695
        %v3230 = vpow.pop %v3229
        %v3231 = vmul.f32 %v3221, 1.442695
        %v3232 = vpow.pop %v3231
        %v3233 = vmul.f32 %v3222, 1.442695
        %v3234 = vpow.pop %v3233
        %v3235 = vmul.f32 %v3223, 1.442695
        %v3236 = vpow.pop %v3235
        %v3237 = vmul.f32 %v3224, 1.442695
        %v3238 = vpow.pop %v3237
        %v3239 = vmul.f32 %v3225, 1.442695
        %v3240 = vpow.pop %v3239
        %v3241 = vmul.f32 %v3226, 1.442695
        %v3242 = vpow.pop %v3241
        %3243 = vmatpush.xpose.msra.mxu0 0.0
        %3244 = vmatpush.xpose.msra.mxu0 0.0
        %3245 = vmatpush.xpose.msra.mxu0 0.0
        %3246 = vmatpush.xpose.msra.mxu0 0.0
        %3247 = vmatpush.xpose.msra.mxu0 0.0
        %3248 = vmatpush.xpose.msra.mxu0 0.0
        %3249 = vmatpush.xpose.msra.mxu0 0.0
        %3250 = vmatpush.xpose.msra.mxu0 0.0
        %3251 = vmatpush.xpose.msra.mxu0 0.0
        %3252 = vmatpush.xpose.msra.mxu0 0.0
        %3253 = vmatpush.xpose.msra.mxu0 0.0
        %3254 = vmatpush.xpose.msra.mxu0 0.0
        %3255 = vmatpush.xpose.msra.mxu0 %v3240
        %3256 = vmatpush.xpose.msra.mxu0 %v3236
        %3257 = vmatpush.xpose.msra.mxu0 %v3232
        %3258 = vmatpush.xpose.msra.mxu0 %v3228
        %3259 = vmatmul.f32.gmra.mxu0 1.0
        %v3260 = vpop.f32.mrf.mxu0
        %v3261 = vadd.f32 0.0, %v3260
        %3262 = vdwg.mxu0
        %3263 = vmatpush.xpose.msra.mxu0 0.0
        %3264 = vmatpush.xpose.msra.mxu0 0.0
        %3265 = vmatpush.xpose.msra.mxu0 0.0
        %3266 = vmatpush.xpose.msra.mxu0 0.0
        %3267 = vmatpush.xpose.msra.mxu0 0.0
        %3268 = vmatpush.xpose.msra.mxu0 0.0
        %3269 = vmatpush.xpose.msra.mxu0 0.0
        %3270 = vmatpush.xpose.msra.mxu0 0.0
        %3271 = vmatpush.xpose.msra.mxu0 0.0
        %3272 = vmatpush.xpose.msra.mxu0 0.0
        %3273 = vmatpush.xpose.msra.mxu0 0.0
        %3274 = vmatpush.xpose.msra.mxu0 0.0
        %3275 = vmatpush.xpose.msra.mxu0 %v3242
        %3276 = vmatpush.xpose.msra.mxu0 %v3238
        %3277 = vmatpush.xpose.msra.mxu0 %v3234
        %3278 = vmatpush.xpose.msra.mxu0 %v3230
        %3279 = vmatmul.f32.gmra.mxu0 1.0
        %v3280 = vpop.f32.mrf.mxu0
        %v3281 = vadd.f32 %v3261, %v3280
        %3282 = vdwg.mxu0
        %v3283 = vld [vmem:[#allocation3 + $0x8] sm:$0xff]
        %v3284 = vrcp.pop %v3281
        %v3285 = vmul.f32 %v3281, %v3284
        %v3286 = vsub.f32 1.0, %v3285
        %v3287 = vmul.f32 %v3284, %v3286
        %v3288 = vadd.f32 %v3284, %v3287
        %vm3289 = vweird.f32 %v3281
        %vm3290 = vweird.f32 %v3284
        %vm3291 = vmor %vm3289, %vm3290
        %v3292 = vsel %vm3291, %v3284, %v3288
        %v3293 = vand.u32 2147483647, %v3281
        %vm3294 = vcmp.eq.f32.partialorder %v3293, 8.507059e+37
        %v3295 = vand.u32 %v3281, 2147483648
        %v3296 = vor.u32 1.1754944e-38, %v3295
        %v3297 = vsel %vm3294, %v3296, %v3292
        %v3298 = vmul.f32 1.0, %v3297
        %v3299 = vperm.slane %v3298, 0
        %3301 = vrot.lane.b32.xlu0 %v3299, 96
        %v3302 = vpop.permute.xlu0 %3301
        %v3304 = vmul.f32 %v3283, %v3302
        %v3305 = vld [vmem:[#allocation4] sm:$0xff]
        %v3306 = vld [vmem:[#allocation4 + $0x8] sm:$0xff]
        %3308 = vrot.lane.b32.xlu0 %v3304, 32
        %v3309 = vpop.permute.xlu0 %3308
        %v3310 = vsel %vm899, %v3309, 0
        %3312 = vmatpush.msra.mxu0 0.0
        %3313 = vmatpush.msra.mxu0 0.0
        %3314 = vmatpush.msra.mxu0 0.0
        %3315 = vmatpush.msra.mxu0 0.0
        %3316 = vmatpush.msra.mxu0 0.0
        %3317 = vmatpush.msra.mxu0 0.0
        %3318 = vmatpush.msra.mxu0 0.0
        %3319 = vmatpush.msra.mxu0 0.0
        %3320 = vmatpush.msra.mxu0 0.0
        %3321 = vmatpush.msra.mxu0 0.0
        %3322 = vmatpush.msra.mxu0 0.0
        %3323 = vmatpush.msra.mxu0 0.0
        %3324 = vmatpush.msra.mxu0 %v3240
        %3325 = vmatpush.msra.mxu0 %v3236
        %3326 = vmatpush.msra.mxu0 %v3232
        %3327 = vmatpush.msra.mxu0 %v3228
        %3328 = vmatmul.f32.gmra.mxu0 %v3310
        %v3329 = vpop.f32.mrf.mxu0
        %v3330 = vadd.f32 0.0, %v3329
        %3331 = vdwg.mxu0
        %3332 = vmatpush.msra.mxu0 0.0
        %3333 = vmatpush.msra.mxu0 0.0
        %3334 = vmatpush.msra.mxu0 0.0
        %3335 = vmatpush.msra.mxu0 0.0
        %3336 = vmatpush.msra.mxu0 0.0
        %3337 = vmatpush.msra.mxu0 0.0
        %3338 = vmatpush.msra.mxu0 0.0
        %3339 = vmatpush.msra.mxu0 0.0
        %3340 = vmatpush.msra.mxu0 0.0
        %3341 = vmatpush.msra.mxu0 0.0
        %3342 = vmatpush.msra.mxu0 0.0
        %3343 = vmatpush.msra.mxu0 0.0
        %3344 = vmatpush.msra.mxu0 %v3242
        %3345 = vmatpush.msra.mxu0 %v3238
        %3346 = vmatpush.msra.mxu0 %v3234
        %3347 = vmatpush.msra.mxu0 %v3230
        %3348 = vmatmul.f32.gmra.mxu0 %v3310
        %v3349 = vpop.f32.mrf.mxu0
        %v3350 = vadd.f32 0.0, %v3349
        %3351 = vdwg.mxu0
        %v3352 = vadd.f32 %v3305, %v3330
        %v3353 = vadd.f32 %v3306, %v3350
        %3354 = vst [vmem:[#allocation4] sm:$0xff] %v3352
        %3355 = vst [vmem:[#allocation4 + $0x8] sm:$0xff] %v3353
        %v3356 = vld [vmem:[#allocation4] sm:$0xff]
        %v3357 = vld [vmem:[#allocation4 + $0x8] sm:$0xff]
        %3358 = vst [vmem:[%s338] sm:$0xff] %v3356
        %3359 = vst [vmem:[%s338 + $0x8] sm:$0xff] %v3357
        %s3360 = sand.u32 %s208, 1
        %s3361 = scalar_lea.sflag [#allocation8], %s3360
        %s3362 = sand.u32 %s208, 1
        %s3363 = smul.addr %s3362, 16
        %s3364 = scalar_lea.vmem [#allocation11], %s3363
        // Predicated region
        $region61: #{tpu_custom_call.1} parent=51 // pred_check
          %p3365 = pneg %p218
        $region62: #{tpu_custom_call.1} parent=51 // pred_check_branch
          %3367 = sbr.rel (%p3365) target = $region64
        $region63: #{tpu_custom_call.1} parent=51 // pred_region
          %3369 = vsyncadd %s3361, 0
          %s3370 = smul.addr %s27, 2
          %s3371 = smul.addr %s3370, 8
          %s3372 = scalar_lea.hbm %s8, %s3371
          %s3374 = sshll.u32 %s3364, 4
          %s3375 = int_to_ptr.vmem [resolvable:$true] %s3374
          %s3376 = sshll.u32 %s3372, 4
          %s3377 = int_to_ptr.hbm [resolvable:$true] %s3376
          %3379 = dma.vmem_to_hbm [thread:$0]  %s3375, 256, %s3377, %s3361
        $region64: #{tpu_custom_call.1} parent=51 // pred_fallthru
          _
      $region52: #{tpu_custom_call.1} parent=5 // pred_fallthru
        _
      %p3380 = scmp.le.s32.totalorder 2, %s22
      // Predicated region
      $region65: #{tpu_custom_call.1} parent=5 // pred_check
        %p3381 = pneg %p3380
      $region66: #{tpu_custom_call.1} parent=5 // pred_check_branch
        %3383 = sbr.rel (%p3381) target = $region68
      $region67: #{tpu_custom_call.1} parent=5 // pred_region
        %s3384 = ssub.s32 %s22, 2
        // Predicated region
        $region69: #{tpu_custom_call.1} parent=67 // pred_check
          %p3385 = pneg %p224
        $region70: #{tpu_custom_call.1} parent=67 // pred_check_branch
          %3387 = sbr.rel (%p3385) target = $region72
        $region71: #{tpu_custom_call.1} parent=67 // pred_region
          %s3388 = sand.u32 %s209, 1
          %s3389 = scalar_lea.sflag [#allocation8], %s3388
          %s3390 = sand.u32 %s209, 1
          %s3391 = smul.addr %s3390, 16
          %s3392 = scalar_lea.vmem [#allocation11], %s3391
          %3394 = dma.done %s3389, 256
        $region72: #{tpu_custom_call.1} parent=67 // pred_fallthru
          _
      $region68: #{tpu_custom_call.1} parent=5 // pred_fallthru
        _
    $region6: #{tpu_custom_call.1} parent=1 // loop_footer
      %s26 = sadd.s32 1, %s22
    $region7: #{tpu_custom_call.1} parent=1 // loop_footer_branch
      %21 = sbr.rel target = $region3
    $region8: #{tpu_custom_call.1} parent=1 // loop_exit
      _
    %3395 = vsyncpa [#allocation7], 1
    %s3396 = scalar_lea.sflag [#allocation7], 1
    %3397 = vsyncpa %s3396, 1
    %3398 = vsyncpa [#allocation8], 1
    %s3399 = scalar_lea.sflag [#allocation8], 1
    %3400 = vsyncpa %s3399, 1
    %3401 = vsyncpa [#allocation9], 1
    %s3402 = scalar_lea.sflag [#allocation9], 1
    %3403 = vsyncpa %s3402, 1

</llo_original>
